<compile_context>
chip_gen: v7x
topology: tpu7x:2x2x1
jax: 0.10.0
libtpu: 0.0.40
codegen_flags: <defaults>
</compile_context>

<pallas_src>
import functools

import jax
import jax.numpy as jnp
from jax.experimental import pallas as pl
from jax.experimental.pallas import tpu as pltpu

_LANE = 128
_SUB = 8


def _round_up(x, m):
    return (x + m - 1) // m * m


# ----------------------------------------------------------------------------
# Fused BasicBlock kernel (one grid step == one batch element)
# ----------------------------------------------------------------------------
def _make_block_kernel(stride, Ho, Wo, Wo_pad, has_downsample):
    s = stride
    HW = Ho * Wo_pad
    Wm = Wo_pad + 4           # [unused, left-halo, data ..., right-halo, unused]
    taps = [(ky, kx) for ky in range(3) for kx in range(3)]
    mid_dt = jnp.bfloat16

    def kernel(x_ref, w1_ref, s1_ref, b1_ref, w2_ref, s2_ref, b2_ref, *rest):
        if has_downsample:
            wd_ref, sd_ref, bd_ref, o_ref, mid_ref = rest
        else:
            o_ref, mid_ref = rest

        cin_p = x_ref.shape[-1]
        c_p = o_ref.shape[-1]

        def conv3x3(tap_fn, w_ref, k_dim):
            """9-tap conv as 4 paired matmuls (K = 2*k_dim, fills the 256-deep
            MXU on v6e/v7x) + 1 single, accumulated in registers."""
            acc = None
            for g in range(4):
                (ya, xa), (yb, xb) = taps[2 * g], taps[2 * g + 1]
                lhs = jnp.concatenate([tap_fn(ya, xa), tap_fn(yb, xb)], axis=-1)
                rhs = w_ref[pl.ds(2 * g, 2)].reshape(2 * k_dim, c_p)
                d = jnp.dot(lhs, rhs, preferred_element_type=jnp.float32)
                acc = d if acc is None else acc + d
            ky, kx = taps[8]
            return acc + jnp.dot(tap_fn(ky, kx), w_ref[8],
                                 preferred_element_type=jnp.float32)

        # ---- conv1 (3x3, stride s) + bn1 + ReLU ----
        # Taps come straight from the bf16 stride-phase-split input block.
        def in_tap(ky, kx):
            ph = (ky % s) * s + (kx % s)
            v = x_ref[0, ph, pl.ds(ky // s, Ho), pl.ds(kx // s, Wo_pad), :]
            return v.reshape(HW, cin_p)

        out1 = jnp.maximum(
            conv3x3(in_tap, w1_ref, cin_p) * s1_ref[...] + b1_ref[...], 0.0)

        if Wo_pad != Wo:
            # Columns >= Wo are width padding; they must be zero in `mid` so
            # conv2's right-edge taps see a proper zero halo.
            col = jax.lax.broadcasted_iota(jnp.int32, (HW, 1), 0) % Wo_pad
            out1 = jnp.where(col < Wo, out1, 0.0)

        # ---- stage out1 in a bf16 halo buffer ----
        # Only the halo border is zeroed (cheap, aligned); the interior store
        # starts at column 2 / row 1 so it is fully sublane-aligned for bf16.
        mid_ref[0] = jnp.zeros((Wm, c_p), mid_dt)
        mid_ref[Ho + 1] = jnp.zeros((Wm, c_p), mid_dt)
        mid_ref[pl.ds(1, Ho), pl.ds(0, 2), :] = jnp.zeros((Ho, 2, c_p), mid_dt)
        mid_ref[pl.ds(1, Ho), pl.ds(Wo_pad + 2, 2), :] = jnp.zeros(
            (Ho, 2, c_p), mid_dt)
        mid_ref[pl.ds(1, Ho), pl.ds(2, Wo_pad), :] = (
            out1.reshape(Ho, Wo_pad, c_p).astype(mid_dt))

        # ---- conv2 (3x3, stride 1) + bn2 ----
        def mid_tap(ky, kx):
            v = mid_ref[pl.ds(ky, Ho), pl.ds(kx + 1, Wo_pad), :]
            return v.reshape(HW, c_p)

        out2 = conv3x3(mid_tap, w2_ref, c_p) * s2_ref[...] + b2_ref[...]

        # ---- residual branch ----
        ph_r = (1 % s) * s + (1 % s)     # phase of padded index 1 (pad=1)
        r0 = 1 // s
        xs = x_ref[0, ph_r, pl.ds(r0, Ho), pl.ds(r0, Wo_pad), :]
        xs = xs.reshape(HW, cin_p)
        if has_downsample:
            res = jnp.dot(xs, wd_ref[...], preferred_element_type=jnp.float32)
            res = res * sd_ref[...] + bd_ref[...]
        else:
            res = xs.astype(jnp.float32)   # identity: stride==1, cin_p == c_p

        o_ref[0] = jnp.maximum(out2 + res, 0.0).astype(o_ref.dtype)

    return kernel


# ----------------------------------------------------------------------------
# Parameter folding / layout glue
# ----------------------------------------------------------------------------
def fold_bn(gamma, beta, mean, var, eps=1e-5):
    scale = gamma / jnp.sqrt(var + eps)
    bias = beta - mean * scale
    return scale.reshape(1, -1), bias.reshape(1, -1)


def _conv_weight_taps(w_oihw, cin_pad, cout_pad):
    """PyTorch (Cout, Cin, kH, kW) -> (kH*kW, cin_pad, cout_pad) bf16, tap order (ky, kx)."""
    cout, cin, kh, kw = w_oihw.shape
    w = jnp.transpose(w_oihw, (2, 3, 1, 0)).reshape(kh * kw, cin, cout)
    w = jnp.pad(w, ((0, 0), (0, cin_pad - cin), (0, cout_pad - cout)))
    return w.astype(jnp.bfloat16)


def _pad_row(v, cpad):
    v = jnp.asarray(v, jnp.float32).reshape(1, -1)
    return jnp.pad(v, ((0, 0), (0, cpad - v.shape[1])))


# ----------------------------------------------------------------------------
# BasicBlock forward (NCHW in / NCHW out, matching PyTorch)
# ----------------------------------------------------------------------------
def basic_block_forward(x_nchw, params, *, in_planes, planes, stride):
    B, cin, H, W = x_nchw.shape
    assert cin == in_planes
    s = stride
    cin_p = _round_up(in_planes, _LANE)
    c_p = _round_up(planes, _LANE)
    Ho = (H - 1) // s + 1
    Wo = (W - 1) // s + 1
    Wo_pad = _round_up(Wo, _SUB)         # sublane-aligned output width
    HW = Ho * Wo_pad
    halo = 2 // s                        # extra rows/cols of each phase image
    Hps = Ho + halo
    Wps = Wo_pad + halo

    # NCHW -> NHWC (channels on the 128-lane axis), bf16 activations in HBM,
    # channels zero-padded to a lane-dense multiple of 128, 1-pixel halo on the
    # top/left, zero-fill on the bottom/right out to the phase-split extent.
    x = jnp.transpose(x_nchw, (0, 2, 3, 1)).astype(jnp.bfloat16)
    xp = jnp.pad(x, ((0, 0),
                     (1, s * Hps - H - 1),
                     (1, s * Wps - W - 1),
                     (0, cin_p - in_planes)))
    # Stride-phase split (space-to-depth): tap (ky, kx) of the strided 3x3 conv
    # becomes a contiguous slice of phase (ky % s, kx % s).  ~1x input bytes.
    xph = (xp.reshape(B, Hps, s, Wps, s, cin_p)
             .transpose(0, 2, 4, 1, 3, 5)
             .reshape(B, s * s, Hps, Wps, cin_p))

    w1 = _conv_weight_taps(params["w1"], cin_p, c_p)
    w2 = _conv_weight_taps(params["w2"], c_p, c_p)
    s1 = _pad_row(params["s1"], c_p)
    b1 = _pad_row(params["b1"], c_p)
    s2 = _pad_row(params["s2"], c_p)
    b2 = _pad_row(params["b2"], c_p)

    has_ds = (stride != 1) or (in_planes != planes)

    args = [xph, w1, s1, b1, w2, s2, b2]
    in_specs = [
        pl.BlockSpec((1, s * s, Hps, Wps, cin_p), lambda b: (b, 0, 0, 0, 0)),
        pl.BlockSpec((9, cin_p, c_p), lambda b: (0, 0, 0)),
        pl.BlockSpec((1, c_p), lambda b: (0, 0)),
        pl.BlockSpec((1, c_p), lambda b: (0, 0)),
        pl.BlockSpec((9, c_p, c_p), lambda b: (0, 0, 0)),
        pl.BlockSpec((1, c_p), lambda b: (0, 0)),
        pl.BlockSpec((1, c_p), lambda b: (0, 0)),
    ]
    if has_ds:
        wd = _conv_weight_taps(params["wd"], cin_p, c_p)[0]      # (cin_p, c_p)
        sd = _pad_row(params["sd"], c_p)
        bd = _pad_row(params["bd"], c_p)
        args += [wd, sd, bd]
        in_specs += [
            pl.BlockSpec((cin_p, c_p), lambda b: (0, 0)),
            pl.BlockSpec((1, c_p), lambda b: (0, 0)),
            pl.BlockSpec((1, c_p), lambda b: (0, 0)),
        ]

    # Per-step VMEM working set -> scoped limit (double-buffered in/out blocks,
    # weights, halo scratch, register-accumulator spill headroom).
    x_blk = s * s * Hps * Wps * cin_p * 2
    w_bytes = (9 * cin_p * c_p + 9 * c_p * c_p
               + (cin_p * c_p if has_ds else 0)) * 2
    out_blk = HW * c_p * 2
    mid_bytes = (Ho + 2) * (Wo_pad + 4) * c_p * 2
    acc_bytes = HW * c_p * 4
    est = 2 * (x_blk + out_blk) + 2 * w_bytes + mid_bytes + 2 * acc_bytes
    vmem_limit = int(min(96 * 1024 * 1024, max(32 * 1024 * 1024, 2 * est)))

    out = pl.pallas_call(
        _make_block_kernel(s, Ho, Wo, Wo_pad, has_ds),
        out_shape=jax.ShapeDtypeStruct((B, HW, c_p), jnp.bfloat16),
        grid_spec=pltpu.PrefetchScalarGridSpec(
            num_scalar_prefetch=0,
            grid=(B,),
            in_specs=in_specs,
            out_specs=pl.BlockSpec((1, HW, c_p), lambda b: (b, 0, 0)),
            scratch_shapes=[
                pltpu.VMEM((Ho + 2, Wo_pad + 4, c_p), jnp.bfloat16),  # out1+halo
            ],
        ),
        compiler_params=pltpu.CompilerParams(
            dimension_semantics=("parallel",),
            vmem_limit_bytes=vmem_limit,
        ),
    )(*args)

    out = out.reshape(B, Ho, Wo_pad, c_p)[:, :, :Wo, :planes].astype(jnp.float32)
    return jnp.transpose(out, (0, 3, 1, 2))   # -> NCHW


# ----------------------------------------------------------------------------
# Pure-JAX reference (lax.conv) for verification
# ----------------------------------------------------------------------------
def _ref_conv(x_nhwc, w_oihw, stride, pad):
    w_hwio = jnp.transpose(w_oihw, (2, 3, 1, 0))
    return jax.lax.conv_general_dilated(
        x_nhwc, w_hwio,
        window_strides=(stride, stride),
        padding=((pad, pad), (pad, pad)),
        dimension_numbers=("NHWC", "HWIO", "NHWC"))


def basic_block_reference(x_nchw, params, *, in_planes, planes, stride):
    x = jnp.transpose(x_nchw, (0, 2, 3, 1)).astype(jnp.float32)
    o = _ref_conv(x, params["w1"], stride, 1) * params["s1"] + params["b1"]
    o = jnp.maximum(o, 0.0)
    o = _ref_conv(o, params["w2"], 1, 1) * params["s2"] + params["b2"]
    if stride != 1 or in_planes != planes:
        r = _ref_conv(x, params["wd"], stride, 0) * params["sd"] + params["bd"]
    else:
        r = x
    o = jnp.maximum(o + r, 0.0)
    return jnp.transpose(o, (0, 3, 1, 2))


# ----------------------------------------------------------------------------
if __name__ == "__main__":
    key = jax.random.PRNGKey(0)

    def q(a):  # round to bf16-representable f32 so kernel (bf16) and ref agree closely
        return jnp.asarray(a, jnp.bfloat16).astype(jnp.float32)

    def make_params(k, in_planes, planes):
        ks = jax.random.split(k, 6)

        def bn(kk, c):
            kg, kb, km, kv = jax.random.split(kk, 4)
            gamma = 1.0 + 0.1 * jax.random.normal(kg, (c,), jnp.float32)
            beta = 0.1 * jax.random.normal(kb, (c,), jnp.float32)
            mean = 0.1 * jax.random.normal(km, (c,), jnp.float32)
            var = jnp.abs(jax.random.normal(kv, (c,), jnp.float32)) + 0.5
            return fold_bn(gamma, beta, mean, var)

        s1, b1 = bn(ks[0], planes)
        s2, b2 = bn(ks[1], planes)
        sd, bd = bn(ks[2], planes)
        return {
            "w1": q(0.1 * jax.random.normal(ks[3], (planes, in_planes, 3, 3), jnp.float32)),
            "w2": q(0.1 * jax.random.normal(ks[4], (planes, planes, 3, 3), jnp.float32)),
            "wd": q(0.1 * jax.random.normal(ks[5], (planes, in_planes, 1, 1), jnp.float32)),
            "s1": s1, "b1": b1, "s2": s2, "b2": b2, "sd": sd, "bd": bd,
        }

    configs = [
        dict(B=2, in_planes=4, planes=8, H=16, W=16, stride=2),   # downsample, stride 2
        dict(B=2, in_planes=8, planes=8, H=16, W=16, stride=1),   # identity path
        dict(B=2, in_planes=4, planes=8, H=12, W=10, stride=2),   # Wo not multiple of 8
        dict(B=1, in_planes=4, planes=8, H=10, W=12, stride=1),   # downsample, stride 1
    ]
    for i, cfg in enumerate(configs):
        k1, k2 = jax.random.split(jax.random.fold_in(key, i))
        params = make_params(k1, cfg["in_planes"], cfg["planes"])
        x = q(jax.random.normal(
            k2, (cfg["B"], cfg["in_planes"], cfg["H"], cfg["W"]), jnp.float32))

        fwd = jax.jit(functools.partial(
            basic_block_forward, in_planes=cfg["in_planes"],
            planes=cfg["planes"], stride=cfg["stride"]))
        out = fwd(x, params)
        jax.block_until_ready(out)

        ref = basic_block_reference(
            x, params, in_planes=cfg["in_planes"], planes=cfg["planes"],
            stride=cfg["stride"])

        Ho = (cfg["H"] - 1) // cfg["stride"] + 1
        Wo = (cfg["W"] - 1) // cfg["stride"] + 1
        assert out.shape == (cfg["B"], cfg["planes"], Ho, Wo), out.shape
        err = float(jnp.max(jnp.abs(out - ref)))
        tol = 3e-2 * (1.0 + float(jnp.max(jnp.abs(ref))))
        assert err < tol, (i, err, tol)

    print("KERNEL_OK")
</pallas_src>

<mosaic_0001>
module attributes {stable_mosaic.version = 11 : i64} {
  func.func @kernel(%arg0: i32, %arg1: memref<1x4x9x9x128xbf16, #tpu.memory_space<vmem>>, %arg2: memref<9x128x128xbf16, #tpu.memory_space<vmem>>, %arg3: memref<1x128xf32, #tpu.memory_space<vmem>>, %arg4: memref<1x128xf32, #tpu.memory_space<vmem>>, %arg5: memref<9x128x128xbf16, #tpu.memory_space<vmem>>, %arg6: memref<1x128xf32, #tpu.memory_space<vmem>>, %arg7: memref<1x128xf32, #tpu.memory_space<vmem>>, %arg8: memref<128x128xbf16, #tpu.memory_space<vmem>>, %arg9: memref<1x128xf32, #tpu.memory_space<vmem>>, %arg10: memref<1x128xf32, #tpu.memory_space<vmem>>, %arg11: memref<1x64x128xbf16, #tpu.memory_space<vmem>>, %arg12: memref<10x12x128xbf16, #tpu.memory_space<vmem>>) attributes {dimension_semantics = [#tpu.dimension_semantics<parallel>], iteration_bounds = array<i64: 2>, scalar_prefetch = 0 : i64, scratch_operands = 1 : i64, tpu.core_type = #tpu.core_type<tc>, window_params = [{transform_indices = @transform_0, window_bounds = array<i64: 1, 4, 9, 9, 128>}, {pipeline_mode = #tpu.pipeline_mode<synchronous>, transform_indices = @transform_1, window_bounds = array<i64: 9, 128, 128>}, {pipeline_mode = #tpu.pipeline_mode<synchronous>, transform_indices = @transform_2, window_bounds = array<i64: 1, 128>}, {pipeline_mode = #tpu.pipeline_mode<synchronous>, transform_indices = @transform_3, window_bounds = array<i64: 1, 128>}, {pipeline_mode = #tpu.pipeline_mode<synchronous>, transform_indices = @transform_4, window_bounds = array<i64: 9, 128, 128>}, {pipeline_mode = #tpu.pipeline_mode<synchronous>, transform_indices = @transform_5, window_bounds = array<i64: 1, 128>}, {pipeline_mode = #tpu.pipeline_mode<synchronous>, transform_indices = @transform_6, window_bounds = array<i64: 1, 128>}, {pipeline_mode = #tpu.pipeline_mode<synchronous>, transform_indices = @transform_7, window_bounds = array<i64: 128, 128>}, {pipeline_mode = #tpu.pipeline_mode<synchronous>, transform_indices = @transform_8, window_bounds = array<i64: 1, 128>}, {pipeline_mode = #tpu.pipeline_mode<synchronous>, transform_indices = @transform_9, window_bounds = array<i64: 1, 128>}, {transform_indices = @transform_10, window_bounds = array<i64: 1, 64, 128>}]} {
    %c0 = arith.constant 0 : index
    %c0_0 = arith.constant 0 : index
    %c0_1 = arith.constant 0 : index
    %c0_2 = arith.constant 0 : index
    %c0_3 = arith.constant 0 : index
    %0 = vector.load %arg1[%c0, %c0_0, %c0_1, %c0_2, %c0_3] : memref<1x4x9x9x128xbf16, #tpu.memory_space<vmem>>, vector<1x1x8x8x128xbf16>
    %1 = vector.shape_cast %0 : vector<1x1x8x8x128xbf16> to vector<8x8x128xbf16>
    %2 = vector.shape_cast %1 : vector<8x8x128xbf16> to vector<64x128xbf16>
    %c0_4 = arith.constant 0 : index
    %c1 = arith.constant 1 : index
    %c0_5 = arith.constant 0 : index
    %c0_6 = arith.constant 0 : index
    %c0_7 = arith.constant 0 : index
    %3 = vector.load %arg1[%c0_4, %c1, %c0_5, %c0_6, %c0_7] : memref<1x4x9x9x128xbf16, #tpu.memory_space<vmem>>, vector<1x1x8x8x128xbf16>
    %4 = vector.shape_cast %3 : vector<1x1x8x8x128xbf16> to vector<8x8x128xbf16>
    %5 = vector.shape_cast %4 : vector<8x8x128xbf16> to vector<64x128xbf16>
    %6 = tpu.concatenate %2, %5 in 1 : vector<64x128xbf16>, vector<64x128xbf16> -> vector<64x256xbf16>
    %c0_8 = arith.constant 0 : index
    %c0_9 = arith.constant 0 : index
    %c0_10 = arith.constant 0 : index
    %7 = vector.load %arg2[%c0_8, %c0_9, %c0_10] : memref<9x128x128xbf16, #tpu.memory_space<vmem>>, vector<2x128x128xbf16>
    %8 = vector.shape_cast %7 : vector<2x128x128xbf16> to vector<256x128xbf16>
    %cst = arith.constant dense<0.000000e+00> : vector<64x128xf32>
    %9 = tpu.matmul %6, %8, %cst {dimension_numbers = #tpu.dot_dimension_numbers<[1], [0], [0], [1], [0, 0, 1, 1], [], []>} : vector<64x256xbf16>, vector<256x128xbf16>, vector<64x128xf32> -> vector<64x128xf32>
    %c0_11 = arith.constant 0 : index
    %c0_12 = arith.constant 0 : index
    %c0_13 = arith.constant 0 : index
    %c1_14 = arith.constant 1 : index
    %c0_15 = arith.constant 0 : index
    %10 = vector.load %arg1[%c0_11, %c0_12, %c0_13, %c1_14, %c0_15] : memref<1x4x9x9x128xbf16, #tpu.memory_space<vmem>>, vector<1x1x8x8x128xbf16>
    %11 = vector.shape_cast %10 : vector<1x1x8x8x128xbf16> to vector<8x8x128xbf16>
    %12 = vector.shape_cast %11 : vector<8x8x128xbf16> to vector<64x128xbf16>
    %c0_16 = arith.constant 0 : index
    %c2 = arith.constant 2 : index
    %c0_17 = arith.constant 0 : index
    %c0_18 = arith.constant 0 : index
    %c0_19 = arith.constant 0 : index
    %13 = vector.load %arg1[%c0_16, %c2, %c0_17, %c0_18, %c0_19] : memref<1x4x9x9x128xbf16, #tpu.memory_space<vmem>>, vector<1x1x8x8x128xbf16>
    %14 = vector.shape_cast %13 : vector<1x1x8x8x128xbf16> to vector<8x8x128xbf16>
    %15 = vector.shape_cast %14 : vector<8x8x128xbf16> to vector<64x128xbf16>
    %16 = tpu.concatenate %12, %15 in 1 : vector<64x128xbf16>, vector<64x128xbf16> -> vector<64x256xbf16>
    %c2_20 = arith.constant 2 : index
    %c0_21 = arith.constant 0 : index
    %c0_22 = arith.constant 0 : index
    %17 = vector.load %arg2[%c2_20, %c0_21, %c0_22] : memref<9x128x128xbf16, #tpu.memory_space<vmem>>, vector<2x128x128xbf16>
    %18 = vector.shape_cast %17 : vector<2x128x128xbf16> to vector<256x128xbf16>
    %cst_23 = arith.constant dense<0.000000e+00> : vector<64x128xf32>
    %19 = tpu.matmul %16, %18, %cst_23 {dimension_numbers = #tpu.dot_dimension_numbers<[1], [0], [0], [1], [0, 0, 1, 1], [], []>} : vector<64x256xbf16>, vector<256x128xbf16>, vector<64x128xf32> -> vector<64x128xf32>
    %20 = arith.addf %9, %19 : vector<64x128xf32>
    %c0_24 = arith.constant 0 : index
    %c3 = arith.constant 3 : index
    %c0_25 = arith.constant 0 : index
    %c0_26 = arith.constant 0 : index
    %c0_27 = arith.constant 0 : index
    %21 = vector.load %arg1[%c0_24, %c3, %c0_25, %c0_26, %c0_27] : memref<1x4x9x9x128xbf16, #tpu.memory_space<vmem>>, vector<1x1x8x8x128xbf16>
    %22 = vector.shape_cast %21 : vector<1x1x8x8x128xbf16> to vector<8x8x128xbf16>
    %23 = vector.shape_cast %22 : vector<8x8x128xbf16> to vector<64x128xbf16>
    %c0_28 = arith.constant 0 : index
    %c2_29 = arith.constant 2 : index
    %c0_30 = arith.constant 0 : index
    %c1_31 = arith.constant 1 : index
    %c0_32 = arith.constant 0 : index
    %24 = vector.load %arg1[%c0_28, %c2_29, %c0_30, %c1_31, %c0_32] : memref<1x4x9x9x128xbf16, #tpu.memory_space<vmem>>, vector<1x1x8x8x128xbf16>
    %25 = vector.shape_cast %24 : vector<1x1x8x8x128xbf16> to vector<8x8x128xbf16>
    %26 = vector.shape_cast %25 : vector<8x8x128xbf16> to vector<64x128xbf16>
    %27 = tpu.concatenate %23, %26 in 1 : vector<64x128xbf16>, vector<64x128xbf16> -> vector<64x256xbf16>
    %c4 = arith.constant 4 : index
    %c0_33 = arith.constant 0 : index
    %c0_34 = arith.constant 0 : index
    %28 = vector.load %arg2[%c4, %c0_33, %c0_34] : memref<9x128x128xbf16, #tpu.memory_space<vmem>>, vector<2x128x128xbf16>
    %29 = vector.shape_cast %28 : vector<2x128x128xbf16> to vector<256x128xbf16>
    %cst_35 = arith.constant dense<0.000000e+00> : vector<64x128xf32>
    %30 = tpu.matmul %27, %29, %cst_35 {dimension_numbers = #tpu.dot_dimension_numbers<[1], [0], [0], [1], [0, 0, 1, 1], [], []>} : vector<64x256xbf16>, vector<256x128xbf16>, vector<64x128xf32> -> vector<64x128xf32>
    %31 = arith.addf %20, %30 : vector<64x128xf32>
    %c0_36 = arith.constant 0 : index
    %c0_37 = arith.constant 0 : index
    %c1_38 = arith.constant 1 : index
    %c0_39 = arith.constant 0 : index
    %c0_40 = arith.constant 0 : index
    %32 = vector.load %arg1[%c0_36, %c0_37, %c1_38, %c0_39, %c0_40] : memref<1x4x9x9x128xbf16, #tpu.memory_space<vmem>>, vector<1x1x8x8x128xbf16>
    %33 = vector.shape_cast %32 : vector<1x1x8x8x128xbf16> to vector<8x8x128xbf16>
    %34 = vector.shape_cast %33 : vector<8x8x128xbf16> to vector<64x128xbf16>
    %c0_41 = arith.constant 0 : index
    %c1_42 = arith.constant 1 : index
    %c1_43 = arith.constant 1 : index
    %c0_44 = arith.constant 0 : index
    %c0_45 = arith.constant 0 : index
    %35 = vector.load %arg1[%c0_41, %c1_42, %c1_43, %c0_44, %c0_45] : memref<1x4x9x9x128xbf16, #tpu.memory_space<vmem>>, vector<1x1x8x8x128xbf16>
    %36 = vector.shape_cast %35 : vector<1x1x8x8x128xbf16> to vector<8x8x128xbf16>
    %37 = vector.shape_cast %36 : vector<8x8x128xbf16> to vector<64x128xbf16>
    %38 = tpu.concatenate %34, %37 in 1 : vector<64x128xbf16>, vector<64x128xbf16> -> vector<64x256xbf16>
    %c6 = arith.constant 6 : index
    %c0_46 = arith.constant 0 : index
    %c0_47 = arith.constant 0 : index
    %39 = vector.load %arg2[%c6, %c0_46, %c0_47] : memref<9x128x128xbf16, #tpu.memory_space<vmem>>, vector<2x128x128xbf16>
    %40 = vector.shape_cast %39 : vector<2x128x128xbf16> to vector<256x128xbf16>
    %cst_48 = arith.constant dense<0.000000e+00> : vector<64x128xf32>
    %41 = tpu.matmul %38, %40, %cst_48 {dimension_numbers = #tpu.dot_dimension_numbers<[1], [0], [0], [1], [0, 0, 1, 1], [], []>} : vector<64x256xbf16>, vector<256x128xbf16>, vector<64x128xf32> -> vector<64x128xf32>
    %42 = arith.addf %31, %41 : vector<64x128xf32>
    %c0_49 = arith.constant 0 : index
    %c0_50 = arith.constant 0 : index
    %c1_51 = arith.constant 1 : index
    %c1_52 = arith.constant 1 : index
    %c0_53 = arith.constant 0 : index
    %43 = vector.load %arg1[%c0_49, %c0_50, %c1_51, %c1_52, %c0_53] : memref<1x4x9x9x128xbf16, #tpu.memory_space<vmem>>, vector<1x1x8x8x128xbf16>
    %44 = vector.shape_cast %43 : vector<1x1x8x8x128xbf16> to vector<8x8x128xbf16>
    %45 = vector.shape_cast %44 : vector<8x8x128xbf16> to vector<64x128xbf16>
    %c8 = arith.constant 8 : index
    %c0_54 = arith.constant 0 : index
    %c0_55 = arith.constant 0 : index
    %46 = vector.load %arg2[%c8, %c0_54, %c0_55] : memref<9x128x128xbf16, #tpu.memory_space<vmem>>, vector<1x128x128xbf16>
    %47 = vector.shape_cast %46 : vector<1x128x128xbf16> to vector<128x128xbf16>
    %cst_56 = arith.constant dense<0.000000e+00> : vector<64x128xf32>
    %48 = tpu.matmul %45, %47, %cst_56 {dimension_numbers = #tpu.dot_dimension_numbers<[1], [0], [0], [1], [0, 0, 1, 1], [], []>} : vector<64x128xbf16>, vector<128x128xbf16>, vector<64x128xf32> -> vector<64x128xf32>
    %49 = arith.addf %42, %48 : vector<64x128xf32>
    %c0_57 = arith.constant 0 : index
    %c0_58 = arith.constant 0 : index
    %50 = vector.load %arg3[%c0_57, %c0_58] : memref<1x128xf32, #tpu.memory_space<vmem>>, vector<1x128xf32>
    %51 = vector.broadcast %50 : vector<1x128xf32> to vector<64x128xf32>
    %52 = arith.mulf %49, %51 : vector<64x128xf32>
    %c0_59 = arith.constant 0 : index
    %c0_60 = arith.constant 0 : index
    %53 = vector.load %arg4[%c0_59, %c0_60] : memref<1x128xf32, #tpu.memory_space<vmem>>, vector<1x128xf32>
    %54 = vector.broadcast %53 : vector<1x128xf32> to vector<64x128xf32>
    %55 = arith.addf %52, %54 : vector<64x128xf32>
    %cst_61 = arith.constant 0.000000e+00 : f32
    %56 = vector.broadcast %cst_61 : f32 to vector<64x128xf32>
    %57 = arith.maximumf %55, %56 : vector<64x128xf32>
    %cst_62 = arith.constant 0.000000e+00 : bf16
    %58 = vector.broadcast %cst_62 : bf16 to vector<12x128xbf16>
    %c0_63 = arith.constant 0 : index
    %c0_64 = arith.constant 0 : index
    %c0_65 = arith.constant 0 : index
    %59 = vector.load %arg12[%c0_63, %c0_64, %c0_65] : memref<10x12x128xbf16, #tpu.memory_space<vmem>>, vector<1x12x128xbf16>
    %60 = vector.shape_cast %59 : vector<1x12x128xbf16> to vector<12x128xbf16>
    %61 = vector.shape_cast %58 : vector<12x128xbf16> to vector<1x12x128xbf16>
    tpu.vector_store %arg12[%c0_63, %c0_64, %c0_65], %61 {strides = array<i32>} : memref<10x12x128xbf16, #tpu.memory_space<vmem>>, vector<1x12x128xbf16>,
    %cst_66 = arith.constant 0.000000e+00 : bf16
    %62 = vector.broadcast %cst_66 : bf16 to vector<12x128xbf16>
    %c9 = arith.constant 9 : index
    %c0_67 = arith.constant 0 : index
    %c0_68 = arith.constant 0 : index
    %63 = vector.load %arg12[%c9, %c0_67, %c0_68] : memref<10x12x128xbf16, #tpu.memory_space<vmem>>, vector<1x12x128xbf16>
    %64 = vector.shape_cast %63 : vector<1x12x128xbf16> to vector<12x128xbf16>
    %65 = vector.shape_cast %62 : vector<12x128xbf16> to vector<1x12x128xbf16>
    tpu.vector_store %arg12[%c9, %c0_67, %c0_68], %65 {strides = array<i32>} : memref<10x12x128xbf16, #tpu.memory_space<vmem>>, vector<1x12x128xbf16>,
    %cst_69 = arith.constant 0.000000e+00 : bf16
    %66 = vector.broadcast %cst_69 : bf16 to vector<8x2x128xbf16>
    %c1_70 = arith.constant 1 : index
    %c0_71 = arith.constant 0 : index
    %c0_72 = arith.constant 0 : index
    %67 = vector.load %arg12[%c1_70, %c0_71, %c0_72] : memref<10x12x128xbf16, #tpu.memory_space<vmem>>, vector<8x2x128xbf16>
    tpu.vector_store %arg12[%c1_70, %c0_71, %c0_72], %66 {strides = array<i32>} : memref<10x12x128xbf16, #tpu.memory_space<vmem>>, vector<8x2x128xbf16>,
    %cst_73 = arith.constant 0.000000e+00 : bf16
    %68 = vector.broadcast %cst_73 : bf16 to vector<8x2x128xbf16>
    %c1_74 = arith.constant 1 : index
    %c10 = arith.constant 10 : index
    %c0_75 = arith.constant 0 : index
    %69 = vector.load %arg12[%c1_74, %c10, %c0_75] : memref<10x12x128xbf16, #tpu.memory_space<vmem>>, vector<8x2x128xbf16>
    tpu.vector_store %arg12[%c1_74, %c10, %c0_75], %68 {strides = array<i32>} : memref<10x12x128xbf16, #tpu.memory_space<vmem>>, vector<8x2x128xbf16>,
    %70 = vector.shape_cast %57 : vector<64x128xf32> to vector<8x8x128xf32>
    %71 = arith.truncf %70 : vector<8x8x128xf32> to vector<8x8x128xbf16>
    %c1_76 = arith.constant 1 : index
    %c2_77 = arith.constant 2 : index
    %c0_78 = arith.constant 0 : index
    %72 = vector.load %arg12[%c1_76, %c2_77, %c0_78] : memref<10x12x128xbf16, #tpu.memory_space<vmem>>, vector<8x8x128xbf16>
    tpu.vector_store %arg12[%c1_76, %c2_77, %c0_78], %71 {strides = array<i32>} : memref<10x12x128xbf16, #tpu.memory_space<vmem>>, vector<8x8x128xbf16>,
    %c0_79 = arith.constant 0 : index
    %c1_80 = arith.constant 1 : index
    %c0_81 = arith.constant 0 : index
    %73 = vector.load %arg12[%c0_79, %c1_80, %c0_81] : memref<10x12x128xbf16, #tpu.memory_space<vmem>>, vector<8x8x128xbf16>
    %74 = vector.shape_cast %73 : vector<8x8x128xbf16> to vector<64x128xbf16>
    %c0_82 = arith.constant 0 : index
    %c2_83 = arith.constant 2 : index
    %c0_84 = arith.constant 0 : index
    %75 = vector.load %arg12[%c0_82, %c2_83, %c0_84] : memref<10x12x128xbf16, #tpu.memory_space<vmem>>, vector<8x8x128xbf16>
    %76 = vector.shape_cast %75 : vector<8x8x128xbf16> to vector<64x128xbf16>
    %77 = tpu.concatenate %74, %76 in 1 : vector<64x128xbf16>, vector<64x128xbf16> -> vector<64x256xbf16>
    %c0_85 = arith.constant 0 : index
    %c0_86 = arith.constant 0 : index
    %c0_87 = arith.constant 0 : index
    %78 = vector.load %arg5[%c0_85, %c0_86, %c0_87] : memref<9x128x128xbf16, #tpu.memory_space<vmem>>, vector<2x128x128xbf16>
    %79 = vector.shape_cast %78 : vector<2x128x128xbf16> to vector<256x128xbf16>
    %cst_88 = arith.constant dense<0.000000e+00> : vector<64x128xf32>
    %80 = tpu.matmul %77, %79, %cst_88 {dimension_numbers = #tpu.dot_dimension_numbers<[1], [0], [0], [1], [0, 0, 1, 1], [], []>} : vector<64x256xbf16>, vector<256x128xbf16>, vector<64x128xf32> -> vector<64x128xf32>
    %c0_89 = arith.constant 0 : index
    %c3_90 = arith.constant 3 : index
    %c0_91 = arith.constant 0 : index
    %81 = vector.load %arg12[%c0_89, %c3_90, %c0_91] : memref<10x12x128xbf16, #tpu.memory_space<vmem>>, vector<8x8x128xbf16>
    %82 = vector.shape_cast %81 : vector<8x8x128xbf16> to vector<64x128xbf16>
    %c1_92 = arith.constant 1 : index
    %c1_93 = arith.constant 1 : index
    %c0_94 = arith.constant 0 : index
    %83 = vector.load %arg12[%c1_92, %c1_93, %c0_94] : memref<10x12x128xbf16, #tpu.memory_space<vmem>>, vector<8x8x128xbf16>
    %84 = vector.shape_cast %83 : vector<8x8x128xbf16> to vector<64x128xbf16>
    %85 = tpu.concatenate %82, %84 in 1 : vector<64x128xbf16>, vector<64x128xbf16> -> vector<64x256xbf16>
    %c2_95 = arith.constant 2 : index
    %c0_96 = arith.constant 0 : index
    %c0_97 = arith.constant 0 : index
    %86 = vector.load %arg5[%c2_95, %c0_96, %c0_97] : memref<9x128x128xbf16, #tpu.memory_space<vmem>>, vector<2x128x128xbf16>
    %87 = vector.shape_cast %86 : vector<2x128x128xbf16> to vector<256x128xbf16>
    %cst_98 = arith.constant dense<0.000000e+00> : vector<64x128xf32>
    %88 = tpu.matmul %85, %87, %cst_98 {dimension_numbers = #tpu.dot_dimension_numbers<[1], [0], [0], [1], [0, 0, 1, 1], [], []>} : vector<64x256xbf16>, vector<256x128xbf16>, vector<64x128xf32> -> vector<64x128xf32>
    %89 = arith.addf %80, %88 : vector<64x128xf32>
    %c1_99 = arith.constant 1 : index
    %c2_100 = arith.constant 2 : index
    %c0_101 = arith.constant 0 : index
    %90 = vector.load %arg12[%c1_99, %c2_100, %c0_101] : memref<10x12x128xbf16, #tpu.memory_space<vmem>>, vector<8x8x128xbf16>
    %91 = vector.shape_cast %90 : vector<8x8x128xbf16> to vector<64x128xbf16>
    %c1_102 = arith.constant 1 : index
    %c3_103 = arith.constant 3 : index
    %c0_104 = arith.constant 0 : index
    %92 = vector.load %arg12[%c1_102, %c3_103, %c0_104] : memref<10x12x128xbf16, #tpu.memory_space<vmem>>, vector<8x8x128xbf16>
    %93 = vector.shape_cast %92 : vector<8x8x128xbf16> to vector<64x128xbf16>
    %94 = tpu.concatenate %91, %93 in 1 : vector<64x128xbf16>, vector<64x128xbf16> -> vector<64x256xbf16>
    %c4_105 = arith.constant 4 : index
    %c0_106 = arith.constant 0 : index
    %c0_107 = arith.constant 0 : index
    %95 = vector.load %arg5[%c4_105, %c0_106, %c0_107] : memref<9x128x128xbf16, #tpu.memory_space<vmem>>, vector<2x128x128xbf16>
    %96 = vector.shape_cast %95 : vector<2x128x128xbf16> to vector<256x128xbf16>
    %cst_108 = arith.constant dense<0.000000e+00> : vector<64x128xf32>
    %97 = tpu.matmul %94, %96, %cst_108 {dimension_numbers = #tpu.dot_dimension_numbers<[1], [0], [0], [1], [0, 0, 1, 1], [], []>} : vector<64x256xbf16>, vector<256x128xbf16>, vector<64x128xf32> -> vector<64x128xf32>
    %98 = arith.addf %89, %97 : vector<64x128xf32>
    %c2_109 = arith.constant 2 : index
    %c1_110 = arith.constant 1 : index
    %c0_111 = arith.constant 0 : index
    %99 = vector.load %arg12[%c2_109, %c1_110, %c0_111] : memref<10x12x128xbf16, #tpu.memory_space<vmem>>, vector<8x8x128xbf16>
    %100 = vector.shape_cast %99 : vector<8x8x128xbf16> to vector<64x128xbf16>
    %c2_112 = arith.constant 2 : index
    %c2_113 = arith.constant 2 : index
    %c0_114 = arith.constant 0 : index
    %101 = vector.load %arg12[%c2_112, %c2_113, %c0_114] : memref<10x12x128xbf16, #tpu.memory_space<vmem>>, vector<8x8x128xbf16>
    %102 = vector.shape_cast %101 : vector<8x8x128xbf16> to vector<64x128xbf16>
    %103 = tpu.concatenate %100, %102 in 1 : vector<64x128xbf16>, vector<64x128xbf16> -> vector<64x256xbf16>
    %c6_115 = arith.constant 6 : index
    %c0_116 = arith.constant 0 : index
    %c0_117 = arith.constant 0 : index
    %104 = vector.load %arg5[%c6_115, %c0_116, %c0_117] : memref<9x128x128xbf16, #tpu.memory_space<vmem>>, vector<2x128x128xbf16>
    %105 = vector.shape_cast %104 : vector<2x128x128xbf16> to vector<256x128xbf16>
    %cst_118 = arith.constant dense<0.000000e+00> : vector<64x128xf32>
    %106 = tpu.matmul %103, %105, %cst_118 {dimension_numbers = #tpu.dot_dimension_numbers<[1], [0], [0], [1], [0, 0, 1, 1], [], []>} : vector<64x256xbf16>, vector<256x128xbf16>, vector<64x128xf32> -> vector<64x128xf32>
    %107 = arith.addf %98, %106 : vector<64x128xf32>
    %c2_119 = arith.constant 2 : index
    %c3_120 = arith.constant 3 : index
    %c0_121 = arith.constant 0 : index
    %108 = vector.load %arg12[%c2_119, %c3_120, %c0_121] : memref<10x12x128xbf16, #tpu.memory_space<vmem>>, vector<8x8x128xbf16>
    %109 = vector.shape_cast %108 : vector<8x8x128xbf16> to vector<64x128xbf16>
    %c8_122 = arith.constant 8 : index
    %c0_123 = arith.constant 0 : index
    %c0_124 = arith.constant 0 : index
    %110 = vector.load %arg5[%c8_122, %c0_123, %c0_124] : memref<9x128x128xbf16, #tpu.memory_space<vmem>>, vector<1x128x128xbf16>
    %111 = vector.shape_cast %110 : vector<1x128x128xbf16> to vector<128x128xbf16>
    %cst_125 = arith.constant dense<0.000000e+00> : vector<64x128xf32>
    %112 = tpu.matmul %109, %111, %cst_125 {dimension_numbers = #tpu.dot_dimension_numbers<[1], [0], [0], [1], [0, 0, 1, 1], [], []>} : vector<64x128xbf16>, vector<128x128xbf16>, vector<64x128xf32> -> vector<64x128xf32>
    %113 = arith.addf %107, %112 : vector<64x128xf32>
    %c0_126 = arith.constant 0 : index
    %c0_127 = arith.constant 0 : index
    %114 = vector.load %arg6[%c0_126, %c0_127] : memref<1x128xf32, #tpu.memory_space<vmem>>, vector<1x128xf32>
    %115 = vector.broadcast %114 : vector<1x128xf32> to vector<64x128xf32>
    %116 = arith.mulf %113, %115 : vector<64x128xf32>
    %c0_128 = arith.constant 0 : index
    %c0_129 = arith.constant 0 : index
    %117 = vector.load %arg7[%c0_128, %c0_129] : memref<1x128xf32, #tpu.memory_space<vmem>>, vector<1x128xf32>
    %118 = vector.broadcast %117 : vector<1x128xf32> to vector<64x128xf32>
    %119 = arith.addf %116, %118 : vector<64x128xf32>
    %c0_130 = arith.constant 0 : index
    %c3_131 = arith.constant 3 : index
    %c0_132 = arith.constant 0 : index
    %c0_133 = arith.constant 0 : index
    %c0_134 = arith.constant 0 : index
    %120 = vector.load %arg1[%c0_130, %c3_131, %c0_132, %c0_133, %c0_134] : memref<1x4x9x9x128xbf16, #tpu.memory_space<vmem>>, vector<1x1x8x8x128xbf16>
    %121 = vector.shape_cast %120 : vector<1x1x8x8x128xbf16> to vector<8x8x128xbf16>
    %122 = vector.shape_cast %121 : vector<8x8x128xbf16> to vector<64x128xbf16>
    %c0_135 = arith.constant 0 : index
    %c0_136 = arith.constant 0 : index
    %123 = vector.load %arg8[%c0_135, %c0_136] : memref<128x128xbf16, #tpu.memory_space<vmem>>, vector<128x128xbf16>
    %cst_137 = arith.constant dense<0.000000e+00> : vector<64x128xf32>
    %124 = tpu.matmul %122, %123, %cst_137 {dimension_numbers = #tpu.dot_dimension_numbers<[1], [0], [0], [1], [0, 0, 1, 1], [], []>} : vector<64x128xbf16>, vector<128x128xbf16>, vector<64x128xf32> -> vector<64x128xf32>
    %c0_138 = arith.constant 0 : index
    %c0_139 = arith.constant 0 : index
    %125 = vector.load %arg9[%c0_138, %c0_139] : memref<1x128xf32, #tpu.memory_space<vmem>>, vector<1x128xf32>
    %126 = vector.broadcast %125 : vector<1x128xf32> to vector<64x128xf32>
    %127 = arith.mulf %124, %126 : vector<64x128xf32>
    %c0_140 = arith.constant 0 : index
    %c0_141 = arith.constant 0 : index
    %128 = vector.load %arg10[%c0_140, %c0_141] : memref<1x128xf32, #tpu.memory_space<vmem>>, vector<1x128xf32>
    %129 = vector.broadcast %128 : vector<1x128xf32> to vector<64x128xf32>
    %130 = arith.addf %127, %129 : vector<64x128xf32>
    %131 = arith.addf %119, %130 : vector<64x128xf32>
    %cst_142 = arith.constant 0.000000e+00 : f32
    %132 = vector.broadcast %cst_142 : f32 to vector<64x128xf32>
    %133 = arith.maximumf %131, %132 : vector<64x128xf32>
    %134 = arith.truncf %133 : vector<64x128xf32> to vector<64x128xbf16>
    %c0_143 = arith.constant 0 : index
    %c0_144 = arith.constant 0 : index
    %c0_145 = arith.constant 0 : index
    %135 = vector.load %arg11[%c0_143, %c0_144, %c0_145] : memref<1x64x128xbf16, #tpu.memory_space<vmem>>, vector<1x64x128xbf16>
    %136 = vector.shape_cast %135 : vector<1x64x128xbf16> to vector<64x128xbf16>
    %137 = vector.shape_cast %134 : vector<64x128xbf16> to vector<1x64x128xbf16>
    tpu.vector_store %arg11[%c0_143, %c0_144, %c0_145], %137 {strides = array<i32>} : memref<1x64x128xbf16, #tpu.memory_space<vmem>>, vector<1x64x128xbf16>,
    return
  }
  func.func @transform_0(%arg0: i32) -> (i32, i32, i32, i32, i32) {
    %c0_i32 = arith.constant 0 : i32
    %c0_i32_0 = arith.constant 0 : i32
    %c0_i32_1 = arith.constant 0 : i32
    %c0_i32_2 = arith.constant 0 : i32
    %c0_i32_3 = arith.constant 0 : i32
    return %arg0, %c0_i32, %c0_i32_0, %c0_i32_1, %c0_i32_2 : i32, i32, i32, i32, i32
  }
  func.func @transform_1(%arg0: i32) -> (i32, i32, i32) {
    %c0_i32 = arith.constant 0 : i32
    %c0_i32_0 = arith.constant 0 : i32
    %c0_i32_1 = arith.constant 0 : i32
    %c0_i32_2 = arith.constant 0 : i32
    return %c0_i32, %c0_i32_0, %c0_i32_1 : i32, i32, i32
  }
  func.func @transform_2(%arg0: i32) -> (i32, i32) {
    %c0_i32 = arith.constant 0 : i32
    %c0_i32_0 = arith.constant 0 : i32
    %c0_i32_1 = arith.constant 0 : i32
    return %c0_i32, %c0_i32_0 : i32, i32
  }
  func.func @transform_3(%arg0: i32) -> (i32, i32) {
    %c0_i32 = arith.constant 0 : i32
    %c0_i32_0 = arith.constant 0 : i32
    %c0_i32_1 = arith.constant 0 : i32
    return %c0_i32, %c0_i32_0 : i32, i32
  }
  func.func @transform_4(%arg0: i32) -> (i32, i32, i32) {
    %c0_i32 = arith.constant 0 : i32
    %c0_i32_0 = arith.constant 0 : i32
    %c0_i32_1 = arith.constant 0 : i32
    %c0_i32_2 = arith.constant 0 : i32
    return %c0_i32, %c0_i32_0, %c0_i32_1 : i32, i32, i32
  }
  func.func @transform_5(%arg0: i32) -> (i32, i32) {
    %c0_i32 = arith.constant 0 : i32
    %c0_i32_0 = arith.constant 0 : i32
    %c0_i32_1 = arith.constant 0 : i32
    return %c0_i32, %c0_i32_0 : i32, i32
  }
  func.func @transform_6(%arg0: i32) -> (i32, i32) {
    %c0_i32 = arith.constant 0 : i32
    %c0_i32_0 = arith.constant 0 : i32
    %c0_i32_1 = arith.constant 0 : i32
    return %c0_i32, %c0_i32_0 : i32, i32
  }
  func.func @transform_7(%arg0: i32) -> (i32, i32) {
    %c0_i32 = arith.constant 0 : i32
    %c0_i32_0 = arith.constant 0 : i32
    %c0_i32_1 = arith.constant 0 : i32
    return %c0_i32, %c0_i32_0 : i32, i32
  }
  func.func @transform_8(%arg0: i32) -> (i32, i32) {
    %c0_i32 = arith.constant 0 : i32
    %c0_i32_0 = arith.constant 0 : i32
    %c0_i32_1 = arith.constant 0 : i32
    return %c0_i32, %c0_i32_0 : i32, i32
  }
  func.func @transform_9(%arg0: i32) -> (i32, i32) {
    %c0_i32 = arith.constant 0 : i32
    %c0_i32_0 = arith.constant 0 : i32
    %c0_i32_1 = arith.constant 0 : i32
    return %c0_i32, %c0_i32_0 : i32, i32
  }
  func.func @transform_10(%arg0: i32) -> (i32, i32, i32) {
    %c0_i32 = arith.constant 0 : i32
    %c0_i32_0 = arith.constant 0 : i32
    %c0_i32_1 = arith.constant 0 : i32
    return %arg0, %c0_i32, %c0_i32_0 : i32, i32, i32
  }
}

</mosaic_0001>

<llo_original>
// kernel: basic_block_forward.1
$region0: #{basic_block_forward.1}
  #allocation0 [shape = 'u32[]', space=smem, size = 0x4, offset = 0x4, fixed_abs, tag = 'smem constant byte address 0x4 - core index']
  #allocation1 [shape = 'u32[144,128]{1,0:T(1,128)}', space=vmem, size = 0x12000, scoped, tag = 'internal scratch']
  #allocation2 [shape = 'bf16[10,12,128]{2,1,0:T(8,128)(2,1)}', space=vmem, size = 0xa000, scoped, tag = 'scratch operand']
  %s0 = inlined_call_operand.vmem [shape: bf16[2,4,9,9,128], index: 0, kind: input, shape index: {}]
  %s1 = inlined_call_operand.vmem [shape: bf16[9,128,128], index: 1, kind: input, shape index: {}]
  %s2 = inlined_call_operand.vmem [shape: f32[1,128], index: 2, kind: input, shape index: {}]
  %s3 = inlined_call_operand.vmem [shape: f32[1,128], index: 3, kind: input, shape index: {}]
  %s4 = inlined_call_operand.vmem [shape: bf16[9,128,128], index: 4, kind: input, shape index: {}]
  %s5 = inlined_call_operand.vmem [shape: f32[1,128], index: 5, kind: input, shape index: {}]
  %s6 = inlined_call_operand.vmem [shape: f32[1,128], index: 6, kind: input, shape index: {}]
  %s7 = inlined_call_operand.vmem [shape: bf16[128,128], index: 7, kind: input, shape index: {}]
  %s8 = inlined_call_operand.vmem [shape: f32[1,128], index: 8, kind: input, shape index: {}]
  %s9 = inlined_call_operand.vmem [shape: f32[1,128], index: 9, kind: input, shape index: {}]
  %s10 = inlined_call_operand.vmem [shape: bf16[2,64,128], index: 10, kind: output, shape index: {}]
  %s11 = sld [smem:[#allocation0]]
  $region73: #{basic_block_forward.1} parent=0
    _
  %s13 = ssub.s32 1, %s11
  %s14 = scalar_select 0, %s13, %s11
  loop: start=0, step=1, limit=4
  $region2: #{basic_block_forward.1} parent=0 // loop_pre_header
    _
  $region3: #{basic_block_forward.1} parent=0 // loop_header
    %s16 = sphi 0, %s20
    %p17 = scmp.ge.s32.totalorder %s16, 4
    %s26 = sphi 0, %s28
    %s29 = sphi 0, %s26
    %s30 = sphi 0, %s29
    %s46 = sphi 0, %s30
    %s50 = sphi 0, %s50
    %s52 = sphi 0, %s50
    %s53 = sphi 0, %s52
    %s67 = sphi 0, %s53
    %s71 = sphi 0, %s71
    %s73 = sphi 0, %s71
    %s74 = sphi 0, %s73
    %s88 = sphi 0, %s74
    %s92 = sphi 0, %s92
    %s94 = sphi 0, %s92
    %s95 = sphi 0, %s94
    %s109 = sphi 0, %s95
    %s113 = sphi 0, %s113
    %s115 = sphi 0, %s113
    %s116 = sphi 0, %s115
    %s130 = sphi 0, %s116
    %s134 = sphi 0, %s134
    %s136 = sphi 0, %s134
    %s137 = sphi 0, %s136
    %s151 = sphi 0, %s137
    %s155 = sphi 0, %s155
    %s157 = sphi 0, %s155
    %s158 = sphi 0, %s157
    %s172 = sphi 0, %s158
    %s176 = sphi 0, %s176
    %s178 = sphi 0, %s176
    %s179 = sphi 0, %s178
    %s193 = sphi 0, %s179
    %s197 = sphi 0, %s197
    %s199 = sphi 0, %s197
    %s200 = sphi 0, %s199
    %s214 = sphi 0, %s200
    %s218 = sphi 0, %s218
    %s220 = sphi 0, %s218
    %s221 = sphi 0, %s220
    %s235 = sphi 0, %s221
    %s241 = sphi 0, %s243
    %s244 = sphi 0, %s241
    %s245 = sphi 0, %s244
    %s261 = sphi 0, %s245
  $region4: #{basic_block_forward.1} parent=0 // loop_header_branch
    %19 = sbr.rel (%p17) target = $region8
  $region5: #{basic_block_forward.1} parent=0 // loop_body
    %s21 = ssub.s32 %s16, 1
    %s22 = ssub.s32 %s16, 2
    %s23 = sadd.s32 %s16, 1
    %s24 = ssub.s32 %s16, %s23
    %p25 = scmp.eq.s32.totalorder %s24, 0
    %s27 = sadd.s32 %s26, 1
    %s28 = scalar_select %p25, %s26, %s27
    %p31 = pneg %p25
    %p32 = scmp.eq.s32.totalorder %s16, 1
    %p33 = por %p31, %p32
    %p34 = scmp.ne.s32.totalorder %s26, %s29
    %p35 = scmp.eq.s32.totalorder %s16, 0
    %p36 = por %p34, %p35
    %p37 = scmp.ne.s32.totalorder %s26, %s29
    %p38 = scmp.eq.s32.totalorder %s21, 1
    %p39 = por %p37, %p38
    %p40 = scmp.ne.s32.totalorder %s29, %s30
    %p41 = scmp.eq.s32.totalorder %s21, 0
    %p42 = por %p40, %p41
    %p43 = scmp.ne.s32.totalorder %s29, %s30
    %p44 = scmp.eq.s32.totalorder %s22, 1
    %p45 = por %p43, %p44
    %p47 = scmp.ne.s32.totalorder %s30, %s46
    %p48 = scmp.eq.s32.totalorder %s22, 0
    %p49 = por %p47, %p48
    %s51 = sadd.s32 %s50, 1
    %p54 = scmp.eq.s32.totalorder %s16, 1
    %p55 = scmp.ne.s32.totalorder %s50, %s52
    %p56 = scmp.eq.s32.totalorder %s16, 0
    %p57 = por %p55, %p56
    %p58 = scmp.ne.s32.totalorder %s50, %s52
    %p59 = scmp.eq.s32.totalorder %s21, 1
    %p60 = por %p58, %p59
    %p61 = scmp.ne.s32.totalorder %s52, %s53
    %p62 = scmp.eq.s32.totalorder %s21, 0
    %p63 = por %p61, %p62
    %p64 = scmp.ne.s32.totalorder %s52, %s53
    %p65 = scmp.eq.s32.totalorder %s22, 1
    %p66 = por %p64, %p65
    %p68 = scmp.ne.s32.totalorder %s53, %s67
    %p69 = scmp.eq.s32.totalorder %s22, 0
    %p70 = por %p68, %p69
    %s72 = sadd.s32 %s71, 1
    %p75 = scmp.eq.s32.totalorder %s16, 1
    %p76 = scmp.ne.s32.totalorder %s71, %s73
    %p77 = scmp.eq.s32.totalorder %s16, 0
    %p78 = por %p76, %p77
    %p79 = scmp.ne.s32.totalorder %s71, %s73
    %p80 = scmp.eq.s32.totalorder %s21, 1
    %p81 = por %p79, %p80
    %p82 = scmp.ne.s32.totalorder %s73, %s74
    %p83 = scmp.eq.s32.totalorder %s21, 0
    %p84 = por %p82, %p83
    %p85 = scmp.ne.s32.totalorder %s73, %s74
    %p86 = scmp.eq.s32.totalorder %s22, 1
    %p87 = por %p85, %p86
    %p89 = scmp.ne.s32.totalorder %s74, %s88
    %p90 = scmp.eq.s32.totalorder %s22, 0
    %p91 = por %p89, %p90
    %s93 = sadd.s32 %s92, 1
    %p96 = scmp.eq.s32.totalorder %s16, 1
    %p97 = scmp.ne.s32.totalorder %s92, %s94
    %p98 = scmp.eq.s32.totalorder %s16, 0
    %p99 = por %p97, %p98
    %p100 = scmp.ne.s32.totalorder %s92, %s94
    %p101 = scmp.eq.s32.totalorder %s21, 1
    %p102 = por %p100, %p101
    %p103 = scmp.ne.s32.totalorder %s94, %s95
    %p104 = scmp.eq.s32.totalorder %s21, 0
    %p105 = por %p103, %p104
    %p106 = scmp.ne.s32.totalorder %s94, %s95
    %p107 = scmp.eq.s32.totalorder %s22, 1
    %p108 = por %p106, %p107
    %p110 = scmp.ne.s32.totalorder %s95, %s109
    %p111 = scmp.eq.s32.totalorder %s22, 0
    %p112 = por %p110, %p111
    %s114 = sadd.s32 %s113, 1
    %p117 = scmp.eq.s32.totalorder %s16, 1
    %p118 = scmp.ne.s32.totalorder %s113, %s115
    %p119 = scmp.eq.s32.totalorder %s16, 0
    %p120 = por %p118, %p119
    %p121 = scmp.ne.s32.totalorder %s113, %s115
    %p122 = scmp.eq.s32.totalorder %s21, 1
    %p123 = por %p121, %p122
    %p124 = scmp.ne.s32.totalorder %s115, %s116
    %p125 = scmp.eq.s32.totalorder %s21, 0
    %p126 = por %p124, %p125
    %p127 = scmp.ne.s32.totalorder %s115, %s116
    %p128 = scmp.eq.s32.totalorder %s22, 1
    %p129 = por %p127, %p128
    %p131 = scmp.ne.s32.totalorder %s116, %s130
    %p132 = scmp.eq.s32.totalorder %s22, 0
    %p133 = por %p131, %p132
    %s135 = sadd.s32 %s134, 1
    %p138 = scmp.eq.s32.totalorder %s16, 1
    %p139 = scmp.ne.s32.totalorder %s134, %s136
    %p140 = scmp.eq.s32.totalorder %s16, 0
    %p141 = por %p139, %p140
    %p142 = scmp.ne.s32.totalorder %s134, %s136
    %p143 = scmp.eq.s32.totalorder %s21, 1
    %p144 = por %p142, %p143
    %p145 = scmp.ne.s32.totalorder %s136, %s137
    %p146 = scmp.eq.s32.totalorder %s21, 0
    %p147 = por %p145, %p146
    %p148 = scmp.ne.s32.totalorder %s136, %s137
    %p149 = scmp.eq.s32.totalorder %s22, 1
    %p150 = por %p148, %p149
    %p152 = scmp.ne.s32.totalorder %s137, %s151
    %p153 = scmp.eq.s32.totalorder %s22, 0
    %p154 = por %p152, %p153
    %s156 = sadd.s32 %s155, 1
    %p159 = scmp.eq.s32.totalorder %s16, 1
    %p160 = scmp.ne.s32.totalorder %s155, %s157
    %p161 = scmp.eq.s32.totalorder %s16, 0
    %p162 = por %p160, %p161
    %p163 = scmp.ne.s32.totalorder %s155, %s157
    %p164 = scmp.eq.s32.totalorder %s21, 1
    %p165 = por %p163, %p164
    %p166 = scmp.ne.s32.totalorder %s157, %s158
    %p167 = scmp.eq.s32.totalorder %s21, 0
    %p168 = por %p166, %p167
    %p169 = scmp.ne.s32.totalorder %s157, %s158
    %p170 = scmp.eq.s32.totalorder %s22, 1
    %p171 = por %p169, %p170
    %p173 = scmp.ne.s32.totalorder %s158, %s172
    %p174 = scmp.eq.s32.totalorder %s22, 0
    %p175 = por %p173, %p174
    %s177 = sadd.s32 %s176, 1
    %p180 = scmp.eq.s32.totalorder %s16, 1
    %p181 = scmp.ne.s32.totalorder %s176, %s178
    %p182 = scmp.eq.s32.totalorder %s16, 0
    %p183 = por %p181, %p182
    %p184 = scmp.ne.s32.totalorder %s176, %s178
    %p185 = scmp.eq.s32.totalorder %s21, 1
    %p186 = por %p184, %p185
    %p187 = scmp.ne.s32.totalorder %s178, %s179
    %p188 = scmp.eq.s32.totalorder %s21, 0
    %p189 = por %p187, %p188
    %p190 = scmp.ne.s32.totalorder %s178, %s179
    %p191 = scmp.eq.s32.totalorder %s22, 1
    %p192 = por %p190, %p191
    %p194 = scmp.ne.s32.totalorder %s179, %s193
    %p195 = scmp.eq.s32.totalorder %s22, 0
    %p196 = por %p194, %p195
    %s198 = sadd.s32 %s197, 1
    %p201 = scmp.eq.s32.totalorder %s16, 1
    %p202 = scmp.ne.s32.totalorder %s197, %s199
    %p203 = scmp.eq.s32.totalorder %s16, 0
    %p204 = por %p202, %p203
    %p205 = scmp.ne.s32.totalorder %s197, %s199
    %p206 = scmp.eq.s32.totalorder %s21, 1
    %p207 = por %p205, %p206
    %p208 = scmp.ne.s32.totalorder %s199, %s200
    %p209 = scmp.eq.s32.totalorder %s21, 0
    %p210 = por %p208, %p209
    %p211 = scmp.ne.s32.totalorder %s199, %s200
    %p212 = scmp.eq.s32.totalorder %s22, 1
    %p213 = por %p211, %p212
    %p215 = scmp.ne.s32.totalorder %s200, %s214
    %p216 = scmp.eq.s32.totalorder %s22, 0
    %p217 = por %p215, %p216
    %s219 = sadd.s32 %s218, 1
    %p222 = scmp.eq.s32.totalorder %s16, 1
    %p223 = scmp.ne.s32.totalorder %s218, %s220
    %p224 = scmp.eq.s32.totalorder %s16, 0
    %p225 = por %p223, %p224
    %p226 = scmp.ne.s32.totalorder %s218, %s220
    %p227 = scmp.eq.s32.totalorder %s21, 1
    %p228 = por %p226, %p227
    %p229 = scmp.ne.s32.totalorder %s220, %s221
    %p230 = scmp.eq.s32.totalorder %s21, 0
    %p231 = por %p229, %p230
    %p232 = scmp.ne.s32.totalorder %s220, %s221
    %p233 = scmp.eq.s32.totalorder %s22, 1
    %p234 = por %p232, %p233
    %p236 = scmp.ne.s32.totalorder %s221, %s235
    %p237 = scmp.eq.s32.totalorder %s22, 0
    %p238 = por %p236, %p237
    %s239 = ssub.s32 %s16, %s23
    %p240 = scmp.eq.s32.totalorder %s239, 0
    %s242 = sadd.s32 %s241, 1
    %s243 = scalar_select %p240, %s241, %s242
    %p246 = pneg %p240
    %p247 = scmp.eq.s32.totalorder %s16, 1
    %p248 = por %p246, %p247
    %p249 = scmp.ne.s32.totalorder %s241, %s244
    %p250 = scmp.eq.s32.totalorder %s16, 0
    %p251 = por %p249, %p250
    %p252 = scmp.ne.s32.totalorder %s241, %s244
    %p253 = scmp.eq.s32.totalorder %s21, 1
    %p254 = por %p252, %p253
    %p255 = scmp.ne.s32.totalorder %s244, %s245
    %p256 = scmp.eq.s32.totalorder %s21, 0
    %p257 = por %p255, %p256
    %p258 = scmp.ne.s32.totalorder %s244, %s245
    %p259 = scmp.eq.s32.totalorder %s22, 1
    %p260 = por %p258, %p259
    %p262 = scmp.ne.s32.totalorder %s245, %s261
    %p263 = scmp.eq.s32.totalorder %s22, 0
    %p264 = por %p262, %p263
    %p265 = scmp.le.s32.totalorder 1, %s16
    %p266 = scmp.lt.s32.totalorder %s16, 3
    %p267 = pnand %p265, %p266
    %p268 = pneg %p267
    // Predicated region
    $region9: #{basic_block_forward.1} parent=5 // pred_check
      _
    $region10: #{basic_block_forward.1} parent=5 // pred_check_branch
      %270 = sbr.rel (%p267) target = $region12
    $region11: #{basic_block_forward.1} parent=5 // pred_region
      %s271 = ssub.s32 %s16, 1
      // Predicated region
      $region13: #{basic_block_forward.1} parent=11 // pred_check
        %p272 = pneg %p63
      $region14: #{basic_block_forward.1} parent=11 // pred_check_branch
        %274 = sbr.rel (%p272) target = $region16
      $region15: #{basic_block_forward.1} parent=11 // pred_region
        _
      $region16: #{basic_block_forward.1} parent=11 // pred_fallthru
        _
      // Predicated region
      $region17: #{basic_block_forward.1} parent=11 // pred_check
        %p275 = pneg %p84
      $region18: #{basic_block_forward.1} parent=11 // pred_check_branch
        %277 = sbr.rel (%p275) target = $region20
      $region19: #{basic_block_forward.1} parent=11 // pred_region
        _
      $region20: #{basic_block_forward.1} parent=11 // pred_fallthru
        _
      // Predicated region
      $region21: #{basic_block_forward.1} parent=11 // pred_check
        %p278 = pneg %p105
      $region22: #{basic_block_forward.1} parent=11 // pred_check_branch
        %280 = sbr.rel (%p278) target = $region24
      $region23: #{basic_block_forward.1} parent=11 // pred_region
        _
      $region24: #{basic_block_forward.1} parent=11 // pred_fallthru
        _
      // Predicated region
      $region25: #{basic_block_forward.1} parent=11 // pred_check
        %p281 = pneg %p126
      $region26: #{basic_block_forward.1} parent=11 // pred_check_branch
        %283 = sbr.rel (%p281) target = $region28
      $region27: #{basic_block_forward.1} parent=11 // pred_region
        _
      $region28: #{basic_block_forward.1} parent=11 // pred_fallthru
        _
      // Predicated region
      $region29: #{basic_block_forward.1} parent=11 // pred_check
        %p284 = pneg %p147
      $region30: #{basic_block_forward.1} parent=11 // pred_check_branch
        %286 = sbr.rel (%p284) target = $region32
      $region31: #{basic_block_forward.1} parent=11 // pred_region
        _
      $region32: #{basic_block_forward.1} parent=11 // pred_fallthru
        _
      // Predicated region
      $region33: #{basic_block_forward.1} parent=11 // pred_check
        %p287 = pneg %p168
      $region34: #{basic_block_forward.1} parent=11 // pred_check_branch
        %289 = sbr.rel (%p287) target = $region36
      $region35: #{basic_block_forward.1} parent=11 // pred_region
        _
      $region36: #{basic_block_forward.1} parent=11 // pred_fallthru
        _
      // Predicated region
      $region37: #{basic_block_forward.1} parent=11 // pred_check
        %p290 = pneg %p189
      $region38: #{basic_block_forward.1} parent=11 // pred_check_branch
        %292 = sbr.rel (%p290) target = $region40
      $region39: #{basic_block_forward.1} parent=11 // pred_region
        _
      $region40: #{basic_block_forward.1} parent=11 // pred_fallthru
        _
      // Predicated region
      $region41: #{basic_block_forward.1} parent=11 // pred_check
        %p293 = pneg %p210
      $region42: #{basic_block_forward.1} parent=11 // pred_check_branch
        %295 = sbr.rel (%p293) target = $region44
      $region43: #{basic_block_forward.1} parent=11 // pred_region
        _
      $region44: #{basic_block_forward.1} parent=11 // pred_fallthru
        _
      // Predicated region
      $region45: #{basic_block_forward.1} parent=11 // pred_check
        %p296 = pneg %p231
      $region46: #{basic_block_forward.1} parent=11 // pred_check_branch
        %298 = sbr.rel (%p296) target = $region48
      $region47: #{basic_block_forward.1} parent=11 // pred_region
        _
      $region48: #{basic_block_forward.1} parent=11 // pred_fallthru
        _
    $region12: #{basic_block_forward.1} parent=5 // pred_fallthru
      _
    %p299 = scmp.lt.s32.totalorder %s16, 2
    // Predicated region
    $region49: #{basic_block_forward.1} parent=5 // pred_check
      %p300 = pneg %p299
    $region50: #{basic_block_forward.1} parent=5 // pred_check_branch
      %302 = sbr.rel (%p300) target = $region52
    $region51: #{basic_block_forward.1} parent=5 // pred_region
      // Predicated region
      $region53: #{basic_block_forward.1} parent=51 // pred_check
        %p303 = pneg %p36
      $region54: #{basic_block_forward.1} parent=51 // pred_check_branch
        %305 = sbr.rel (%p303) target = $region56
      $region55: #{basic_block_forward.1} parent=51 // pred_region
        %p306 = scmp.lt.s32.totalorder %s16, 1
        %s307 = scalar_select %p306, %s16, 1
        %s308 = smul.addr %s307, 72
        %s309 = smul.addr %s308, 4
        %s310 = scalar_lea.vmem %s0, %s309
      $region56: #{basic_block_forward.1} parent=51 // pred_fallthru
        _
    $region52: #{basic_block_forward.1} parent=5 // pred_fallthru
      _
    %p311 = scmp.le.s32.totalorder 1, %s16
    %p312 = scmp.lt.s32.totalorder %s16, 3
    %p313 = pnand %p311, %p312
    %p314 = pneg %p313
    // Predicated region
    $region57: #{basic_block_forward.1} parent=5 // pred_check
      _
    $region58: #{basic_block_forward.1} parent=5 // pred_check_branch
      %316 = sbr.rel (%p313) target = $region60
    $region59: #{basic_block_forward.1} parent=5 // pred_region
      %s317 = ssub.s32 %s16, 1
      %p318 = scmp.lt.s32.totalorder %s21, 1
      %s319 = scalar_select %p318, %s21, 1
      %s320 = smul.addr %s319, 72
      %s321 = smul.addr %s320, 4
      %s322 = scalar_lea.vmem %s0, %s321
      %p323 = pneg %p42
      %p324 = pneg %p39
      %p325 = pneg %p63
      %p326 = pneg %p60
      %p327 = pneg %p84
      %p328 = pneg %p81
      %p329 = pneg %p105
      %p330 = pneg %p102
      %p331 = pneg %p126
      %p332 = pneg %p123
      %p333 = pneg %p147
      %p334 = pneg %p144
      %p335 = pneg %p168
      %p336 = pneg %p165
      %p337 = pneg %p189
      %p338 = pneg %p186
      %p339 = pneg %p210
      %p340 = pneg %p207
      %p341 = pneg %p231
      %p342 = pneg %p228
      %p343 = pneg %p257
      %p344 = pneg %p254
      %p345 = scmp.lt.s32.totalorder %s21, 1
      %s346 = scalar_select %p345, %s21, 1
      %s347 = smul.addr %s346, 8
      %s348 = smul.addr %s347, 4
      %s349 = scalar_lea.vmem %s10, %s348
      %p350 = scmp.lt.s32.totalorder %s21, 1
      %s351 = scalar_select %p350, %s21, 1
      %s352 = smul.addr %s351, 72
      %s353 = smul.addr %s352, 4
      %s354 = scalar_lea.vmem %s0, %s353
      %p355 = scmp.lt.s32.totalorder %s21, 1
      %s356 = scalar_select %p355, %s21, 1
      %s357 = smul.addr %s356, 8
      %s358 = smul.addr %s357, 4
      %s359 = scalar_lea.vmem %s10, %s358
      %v361 = vld [vmem:[%s354] sm:$0xf]
      %v362 = vld [vmem:[%s354 + $0x8] sm:$0xf]
      %v363 = vld [vmem:[%s354 + $0x10] sm:$0xf]
      %v364 = vld [vmem:[%s354 + $0x18] sm:$0xf]
      %v365 = vld [vmem:[%s354 + $0x20] sm:$0xf]
      %v366 = vld [vmem:[%s354 + $0x28] sm:$0xf]
      %v367 = vld [vmem:[%s354 + $0x30] sm:$0xf]
      %v368 = vld [vmem:[%s354 + $0x38] sm:$0xf]
      %s369 = scalar_lea.vmem %s354, 72
      %v370 = vld [vmem:[%s369] sm:$0xf]
      %v371 = vld [vmem:[%s369 + $0x8] sm:$0xf]
      %v372 = vld [vmem:[%s369 + $0x10] sm:$0xf]
      %v373 = vld [vmem:[%s369 + $0x18] sm:$0xf]
      %v374 = vld [vmem:[%s369 + $0x20] sm:$0xf]
      %v375 = vld [vmem:[%s369 + $0x28] sm:$0xf]
      %v376 = vld [vmem:[%s369 + $0x30] sm:$0xf]
      %v377 = vld [vmem:[%s369 + $0x38] sm:$0xf]
      %v386 = vunpack.c.l.b16 %v361
      %v387 = vunpack.c.l.b16 %v362
      %v388 = vunpack.c.l.b16 %v363
      %v389 = vunpack.c.l.b16 %v364
      %v390 = vunpack.c.l.b16 %v365
      %v391 = vunpack.c.l.b16 %v366
      %v392 = vunpack.c.l.b16 %v367
      %v393 = vunpack.c.l.b16 %v368
      %v394 = vpack.c.b16 %v387, %v386
      %v395 = vpack.c.b16 %v389, %v388
      %v396 = vpack.c.b16 %v391, %v390
      %v397 = vpack.c.b16 %v393, %v392
      %v410 = vunpack.c.l.b16 %v370
      %v411 = vunpack.c.l.b16 %v371
      %v412 = vunpack.c.l.b16 %v372
      %v413 = vunpack.c.l.b16 %v373
      %v414 = vunpack.c.l.b16 %v374
      %v415 = vunpack.c.l.b16 %v375
      %v416 = vunpack.c.l.b16 %v376
      %v417 = vunpack.c.l.b16 %v377
      %v418 = vpack.c.b16 %v411, %v410
      %v419 = vpack.c.b16 %v413, %v412
      %v420 = vpack.c.b16 %v415, %v414
      %v421 = vpack.c.b16 %v417, %v416
      %v426 = vld [vmem:[%s1] sm:$0xf]
      %v427 = vld [vmem:[%s1 + $0x4] sm:$0xf]
      %v428 = vld [vmem:[%s1 + $0x8] sm:$0xf]
      %v429 = vld [vmem:[%s1 + $0xc] sm:$0xf]
      %v430 = vld [vmem:[%s1 + $0x10] sm:$0xf]
      %v431 = vld [vmem:[%s1 + $0x14] sm:$0xf]
      %v432 = vld [vmem:[%s1 + $0x18] sm:$0xf]
      %v433 = vld [vmem:[%s1 + $0x1c] sm:$0xf]
      %v434 = vld [vmem:[%s1 + $0x20] sm:$0xf]
      %v435 = vld [vmem:[%s1 + $0x24] sm:$0xf]
      %v436 = vld [vmem:[%s1 + $0x28] sm:$0xf]
      %v437 = vld [vmem:[%s1 + $0x2c] sm:$0xf]
      %v438 = vld [vmem:[%s1 + $0x30] sm:$0xf]
      %v439 = vld [vmem:[%s1 + $0x34] sm:$0xf]
      %v440 = vld [vmem:[%s1 + $0x38] sm:$0xf]
      %v441 = vld [vmem:[%s1 + $0x3c] sm:$0xf]
      %v442 = vld [vmem:[%s1 + $0x40] sm:$0xf]
      %v443 = vld [vmem:[%s1 + $0x44] sm:$0xf]
      %v444 = vld [vmem:[%s1 + $0x48] sm:$0xf]
      %v445 = vld [vmem:[%s1 + $0x4c] sm:$0xf]
      %v446 = vld [vmem:[%s1 + $0x50] sm:$0xf]
      %v447 = vld [vmem:[%s1 + $0x54] sm:$0xf]
      %v448 = vld [vmem:[%s1 + $0x58] sm:$0xf]
      %v449 = vld [vmem:[%s1 + $0x5c] sm:$0xf]
      %v450 = vld [vmem:[%s1 + $0x60] sm:$0xf]
      %v451 = vld [vmem:[%s1 + $0x64] sm:$0xf]
      %v452 = vld [vmem:[%s1 + $0x68] sm:$0xf]
      %v453 = vld [vmem:[%s1 + $0x6c] sm:$0xf]
      %v454 = vld [vmem:[%s1 + $0x70] sm:$0xf]
      %v455 = vld [vmem:[%s1 + $0x74] sm:$0xf]
      %v456 = vld [vmem:[%s1 + $0x78] sm:$0xf]
      %v457 = vld [vmem:[%s1 + $0x7c] sm:$0xf]
      %v458 = vld [vmem:[%s354 + $0x4] sm:$0x1]
      %v459 = vld [vmem:[%s354 + $0xc] sm:$0x1]
      %v460 = vld [vmem:[%s354 + $0x14] sm:$0x1]
      %v461 = vld [vmem:[%s354 + $0x1c] sm:$0x1]
      %v462 = vld [vmem:[%s354 + $0x24] sm:$0x1]
      %v463 = vld [vmem:[%s354 + $0x2c] sm:$0x1]
      %v464 = vld [vmem:[%s354 + $0x34] sm:$0x1]
      %v465 = vld [vmem:[%s354 + $0x3c] sm:$0x1]
      %vm466 = vsmask.f32 3328
      %vm467 = vsmask.f32 7440
      %vm468 = vmor %vm466, %vm467
      %v470 = vshrl.u32 %v361, 16
      %v472 = vrot.slane %v470, 4
      %v473 = vshll.u32 %v361, 16
      %v475 = vrot.slane %v473, 5
      %v476 = vor.u32 %v472, %v475
      %v477 = vrot.slane %v476, 4
      %v479 = vshll.u32 %v458, 16
      %v481 = vrot.slane %v479, 5
      %v482 = vsel %vm468, %v477, %v481
      %v484 = vshrl.u32 %v362, 16
      %v486 = vrot.slane %v484, 4
      %v487 = vshll.u32 %v362, 16
      %v489 = vrot.slane %v487, 5
      %v490 = vor.u32 %v486, %v489
      %v491 = vrot.slane %v490, 4
      %v493 = vshll.u32 %v459, 16
      %v495 = vrot.slane %v493, 5
      %v496 = vsel %vm468, %v491, %v495
      %v498 = vshrl.u32 %v363, 16
      %v500 = vrot.slane %v498, 4
      %v501 = vshll.u32 %v363, 16
      %v503 = vrot.slane %v501, 5
      %v504 = vor.u32 %v500, %v503
      %v505 = vrot.slane %v504, 4
      %v507 = vshll.u32 %v460, 16
      %v509 = vrot.slane %v507, 5
      %v510 = vsel %vm468, %v505, %v509
      %v512 = vshrl.u32 %v364, 16
      %v514 = vrot.slane %v512, 4
      %v515 = vshll.u32 %v364, 16
      %v517 = vrot.slane %v515, 5
      %v518 = vor.u32 %v514, %v517
      %v519 = vrot.slane %v518, 4
      %v521 = vshll.u32 %v461, 16
      %v523 = vrot.slane %v521, 5
      %v524 = vsel %vm468, %v519, %v523
      %v526 = vshrl.u32 %v365, 16
      %v528 = vrot.slane %v526, 4
      %v529 = vshll.u32 %v365, 16
      %v531 = vrot.slane %v529, 5
      %v532 = vor.u32 %v528, %v531
      %v533 = vrot.slane %v532, 4
      %v535 = vshll.u32 %v462, 16
      %v537 = vrot.slane %v535, 5
      %v538 = vsel %vm468, %v533, %v537
      %v540 = vshrl.u32 %v366, 16
      %v542 = vrot.slane %v540, 4
      %v543 = vshll.u32 %v366, 16
      %v545 = vrot.slane %v543, 5
      %v546 = vor.u32 %v542, %v545
      %v547 = vrot.slane %v546, 4
      %v549 = vshll.u32 %v463, 16
      %v551 = vrot.slane %v549, 5
      %v552 = vsel %vm468, %v547, %v551
      %v554 = vshrl.u32 %v367, 16
      %v556 = vrot.slane %v554, 4
      %v557 = vshll.u32 %v367, 16
      %v559 = vrot.slane %v557, 5
      %v560 = vor.u32 %v556, %v559
      %v561 = vrot.slane %v560, 4
      %v563 = vshll.u32 %v464, 16
      %v565 = vrot.slane %v563, 5
      %v566 = vsel %vm468, %v561, %v565
      %v568 = vshrl.u32 %v368, 16
      %v570 = vrot.slane %v568, 4
      %v571 = vshll.u32 %v368, 16
      %v573 = vrot.slane %v571, 5
      %v574 = vor.u32 %v570, %v573
      %v575 = vrot.slane %v574, 4
      %v577 = vshll.u32 %v465, 16
      %v579 = vrot.slane %v577, 5
      %v580 = vsel %vm468, %v575, %v579
      %s581 = scalar_lea.vmem %s354, 144
      %v582 = vld [vmem:[%s581] sm:$0xf]
      %v583 = vld [vmem:[%s581 + $0x8] sm:$0xf]
      %v584 = vld [vmem:[%s581 + $0x10] sm:$0xf]
      %v585 = vld [vmem:[%s581 + $0x18] sm:$0xf]
      %v586 = vld [vmem:[%s581 + $0x20] sm:$0xf]
      %v587 = vld [vmem:[%s581 + $0x28] sm:$0xf]
      %v588 = vld [vmem:[%s581 + $0x30] sm:$0xf]
      %v589 = vld [vmem:[%s581 + $0x38] sm:$0xf]
      %v590 = vunpack.c.l.b16 %v482
      %v591 = vunpack.c.l.b16 %v496
      %v592 = vunpack.c.l.b16 %v510
      %v593 = vunpack.c.l.b16 %v524
      %v594 = vunpack.c.l.b16 %v538
      %v595 = vunpack.c.l.b16 %v552
      %v596 = vunpack.c.l.b16 %v566
      %v597 = vunpack.c.l.b16 %v580
      %v598 = vpack.c.b16 %v591, %v590
      %v599 = vpack.c.b16 %v593, %v592
      %v600 = vpack.c.b16 %v595, %v594
      %v601 = vpack.c.b16 %v597, %v596
      %v614 = vunpack.c.l.b16 %v582
      %v615 = vunpack.c.l.b16 %v583
      %v616 = vunpack.c.l.b16 %v584
      %v617 = vunpack.c.l.b16 %v585
      %v618 = vunpack.c.l.b16 %v586
      %v619 = vunpack.c.l.b16 %v587
      %v620 = vunpack.c.l.b16 %v588
      %v621 = vunpack.c.l.b16 %v589
      %v622 = vpack.c.b16 %v615, %v614
      %v623 = vpack.c.b16 %v617, %v616
      %v624 = vpack.c.b16 %v619, %v618
      %v625 = vpack.c.b16 %v621, %v620
      %s630 = scalar_lea.vmem %s1, 128
      %v631 = vld [vmem:[%s630] sm:$0xf]
      %v632 = vld [vmem:[%s630 + $0x4] sm:$0xf]
      %v633 = vld [vmem:[%s630 + $0x8] sm:$0xf]
      %v634 = vld [vmem:[%s630 + $0xc] sm:$0xf]
      %v635 = vld [vmem:[%s630 + $0x10] sm:$0xf]
      %v636 = vld [vmem:[%s630 + $0x14] sm:$0xf]
      %v637 = vld [vmem:[%s630 + $0x18] sm:$0xf]
      %v638 = vld [vmem:[%s630 + $0x1c] sm:$0xf]
      %v639 = vld [vmem:[%s630 + $0x20] sm:$0xf]
      %v640 = vld [vmem:[%s630 + $0x24] sm:$0xf]
      %v641 = vld [vmem:[%s630 + $0x28] sm:$0xf]
      %v642 = vld [vmem:[%s630 + $0x2c] sm:$0xf]
      %v643 = vld [vmem:[%s630 + $0x30] sm:$0xf]
      %v644 = vld [vmem:[%s630 + $0x34] sm:$0xf]
      %v645 = vld [vmem:[%s630 + $0x38] sm:$0xf]
      %v646 = vld [vmem:[%s630 + $0x3c] sm:$0xf]
      %v647 = vld [vmem:[%s630 + $0x40] sm:$0xf]
      %v648 = vld [vmem:[%s630 + $0x44] sm:$0xf]
      %v649 = vld [vmem:[%s630 + $0x48] sm:$0xf]
      %v650 = vld [vmem:[%s630 + $0x4c] sm:$0xf]
      %v651 = vld [vmem:[%s630 + $0x50] sm:$0xf]
      %v652 = vld [vmem:[%s630 + $0x54] sm:$0xf]
      %v653 = vld [vmem:[%s630 + $0x58] sm:$0xf]
      %v654 = vld [vmem:[%s630 + $0x5c] sm:$0xf]
      %v655 = vld [vmem:[%s630 + $0x60] sm:$0xf]
      %v656 = vld [vmem:[%s630 + $0x64] sm:$0xf]
      %v657 = vld [vmem:[%s630 + $0x68] sm:$0xf]
      %v658 = vld [vmem:[%s630 + $0x6c] sm:$0xf]
      %v659 = vld [vmem:[%s630 + $0x70] sm:$0xf]
      %v660 = vld [vmem:[%s630 + $0x74] sm:$0xf]
      %v661 = vld [vmem:[%s630 + $0x78] sm:$0xf]
      %v662 = vld [vmem:[%s630 + $0x7c] sm:$0xf]
      %v695 = vunpack.c.l.b16 %v631
      %v696 = vunpack.c.l.b16 %v632
      %v697 = vunpack.c.l.b16 %v633
      %v698 = vunpack.c.l.b16 %v634
      %v699 = vunpack.c.l.b16 %v635
      %v700 = vunpack.c.l.b16 %v636
      %v701 = vunpack.c.l.b16 %v637
      %v702 = vunpack.c.l.b16 %v638
      %v703 = vunpack.c.l.b16 %v639
      %v704 = vunpack.c.l.b16 %v640
      %v705 = vunpack.c.l.b16 %v641
      %v706 = vunpack.c.l.b16 %v642
      %v707 = vunpack.c.l.b16 %v643
      %v708 = vunpack.c.l.b16 %v644
      %v709 = vunpack.c.l.b16 %v645
      %v710 = vunpack.c.l.b16 %v646
      %v711 = vunpack.c.l.b16 %v647
      %v712 = vunpack.c.l.b16 %v648
      %v713 = vunpack.c.l.b16 %v649
      %v714 = vunpack.c.l.b16 %v650
      %v715 = vunpack.c.l.b16 %v651
      %v716 = vunpack.c.l.b16 %v652
      %v717 = vunpack.c.l.b16 %v653
      %v718 = vunpack.c.l.b16 %v654
      %v719 = vunpack.c.l.b16 %v655
      %v720 = vunpack.c.l.b16 %v656
      %v721 = vunpack.c.l.b16 %v657
      %v722 = vunpack.c.l.b16 %v658
      %v723 = vunpack.c.l.b16 %v659
      %v724 = vunpack.c.l.b16 %v660
      %v725 = vunpack.c.l.b16 %v661
      %v726 = vunpack.c.l.b16 %v662
      %v727 = vpack.c.b16 %v696, %v695
      %v728 = vpack.c.b16 %v698, %v697
      %v729 = vpack.c.b16 %v700, %v699
      %v730 = vpack.c.b16 %v702, %v701
      %v731 = vpack.c.b16 %v704, %v703
      %v732 = vpack.c.b16 %v706, %v705
      %v733 = vpack.c.b16 %v708, %v707
      %v734 = vpack.c.b16 %v710, %v709
      %v735 = vpack.c.b16 %v712, %v711
      %v736 = vpack.c.b16 %v714, %v713
      %v737 = vpack.c.b16 %v716, %v715
      %v738 = vpack.c.b16 %v718, %v717
      %v739 = vpack.c.b16 %v720, %v719
      %v740 = vpack.c.b16 %v722, %v721
      %v741 = vpack.c.b16 %v724, %v723
      %v742 = vpack.c.b16 %v726, %v725
      %759 = vmatprep.subr.bf16.mxu0 0
      %760 = vmatpush1.bf16.msra.mxu0 %v727
      %761 = vmatprep.subr.bf16.mxu0 0
      %762 = vmatpush1.bf16.msra.mxu0 %v728
      %763 = vmatprep.subr.bf16.mxu0 0
      %764 = vmatpush1.bf16.msra.mxu0 %v729
      %765 = vmatprep.subr.bf16.mxu0 0
      %766 = vmatpush1.bf16.msra.mxu0 %v730
      %767 = vmatprep.subr.bf16.mxu0 0
      %768 = vmatpush1.bf16.msra.mxu0 %v731
      %769 = vmatprep.subr.bf16.mxu0 0
      %770 = vmatpush1.bf16.msra.mxu0 %v732
      %771 = vmatprep.subr.bf16.mxu0 0
      %772 = vmatpush1.bf16.msra.mxu0 %v733
      %773 = vmatprep.subr.bf16.mxu0 0
      %774 = vmatpush1.bf16.msra.mxu0 %v734
      %775 = vmatprep.subr.bf16.mxu0 0
      %776 = vmatpush1.bf16.msra.mxu0 %v735
      %777 = vmatprep.subr.bf16.mxu0 0
      %778 = vmatpush1.bf16.msra.mxu0 %v736
      %779 = vmatprep.subr.bf16.mxu0 0
      %780 = vmatpush1.bf16.msra.mxu0 %v737
      %781 = vmatprep.subr.bf16.mxu0 0
      %782 = vmatpush1.bf16.msra.mxu0 %v738
      %783 = vmatprep.subr.bf16.mxu0 0
      %784 = vmatpush1.bf16.msra.mxu0 %v739
      %785 = vmatprep.subr.bf16.mxu0 0
      %786 = vmatpush1.bf16.msra.mxu0 %v740
      %787 = vmatprep.subr.bf16.mxu0 0
      %788 = vmatpush1.bf16.msra.mxu0 %v741
      %789 = vmatprep.subr.bf16.mxu0 0
      %790 = vmatpush1.bf16.msra.mxu0 %v742
      %791 = vmatprep.mubr.bf16.mxu0 %v622
      %792 = vmatmul.mubr.bf16.gmra.mrb[0].mxu0 %v598
      %v793 = vpop.f32.mrb[0].mxu0
      %v794 = vadd.f32 0.0, %v793
      %v795 = vpop.f32.mrb[0].mxu0
      %v796 = vpop.f32.mrb[0].mxu0
      %v797 = vadd.f32 0.0, %v796
      %v798 = vpop.f32.mrb[0].mxu0
      %799 = vmatprep.mubr.bf16.mxu0 %v623
      %800 = vmatmul.mubr.bf16.gmra.mrb[0].mxu0 %v599
      %v801 = vpop.f32.mrb[0].mxu0
      %v802 = vadd.f32 0.0, %v801
      %v803 = vpop.f32.mrb[0].mxu0
      %v804 = vpop.f32.mrb[0].mxu0
      %v805 = vadd.f32 0.0, %v804
      %v806 = vpop.f32.mrb[0].mxu0
      %807 = vmatprep.mubr.bf16.mxu0 %v624
      %808 = vmatmul.mubr.bf16.gmra.mrb[0].mxu0 %v600
      %v809 = vpop.f32.mrb[0].mxu0
      %v810 = vadd.f32 0.0, %v809
      %v811 = vpop.f32.mrb[0].mxu0
      %v812 = vpop.f32.mrb[0].mxu0
      %v813 = vadd.f32 0.0, %v812
      %v814 = vpop.f32.mrb[0].mxu0
      %815 = vmatprep.mubr.bf16.mxu0 %v625
      %816 = vmatmul.mubr.bf16.gmra.mrb[0].mxu0 %v601
      %v817 = vpop.f32.mrb[0].mxu0
      %v818 = vadd.f32 0.0, %v817
      %v819 = vpop.f32.mrb[0].mxu0
      %v820 = vpop.f32.mrb[0].mxu0
      %v821 = vadd.f32 0.0, %v820
      %v822 = vpop.f32.mrb[0].mxu0
      %823 = vdwg.mxu0
      %v856 = vunpack.c.l.b16 %v426
      %v857 = vunpack.c.l.b16 %v427
      %v858 = vunpack.c.l.b16 %v428
      %v859 = vunpack.c.l.b16 %v429
      %v860 = vunpack.c.l.b16 %v430
      %v861 = vunpack.c.l.b16 %v431
      %v862 = vunpack.c.l.b16 %v432
      %v863 = vunpack.c.l.b16 %v433
      %v864 = vunpack.c.l.b16 %v434
      %v865 = vunpack.c.l.b16 %v435
      %v866 = vunpack.c.l.b16 %v436
      %v867 = vunpack.c.l.b16 %v437
      %v868 = vunpack.c.l.b16 %v438
      %v869 = vunpack.c.l.b16 %v439
      %v870 = vunpack.c.l.b16 %v440
      %v871 = vunpack.c.l.b16 %v441
      %v872 = vunpack.c.l.b16 %v442
      %v873 = vunpack.c.l.b16 %v443
      %v874 = vunpack.c.l.b16 %v444
      %v875 = vunpack.c.l.b16 %v445
      %v876 = vunpack.c.l.b16 %v446
      %v877 = vunpack.c.l.b16 %v447
      %v878 = vunpack.c.l.b16 %v448
      %v879 = vunpack.c.l.b16 %v449
      %v880 = vunpack.c.l.b16 %v450
      %v881 = vunpack.c.l.b16 %v451
      %v882 = vunpack.c.l.b16 %v452
      %v883 = vunpack.c.l.b16 %v453
      %v884 = vunpack.c.l.b16 %v454
      %v885 = vunpack.c.l.b16 %v455
      %v886 = vunpack.c.l.b16 %v456
      %v887 = vunpack.c.l.b16 %v457
      %v888 = vpack.c.b16 %v857, %v856
      %v889 = vpack.c.b16 %v859, %v858
      %v890 = vpack.c.b16 %v861, %v860
      %v891 = vpack.c.b16 %v863, %v862
      %v892 = vpack.c.b16 %v865, %v864
      %v893 = vpack.c.b16 %v867, %v866
      %v894 = vpack.c.b16 %v869, %v868
      %v895 = vpack.c.b16 %v871, %v870
      %v896 = vpack.c.b16 %v873, %v872
      %v897 = vpack.c.b16 %v875, %v874
      %v898 = vpack.c.b16 %v877, %v876
      %v899 = vpack.c.b16 %v879, %v878
      %v900 = vpack.c.b16 %v881, %v880
      %v901 = vpack.c.b16 %v883, %v882
      %v902 = vpack.c.b16 %v885, %v884
      %v903 = vpack.c.b16 %v887, %v886
      %920 = vmatprep.subr.bf16.mxu0 0
      %921 = vmatpush1.bf16.msra.mxu0 %v888
      %922 = vmatprep.subr.bf16.mxu0 0
      %923 = vmatpush1.bf16.msra.mxu0 %v889
      %924 = vmatprep.subr.bf16.mxu0 0
      %925 = vmatpush1.bf16.msra.mxu0 %v890
      %926 = vmatprep.subr.bf16.mxu0 0
      %927 = vmatpush1.bf16.msra.mxu0 %v891
      %928 = vmatprep.subr.bf16.mxu0 0
      %929 = vmatpush1.bf16.msra.mxu0 %v892
      %930 = vmatprep.subr.bf16.mxu0 0
      %931 = vmatpush1.bf16.msra.mxu0 %v893
      %932 = vmatprep.subr.bf16.mxu0 0
      %933 = vmatpush1.bf16.msra.mxu0 %v894
      %934 = vmatprep.subr.bf16.mxu0 0
      %935 = vmatpush1.bf16.msra.mxu0 %v895
      %936 = vmatprep.subr.bf16.mxu0 0
      %937 = vmatpush1.bf16.msra.mxu0 %v896
      %938 = vmatprep.subr.bf16.mxu0 0
      %939 = vmatpush1.bf16.msra.mxu0 %v897
      %940 = vmatprep.subr.bf16.mxu0 0
      %941 = vmatpush1.bf16.msra.mxu0 %v898
      %942 = vmatprep.subr.bf16.mxu0 0
      %943 = vmatpush1.bf16.msra.mxu0 %v899
      %944 = vmatprep.subr.bf16.mxu0 0
      %945 = vmatpush1.bf16.msra.mxu0 %v900
      %946 = vmatprep.subr.bf16.mxu0 0
      %947 = vmatpush1.bf16.msra.mxu0 %v901
      %948 = vmatprep.subr.bf16.mxu0 0
      %949 = vmatpush1.bf16.msra.mxu0 %v902
      %950 = vmatprep.subr.bf16.mxu0 0
      %951 = vmatpush1.bf16.msra.mxu0 %v903
      %952 = vmatprep.mubr.bf16.mxu0 %v418
      %953 = vmatmul.mubr.bf16.gmra.mrb[0].mxu0 %v394
      %v954 = vpop.f32.mrb[0].mxu0
      %v955 = vadd.f32 %v794, %v954
      %v956 = vpop.f32.mrb[0].mxu0
      %v957 = vpop.f32.mrb[0].mxu0
      %v958 = vadd.f32 %v797, %v957
      %v959 = vpop.f32.mrb[0].mxu0
      %960 = vmatprep.mubr.bf16.mxu0 %v419
      %961 = vmatmul.mubr.bf16.gmra.mrb[0].mxu0 %v395
      %v962 = vpop.f32.mrb[0].mxu0
      %v963 = vadd.f32 %v802, %v962
      %v964 = vpop.f32.mrb[0].mxu0
      %v965 = vpop.f32.mrb[0].mxu0
      %v966 = vadd.f32 %v805, %v965
      %v967 = vpop.f32.mrb[0].mxu0
      %968 = vmatprep.mubr.bf16.mxu0 %v420
      %969 = vmatmul.mubr.bf16.gmra.mrb[0].mxu0 %v396
      %v970 = vpop.f32.mrb[0].mxu0
      %v971 = vadd.f32 %v810, %v970
      %v972 = vpop.f32.mrb[0].mxu0
      %v973 = vpop.f32.mrb[0].mxu0
      %v974 = vadd.f32 %v813, %v973
      %v975 = vpop.f32.mrb[0].mxu0
      %976 = vmatprep.mubr.bf16.mxu0 %v421
      %977 = vmatmul.mubr.bf16.gmra.mrb[0].mxu0 %v397
      %v978 = vpop.f32.mrb[0].mxu0
      %v979 = vadd.f32 %v818, %v978
      %v980 = vpop.f32.mrb[0].mxu0
      %v981 = vpop.f32.mrb[0].mxu0
      %v982 = vadd.f32 %v821, %v981
      %v983 = vpop.f32.mrb[0].mxu0
      %984 = vdwg.mxu0
      %s985 = scalar_lea.vmem %s354, 216
      %v986 = vld [vmem:[%s985] sm:$0xf]
      %v987 = vld [vmem:[%s985 + $0x8] sm:$0xf]
      %v988 = vld [vmem:[%s985 + $0x10] sm:$0xf]
      %v989 = vld [vmem:[%s985 + $0x18] sm:$0xf]
      %v990 = vld [vmem:[%s985 + $0x20] sm:$0xf]
      %v991 = vld [vmem:[%s985 + $0x28] sm:$0xf]
      %v992 = vld [vmem:[%s985 + $0x30] sm:$0xf]
      %v993 = vld [vmem:[%s985 + $0x38] sm:$0xf]
      %v994 = vld [vmem:[%s581] sm:$0xf]
      %v995 = vld [vmem:[%s581 + $0x4] sm:$0x1]
      %v996 = vld [vmem:[%s581 + $0x8] sm:$0xf]
      %v997 = vld [vmem:[%s581 + $0xc] sm:$0x1]
      %v998 = vld [vmem:[%s581 + $0x10] sm:$0xf]
      %v999 = vld [vmem:[%s581 + $0x14] sm:$0x1]
      %v1000 = vld [vmem:[%s581 + $0x18] sm:$0xf]
      %v1001 = vld [vmem:[%s581 + $0x1c] sm:$0x1]
      %v1002 = vld [vmem:[%s581 + $0x20] sm:$0xf]
      %v1003 = vld [vmem:[%s581 + $0x24] sm:$0x1]
      %v1004 = vld [vmem:[%s581 + $0x28] sm:$0xf]
      %v1005 = vld [vmem:[%s581 + $0x2c] sm:$0x1]
      %v1006 = vld [vmem:[%s581 + $0x30] sm:$0xf]
      %v1007 = vld [vmem:[%s581 + $0x34] sm:$0x1]
      %v1008 = vld [vmem:[%s581 + $0x38] sm:$0xf]
      %v1009 = vld [vmem:[%s581 + $0x3c] sm:$0x1]
      %v1011 = vshrl.u32 %v994, 16
      %v1013 = vrot.slane %v1011, 4
      %v1014 = vshll.u32 %v994, 16
      %v1016 = vrot.slane %v1014, 5
      %v1017 = vor.u32 %v1013, %v1016
      %v1018 = vrot.slane %v1017, 4
      %v1020 = vshll.u32 %v995, 16
      %v1022 = vrot.slane %v1020, 5
      %v1023 = vsel %vm468, %v1018, %v1022
      %v1025 = vshrl.u32 %v996, 16
      %v1027 = vrot.slane %v1025, 4
      %v1028 = vshll.u32 %v996, 16
      %v1030 = vrot.slane %v1028, 5
      %v1031 = vor.u32 %v1027, %v1030
      %v1032 = vrot.slane %v1031, 4
      %v1034 = vshll.u32 %v997, 16
      %v1036 = vrot.slane %v1034, 5
      %v1037 = vsel %vm468, %v1032, %v1036
      %v1039 = vshrl.u32 %v998, 16
      %v1041 = vrot.slane %v1039, 4
      %v1042 = vshll.u32 %v998, 16
      %v1044 = vrot.slane %v1042, 5
      %v1045 = vor.u32 %v1041, %v1044
      %v1046 = vrot.slane %v1045, 4
      %v1048 = vshll.u32 %v999, 16
      %v1050 = vrot.slane %v1048, 5
      %v1051 = vsel %vm468, %v1046, %v1050
      %v1053 = vshrl.u32 %v1000, 16
      %v1055 = vrot.slane %v1053, 4
      %v1056 = vshll.u32 %v1000, 16
      %v1058 = vrot.slane %v1056, 5
      %v1059 = vor.u32 %v1055, %v1058
      %v1060 = vrot.slane %v1059, 4
      %v1062 = vshll.u32 %v1001, 16
      %v1064 = vrot.slane %v1062, 5
      %v1065 = vsel %vm468, %v1060, %v1064
      %v1067 = vshrl.u32 %v1002, 16
      %v1069 = vrot.slane %v1067, 4
      %v1070 = vshll.u32 %v1002, 16
      %v1072 = vrot.slane %v1070, 5
      %v1073 = vor.u32 %v1069, %v1072
      %v1074 = vrot.slane %v1073, 4
      %v1076 = vshll.u32 %v1003, 16
      %v1078 = vrot.slane %v1076, 5
      %v1079 = vsel %vm468, %v1074, %v1078
      %v1081 = vshrl.u32 %v1004, 16
      %v1083 = vrot.slane %v1081, 4
      %v1084 = vshll.u32 %v1004, 16
      %v1086 = vrot.slane %v1084, 5
      %v1087 = vor.u32 %v1083, %v1086
      %v1088 = vrot.slane %v1087, 4
      %v1090 = vshll.u32 %v1005, 16
      %v1092 = vrot.slane %v1090, 5
      %v1093 = vsel %vm468, %v1088, %v1092
      %v1095 = vshrl.u32 %v1006, 16
      %v1097 = vrot.slane %v1095, 4
      %v1098 = vshll.u32 %v1006, 16
      %v1100 = vrot.slane %v1098, 5
      %v1101 = vor.u32 %v1097, %v1100
      %v1102 = vrot.slane %v1101, 4
      %v1104 = vshll.u32 %v1007, 16
      %v1106 = vrot.slane %v1104, 5
      %v1107 = vsel %vm468, %v1102, %v1106
      %v1109 = vshrl.u32 %v1008, 16
      %v1111 = vrot.slane %v1109, 4
      %v1112 = vshll.u32 %v1008, 16
      %v1114 = vrot.slane %v1112, 5
      %v1115 = vor.u32 %v1111, %v1114
      %v1116 = vrot.slane %v1115, 4
      %v1118 = vshll.u32 %v1009, 16
      %v1120 = vrot.slane %v1118, 5
      %v1121 = vsel %vm468, %v1116, %v1120
      %v1130 = vunpack.c.l.b16 %v986
      %v1131 = vunpack.c.l.b16 %v987
      %v1132 = vunpack.c.l.b16 %v988
      %v1133 = vunpack.c.l.b16 %v989
      %v1134 = vunpack.c.l.b16 %v990
      %v1135 = vunpack.c.l.b16 %v991
      %v1136 = vunpack.c.l.b16 %v992
      %v1137 = vunpack.c.l.b16 %v993
      %v1138 = vpack.c.b16 %v1131, %v1130
      %v1139 = vpack.c.b16 %v1133, %v1132
      %v1140 = vpack.c.b16 %v1135, %v1134
      %v1141 = vpack.c.b16 %v1137, %v1136
      %v1146 = vunpack.c.l.b16 %v1023
      %v1147 = vunpack.c.l.b16 %v1037
      %v1148 = vunpack.c.l.b16 %v1051
      %v1149 = vunpack.c.l.b16 %v1065
      %v1150 = vunpack.c.l.b16 %v1079
      %v1151 = vunpack.c.l.b16 %v1093
      %v1152 = vunpack.c.l.b16 %v1107
      %v1153 = vunpack.c.l.b16 %v1121
      %v1154 = vpack.c.b16 %v1147, %v1146
      %v1155 = vpack.c.b16 %v1149, %v1148
      %v1156 = vpack.c.b16 %v1151, %v1150
      %v1157 = vpack.c.b16 %v1153, %v1152
      %s1162 = scalar_lea.vmem %s1, 256
      %v1163 = vld [vmem:[%s1162] sm:$0xf]
      %v1164 = vld [vmem:[%s1162 + $0x4] sm:$0xf]
      %v1165 = vld [vmem:[%s1162 + $0x8] sm:$0xf]
      %v1166 = vld [vmem:[%s1162 + $0xc] sm:$0xf]
      %v1167 = vld [vmem:[%s1162 + $0x10] sm:$0xf]
      %v1168 = vld [vmem:[%s1162 + $0x14] sm:$0xf]
      %v1169 = vld [vmem:[%s1162 + $0x18] sm:$0xf]
      %v1170 = vld [vmem:[%s1162 + $0x1c] sm:$0xf]
      %v1171 = vld [vmem:[%s1162 + $0x20] sm:$0xf]
      %v1172 = vld [vmem:[%s1162 + $0x24] sm:$0xf]
      %v1173 = vld [vmem:[%s1162 + $0x28] sm:$0xf]
      %v1174 = vld [vmem:[%s1162 + $0x2c] sm:$0xf]
      %v1175 = vld [vmem:[%s1162 + $0x30] sm:$0xf]
      %v1176 = vld [vmem:[%s1162 + $0x34] sm:$0xf]
      %v1177 = vld [vmem:[%s1162 + $0x38] sm:$0xf]
      %v1178 = vld [vmem:[%s1162 + $0x3c] sm:$0xf]
      %v1179 = vld [vmem:[%s1162 + $0x40] sm:$0xf]
      %v1180 = vld [vmem:[%s1162 + $0x44] sm:$0xf]
      %v1181 = vld [vmem:[%s1162 + $0x48] sm:$0xf]
      %v1182 = vld [vmem:[%s1162 + $0x4c] sm:$0xf]
      %v1183 = vld [vmem:[%s1162 + $0x50] sm:$0xf]
      %v1184 = vld [vmem:[%s1162 + $0x54] sm:$0xf]
      %v1185 = vld [vmem:[%s1162 + $0x58] sm:$0xf]
      %v1186 = vld [vmem:[%s1162 + $0x5c] sm:$0xf]
      %v1187 = vld [vmem:[%s1162 + $0x60] sm:$0xf]
      %v1188 = vld [vmem:[%s1162 + $0x64] sm:$0xf]
      %v1189 = vld [vmem:[%s1162 + $0x68] sm:$0xf]
      %v1190 = vld [vmem:[%s1162 + $0x6c] sm:$0xf]
      %v1191 = vld [vmem:[%s1162 + $0x70] sm:$0xf]
      %v1192 = vld [vmem:[%s1162 + $0x74] sm:$0xf]
      %v1193 = vld [vmem:[%s1162 + $0x78] sm:$0xf]
      %v1194 = vld [vmem:[%s1162 + $0x7c] sm:$0xf]
      %v1227 = vunpack.c.l.b16 %v1163
      %v1228 = vunpack.c.l.b16 %v1164
      %v1229 = vunpack.c.l.b16 %v1165
      %v1230 = vunpack.c.l.b16 %v1166
      %v1231 = vunpack.c.l.b16 %v1167
      %v1232 = vunpack.c.l.b16 %v1168
      %v1233 = vunpack.c.l.b16 %v1169
      %v1234 = vunpack.c.l.b16 %v1170
      %v1235 = vunpack.c.l.b16 %v1171
      %v1236 = vunpack.c.l.b16 %v1172
      %v1237 = vunpack.c.l.b16 %v1173
      %v1238 = vunpack.c.l.b16 %v1174
      %v1239 = vunpack.c.l.b16 %v1175
      %v1240 = vunpack.c.l.b16 %v1176
      %v1241 = vunpack.c.l.b16 %v1177
      %v1242 = vunpack.c.l.b16 %v1178
      %v1243 = vunpack.c.l.b16 %v1179
      %v1244 = vunpack.c.l.b16 %v1180
      %v1245 = vunpack.c.l.b16 %v1181
      %v1246 = vunpack.c.l.b16 %v1182
      %v1247 = vunpack.c.l.b16 %v1183
      %v1248 = vunpack.c.l.b16 %v1184
      %v1249 = vunpack.c.l.b16 %v1185
      %v1250 = vunpack.c.l.b16 %v1186
      %v1251 = vunpack.c.l.b16 %v1187
      %v1252 = vunpack.c.l.b16 %v1188
      %v1253 = vunpack.c.l.b16 %v1189
      %v1254 = vunpack.c.l.b16 %v1190
      %v1255 = vunpack.c.l.b16 %v1191
      %v1256 = vunpack.c.l.b16 %v1192
      %v1257 = vunpack.c.l.b16 %v1193
      %v1258 = vunpack.c.l.b16 %v1194
      %v1259 = vpack.c.b16 %v1228, %v1227
      %v1260 = vpack.c.b16 %v1230, %v1229
      %v1261 = vpack.c.b16 %v1232, %v1231
      %v1262 = vpack.c.b16 %v1234, %v1233
      %v1263 = vpack.c.b16 %v1236, %v1235
      %v1264 = vpack.c.b16 %v1238, %v1237
      %v1265 = vpack.c.b16 %v1240, %v1239
      %v1266 = vpack.c.b16 %v1242, %v1241
      %v1267 = vpack.c.b16 %v1244, %v1243
      %v1268 = vpack.c.b16 %v1246, %v1245
      %v1269 = vpack.c.b16 %v1248, %v1247
      %v1270 = vpack.c.b16 %v1250, %v1249
      %v1271 = vpack.c.b16 %v1252, %v1251
      %v1272 = vpack.c.b16 %v1254, %v1253
      %v1273 = vpack.c.b16 %v1256, %v1255
      %v1274 = vpack.c.b16 %v1258, %v1257
      %1291 = vmatprep.subr.bf16.mxu0 0
      %1292 = vmatpush1.bf16.msra.mxu0 %v1259
      %1293 = vmatprep.subr.bf16.mxu0 0
      %1294 = vmatpush1.bf16.msra.mxu0 %v1260
      %1295 = vmatprep.subr.bf16.mxu0 0
      %1296 = vmatpush1.bf16.msra.mxu0 %v1261
      %1297 = vmatprep.subr.bf16.mxu0 0
      %1298 = vmatpush1.bf16.msra.mxu0 %v1262
      %1299 = vmatprep.subr.bf16.mxu0 0
      %1300 = vmatpush1.bf16.msra.mxu0 %v1263
      %1301 = vmatprep.subr.bf16.mxu0 0
      %1302 = vmatpush1.bf16.msra.mxu0 %v1264
      %1303 = vmatprep.subr.bf16.mxu0 0
      %1304 = vmatpush1.bf16.msra.mxu0 %v1265
      %1305 = vmatprep.subr.bf16.mxu0 0
      %1306 = vmatpush1.bf16.msra.mxu0 %v1266
      %1307 = vmatprep.subr.bf16.mxu0 0
      %1308 = vmatpush1.bf16.msra.mxu0 %v1267
      %1309 = vmatprep.subr.bf16.mxu0 0
      %1310 = vmatpush1.bf16.msra.mxu0 %v1268
      %1311 = vmatprep.subr.bf16.mxu0 0
      %1312 = vmatpush1.bf16.msra.mxu0 %v1269
      %1313 = vmatprep.subr.bf16.mxu0 0
      %1314 = vmatpush1.bf16.msra.mxu0 %v1270
      %1315 = vmatprep.subr.bf16.mxu0 0
      %1316 = vmatpush1.bf16.msra.mxu0 %v1271
      %1317 = vmatprep.subr.bf16.mxu0 0
      %1318 = vmatpush1.bf16.msra.mxu0 %v1272
      %1319 = vmatprep.subr.bf16.mxu0 0
      %1320 = vmatpush1.bf16.msra.mxu0 %v1273
      %1321 = vmatprep.subr.bf16.mxu0 0
      %1322 = vmatpush1.bf16.msra.mxu0 %v1274
      %1323 = vmatprep.mubr.bf16.mxu0 %v1154
      %1324 = vmatmul.mubr.bf16.gmra.mrb[0].mxu0 %v1138
      %v1325 = vpop.f32.mrb[0].mxu0
      %v1326 = vadd.f32 0.0, %v1325
      %v1327 = vpop.f32.mrb[0].mxu0
      %v1328 = vpop.f32.mrb[0].mxu0
      %v1329 = vadd.f32 0.0, %v1328
      %v1330 = vpop.f32.mrb[0].mxu0
      %1331 = vmatprep.mubr.bf16.mxu0 %v1155
      %1332 = vmatmul.mubr.bf16.gmra.mrb[0].mxu0 %v1139
      %v1333 = vpop.f32.mrb[0].mxu0
      %v1334 = vadd.f32 0.0, %v1333
      %v1335 = vpop.f32.mrb[0].mxu0
      %v1336 = vpop.f32.mrb[0].mxu0
      %v1337 = vadd.f32 0.0, %v1336
      %v1338 = vpop.f32.mrb[0].mxu0
      %1339 = vmatprep.mubr.bf16.mxu0 %v1156
      %1340 = vmatmul.mubr.bf16.gmra.mrb[0].mxu0 %v1140
      %v1341 = vpop.f32.mrb[0].mxu0
      %v1342 = vadd.f32 0.0, %v1341
      %v1343 = vpop.f32.mrb[0].mxu0
      %v1344 = vpop.f32.mrb[0].mxu0
      %v1345 = vadd.f32 0.0, %v1344
      %v1346 = vpop.f32.mrb[0].mxu0
      %1347 = vmatprep.mubr.bf16.mxu0 %v1157
      %1348 = vmatmul.mubr.bf16.gmra.mrb[0].mxu0 %v1141
      %v1349 = vpop.f32.mrb[0].mxu0
      %v1350 = vadd.f32 0.0, %v1349
      %v1351 = vpop.f32.mrb[0].mxu0
      %v1352 = vpop.f32.mrb[0].mxu0
      %v1353 = vadd.f32 0.0, %v1352
      %v1354 = vpop.f32.mrb[0].mxu0
      %1355 = vdwg.mxu0
      %v1356 = vadd.f32 %v955, %v1326
      %v1357 = vadd.f32 %v958, %v1329
      %v1358 = vadd.f32 %v963, %v1334
      %v1359 = vadd.f32 %v966, %v1337
      %v1360 = vadd.f32 %v971, %v1342
      %v1361 = vadd.f32 %v974, %v1345
      %v1362 = vadd.f32 %v979, %v1350
      %v1363 = vadd.f32 %v982, %v1353
      %s1364 = scalar_lea.vmem %s354, 8
      %v1365 = vld [vmem:[%s1364] sm:$0xf]
      %v1366 = vld [vmem:[%s1364 + $0x8] sm:$0xf]
      %v1367 = vld [vmem:[%s1364 + $0x10] sm:$0xf]
      %v1368 = vld [vmem:[%s1364 + $0x18] sm:$0xf]
      %v1369 = vld [vmem:[%s1364 + $0x20] sm:$0xf]
      %v1370 = vld [vmem:[%s1364 + $0x28] sm:$0xf]
      %v1371 = vld [vmem:[%s1364 + $0x30] sm:$0xf]
      %v1372 = vld [vmem:[%s1364 + $0x38] sm:$0xf]
      %s1373 = scalar_lea.vmem %s354, 80
      %v1374 = vld [vmem:[%s1373] sm:$0xf]
      %v1375 = vld [vmem:[%s1373 + $0x8] sm:$0xf]
      %v1376 = vld [vmem:[%s1373 + $0x10] sm:$0xf]
      %v1377 = vld [vmem:[%s1373 + $0x18] sm:$0xf]
      %v1378 = vld [vmem:[%s1373 + $0x20] sm:$0xf]
      %v1379 = vld [vmem:[%s1373 + $0x28] sm:$0xf]
      %v1380 = vld [vmem:[%s1373 + $0x30] sm:$0xf]
      %v1381 = vld [vmem:[%s1373 + $0x38] sm:$0xf]
      %v1390 = vunpack.c.l.b16 %v1365
      %v1391 = vunpack.c.l.b16 %v1366
      %v1392 = vunpack.c.l.b16 %v1367
      %v1393 = vunpack.c.l.b16 %v1368
      %v1394 = vunpack.c.l.b16 %v1369
      %v1395 = vunpack.c.l.b16 %v1370
      %v1396 = vunpack.c.l.b16 %v1371
      %v1397 = vunpack.c.l.b16 %v1372
      %v1398 = vpack.c.b16 %v1391, %v1390
      %v1399 = vpack.c.b16 %v1393, %v1392
      %v1400 = vpack.c.b16 %v1395, %v1394
      %v1401 = vpack.c.b16 %v1397, %v1396
      %v1414 = vunpack.c.l.b16 %v1374
      %v1415 = vunpack.c.l.b16 %v1375
      %v1416 = vunpack.c.l.b16 %v1376
      %v1417 = vunpack.c.l.b16 %v1377
      %v1418 = vunpack.c.l.b16 %v1378
      %v1419 = vunpack.c.l.b16 %v1379
      %v1420 = vunpack.c.l.b16 %v1380
      %v1421 = vunpack.c.l.b16 %v1381
      %v1422 = vpack.c.b16 %v1415, %v1414
      %v1423 = vpack.c.b16 %v1417, %v1416
      %v1424 = vpack.c.b16 %v1419, %v1418
      %v1425 = vpack.c.b16 %v1421, %v1420
      %s1430 = scalar_lea.vmem %s1, 384
      %v1431 = vld [vmem:[%s1430] sm:$0xf]
      %v1432 = vld [vmem:[%s1430 + $0x4] sm:$0xf]
      %v1433 = vld [vmem:[%s1430 + $0x8] sm:$0xf]
      %v1434 = vld [vmem:[%s1430 + $0xc] sm:$0xf]
      %v1435 = vld [vmem:[%s1430 + $0x10] sm:$0xf]
      %v1436 = vld [vmem:[%s1430 + $0x14] sm:$0xf]
      %v1437 = vld [vmem:[%s1430 + $0x18] sm:$0xf]
      %v1438 = vld [vmem:[%s1430 + $0x1c] sm:$0xf]
      %v1439 = vld [vmem:[%s1430 + $0x20] sm:$0xf]
      %v1440 = vld [vmem:[%s1430 + $0x24] sm:$0xf]
      %v1441 = vld [vmem:[%s1430 + $0x28] sm:$0xf]
      %v1442 = vld [vmem:[%s1430 + $0x2c] sm:$0xf]
      %v1443 = vld [vmem:[%s1430 + $0x30] sm:$0xf]
      %v1444 = vld [vmem:[%s1430 + $0x34] sm:$0xf]
      %v1445 = vld [vmem:[%s1430 + $0x38] sm:$0xf]
      %v1446 = vld [vmem:[%s1430 + $0x3c] sm:$0xf]
      %v1447 = vld [vmem:[%s1430 + $0x40] sm:$0xf]
      %v1448 = vld [vmem:[%s1430 + $0x44] sm:$0xf]
      %v1449 = vld [vmem:[%s1430 + $0x48] sm:$0xf]
      %v1450 = vld [vmem:[%s1430 + $0x4c] sm:$0xf]
      %v1451 = vld [vmem:[%s1430 + $0x50] sm:$0xf]
      %v1452 = vld [vmem:[%s1430 + $0x54] sm:$0xf]
      %v1453 = vld [vmem:[%s1430 + $0x58] sm:$0xf]
      %v1454 = vld [vmem:[%s1430 + $0x5c] sm:$0xf]
      %v1455 = vld [vmem:[%s1430 + $0x60] sm:$0xf]
      %v1456 = vld [vmem:[%s1430 + $0x64] sm:$0xf]
      %v1457 = vld [vmem:[%s1430 + $0x68] sm:$0xf]
      %v1458 = vld [vmem:[%s1430 + $0x6c] sm:$0xf]
      %v1459 = vld [vmem:[%s1430 + $0x70] sm:$0xf]
      %v1460 = vld [vmem:[%s1430 + $0x74] sm:$0xf]
      %v1461 = vld [vmem:[%s1430 + $0x78] sm:$0xf]
      %v1462 = vld [vmem:[%s1430 + $0x7c] sm:$0xf]
      %v1495 = vunpack.c.l.b16 %v1431
      %v1496 = vunpack.c.l.b16 %v1432
      %v1497 = vunpack.c.l.b16 %v1433
      %v1498 = vunpack.c.l.b16 %v1434
      %v1499 = vunpack.c.l.b16 %v1435
      %v1500 = vunpack.c.l.b16 %v1436
      %v1501 = vunpack.c.l.b16 %v1437
      %v1502 = vunpack.c.l.b16 %v1438
      %v1503 = vunpack.c.l.b16 %v1439
      %v1504 = vunpack.c.l.b16 %v1440
      %v1505 = vunpack.c.l.b16 %v1441
      %v1506 = vunpack.c.l.b16 %v1442
      %v1507 = vunpack.c.l.b16 %v1443
      %v1508 = vunpack.c.l.b16 %v1444
      %v1509 = vunpack.c.l.b16 %v1445
      %v1510 = vunpack.c.l.b16 %v1446
      %v1511 = vunpack.c.l.b16 %v1447
      %v1512 = vunpack.c.l.b16 %v1448
      %v1513 = vunpack.c.l.b16 %v1449
      %v1514 = vunpack.c.l.b16 %v1450
      %v1515 = vunpack.c.l.b16 %v1451
      %v1516 = vunpack.c.l.b16 %v1452
      %v1517 = vunpack.c.l.b16 %v1453
      %v1518 = vunpack.c.l.b16 %v1454
      %v1519 = vunpack.c.l.b16 %v1455
      %v1520 = vunpack.c.l.b16 %v1456
      %v1521 = vunpack.c.l.b16 %v1457
      %v1522 = vunpack.c.l.b16 %v1458
      %v1523 = vunpack.c.l.b16 %v1459
      %v1524 = vunpack.c.l.b16 %v1460
      %v1525 = vunpack.c.l.b16 %v1461
      %v1526 = vunpack.c.l.b16 %v1462
      %v1527 = vpack.c.b16 %v1496, %v1495
      %v1528 = vpack.c.b16 %v1498, %v1497
      %v1529 = vpack.c.b16 %v1500, %v1499
      %v1530 = vpack.c.b16 %v1502, %v1501
      %v1531 = vpack.c.b16 %v1504, %v1503
      %v1532 = vpack.c.b16 %v1506, %v1505
      %v1533 = vpack.c.b16 %v1508, %v1507
      %v1534 = vpack.c.b16 %v1510, %v1509
      %v1535 = vpack.c.b16 %v1512, %v1511
      %v1536 = vpack.c.b16 %v1514, %v1513
      %v1537 = vpack.c.b16 %v1516, %v1515
      %v1538 = vpack.c.b16 %v1518, %v1517
      %v1539 = vpack.c.b16 %v1520, %v1519
      %v1540 = vpack.c.b16 %v1522, %v1521
      %v1541 = vpack.c.b16 %v1524, %v1523
      %v1542 = vpack.c.b16 %v1526, %v1525
      %1559 = vmatprep.subr.bf16.mxu0 0
      %1560 = vmatpush1.bf16.msra.mxu0 %v1527
      %1561 = vmatprep.subr.bf16.mxu0 0
      %1562 = vmatpush1.bf16.msra.mxu0 %v1528
      %1563 = vmatprep.subr.bf16.mxu0 0
      %1564 = vmatpush1.bf16.msra.mxu0 %v1529
      %1565 = vmatprep.subr.bf16.mxu0 0
      %1566 = vmatpush1.bf16.msra.mxu0 %v1530
      %1567 = vmatprep.subr.bf16.mxu0 0
      %1568 = vmatpush1.bf16.msra.mxu0 %v1531
      %1569 = vmatprep.subr.bf16.mxu0 0
      %1570 = vmatpush1.bf16.msra.mxu0 %v1532
      %1571 = vmatprep.subr.bf16.mxu0 0
      %1572 = vmatpush1.bf16.msra.mxu0 %v1533
      %1573 = vmatprep.subr.bf16.mxu0 0
      %1574 = vmatpush1.bf16.msra.mxu0 %v1534
      %1575 = vmatprep.subr.bf16.mxu0 0
      %1576 = vmatpush1.bf16.msra.mxu0 %v1535
      %1577 = vmatprep.subr.bf16.mxu0 0
      %1578 = vmatpush1.bf16.msra.mxu0 %v1536
      %1579 = vmatprep.subr.bf16.mxu0 0
      %1580 = vmatpush1.bf16.msra.mxu0 %v1537
      %1581 = vmatprep.subr.bf16.mxu0 0
      %1582 = vmatpush1.bf16.msra.mxu0 %v1538
      %1583 = vmatprep.subr.bf16.mxu0 0
      %1584 = vmatpush1.bf16.msra.mxu0 %v1539
      %1585 = vmatprep.subr.bf16.mxu0 0
      %1586 = vmatpush1.bf16.msra.mxu0 %v1540
      %1587 = vmatprep.subr.bf16.mxu0 0
      %1588 = vmatpush1.bf16.msra.mxu0 %v1541
      %1589 = vmatprep.subr.bf16.mxu0 0
      %1590 = vmatpush1.bf16.msra.mxu0 %v1542
      %1591 = vmatprep.mubr.bf16.mxu0 %v1422
      %1592 = vmatmul.mubr.bf16.gmra.mrb[0].mxu0 %v1398
      %v1593 = vpop.f32.mrb[0].mxu0
      %v1594 = vadd.f32 0.0, %v1593
      %v1595 = vpop.f32.mrb[0].mxu0
      %v1596 = vpop.f32.mrb[0].mxu0
      %v1597 = vadd.f32 0.0, %v1596
      %v1598 = vpop.f32.mrb[0].mxu0
      %1599 = vmatprep.mubr.bf16.mxu0 %v1423
      %1600 = vmatmul.mubr.bf16.gmra.mrb[0].mxu0 %v1399
      %v1601 = vpop.f32.mrb[0].mxu0
      %v1602 = vadd.f32 0.0, %v1601
      %v1603 = vpop.f32.mrb[0].mxu0
      %v1604 = vpop.f32.mrb[0].mxu0
      %v1605 = vadd.f32 0.0, %v1604
      %v1606 = vpop.f32.mrb[0].mxu0
      %1607 = vmatprep.mubr.bf16.mxu0 %v1424
      %1608 = vmatmul.mubr.bf16.gmra.mrb[0].mxu0 %v1400
      %v1609 = vpop.f32.mrb[0].mxu0
      %v1610 = vadd.f32 0.0, %v1609
      %v1611 = vpop.f32.mrb[0].mxu0
      %v1612 = vpop.f32.mrb[0].mxu0
      %v1613 = vadd.f32 0.0, %v1612
      %v1614 = vpop.f32.mrb[0].mxu0
      %1615 = vmatprep.mubr.bf16.mxu0 %v1425
      %1616 = vmatmul.mubr.bf16.gmra.mrb[0].mxu0 %v1401
      %v1617 = vpop.f32.mrb[0].mxu0
      %v1618 = vadd.f32 0.0, %v1617
      %v1619 = vpop.f32.mrb[0].mxu0
      %v1620 = vpop.f32.mrb[0].mxu0
      %v1621 = vadd.f32 0.0, %v1620
      %v1622 = vpop.f32.mrb[0].mxu0
      %1623 = vdwg.mxu0
      %v1624 = vadd.f32 %v1356, %v1594
      %v1625 = vadd.f32 %v1357, %v1597
      %v1626 = vadd.f32 %v1358, %v1602
      %v1627 = vadd.f32 %v1359, %v1605
      %v1628 = vadd.f32 %v1360, %v1610
      %v1629 = vadd.f32 %v1361, %v1613
      %v1630 = vadd.f32 %v1362, %v1618
      %v1631 = vadd.f32 %v1363, %v1621
      %v1632 = vld [vmem:[%s1364] sm:$0xf]
      %v1633 = vld [vmem:[%s1364 + $0x4] sm:$0x1]
      %v1634 = vld [vmem:[%s1364 + $0x8] sm:$0xf]
      %v1635 = vld [vmem:[%s1364 + $0xc] sm:$0x1]
      %v1636 = vld [vmem:[%s1364 + $0x10] sm:$0xf]
      %v1637 = vld [vmem:[%s1364 + $0x14] sm:$0x1]
      %v1638 = vld [vmem:[%s1364 + $0x18] sm:$0xf]
      %v1639 = vld [vmem:[%s1364 + $0x1c] sm:$0x1]
      %v1640 = vld [vmem:[%s1364 + $0x20] sm:$0xf]
      %v1641 = vld [vmem:[%s1364 + $0x24] sm:$0x1]
      %v1642 = vld [vmem:[%s1364 + $0x28] sm:$0xf]
      %v1643 = vld [vmem:[%s1364 + $0x2c] sm:$0x1]
      %v1644 = vld [vmem:[%s1364 + $0x30] sm:$0xf]
      %v1645 = vld [vmem:[%s1364 + $0x34] sm:$0x1]
      %v1646 = vld [vmem:[%s1364 + $0x38] sm:$0xf]
      %v1647 = vld [vmem:[%s1364 + $0x3c] sm:$0x1]
      %v1649 = vshrl.u32 %v1632, 16
      %v1651 = vrot.slane %v1649, 4
      %v1652 = vshll.u32 %v1632, 16
      %v1654 = vrot.slane %v1652, 5
      %v1655 = vor.u32 %v1651, %v1654
      %v1656 = vrot.slane %v1655, 4
      %v1658 = vshll.u32 %v1633, 16
      %v1660 = vrot.slane %v1658, 5
      %v1661 = vsel %vm468, %v1656, %v1660
      %v1663 = vshrl.u32 %v1634, 16
      %v1665 = vrot.slane %v1663, 4
      %v1666 = vshll.u32 %v1634, 16
      %v1668 = vrot.slane %v1666, 5
      %v1669 = vor.u32 %v1665, %v1668
      %v1670 = vrot.slane %v1669, 4
      %v1672 = vshll.u32 %v1635, 16
      %v1674 = vrot.slane %v1672, 5
      %v1675 = vsel %vm468, %v1670, %v1674
      %v1677 = vshrl.u32 %v1636, 16
      %v1679 = vrot.slane %v1677, 4
      %v1680 = vshll.u32 %v1636, 16
      %v1682 = vrot.slane %v1680, 5
      %v1683 = vor.u32 %v1679, %v1682
      %v1684 = vrot.slane %v1683, 4
      %v1686 = vshll.u32 %v1637, 16
      %v1688 = vrot.slane %v1686, 5
      %v1689 = vsel %vm468, %v1684, %v1688
      %v1691 = vshrl.u32 %v1638, 16
      %v1693 = vrot.slane %v1691, 4
      %v1694 = vshll.u32 %v1638, 16
      %v1696 = vrot.slane %v1694, 5
      %v1697 = vor.u32 %v1693, %v1696
      %v1698 = vrot.slane %v1697, 4
      %v1700 = vshll.u32 %v1639, 16
      %v1702 = vrot.slane %v1700, 5
      %v1703 = vsel %vm468, %v1698, %v1702
      %v1705 = vshrl.u32 %v1640, 16
      %v1707 = vrot.slane %v1705, 4
      %v1708 = vshll.u32 %v1640, 16
      %v1710 = vrot.slane %v1708, 5
      %v1711 = vor.u32 %v1707, %v1710
      %v1712 = vrot.slane %v1711, 4
      %v1714 = vshll.u32 %v1641, 16
      %v1716 = vrot.slane %v1714, 5
      %v1717 = vsel %vm468, %v1712, %v1716
      %v1719 = vshrl.u32 %v1642, 16
      %v1721 = vrot.slane %v1719, 4
      %v1722 = vshll.u32 %v1642, 16
      %v1724 = vrot.slane %v1722, 5
      %v1725 = vor.u32 %v1721, %v1724
      %v1726 = vrot.slane %v1725, 4
      %v1728 = vshll.u32 %v1643, 16
      %v1730 = vrot.slane %v1728, 5
      %v1731 = vsel %vm468, %v1726, %v1730
      %v1733 = vshrl.u32 %v1644, 16
      %v1735 = vrot.slane %v1733, 4
      %v1736 = vshll.u32 %v1644, 16
      %v1738 = vrot.slane %v1736, 5
      %v1739 = vor.u32 %v1735, %v1738
      %v1740 = vrot.slane %v1739, 4
      %v1742 = vshll.u32 %v1645, 16
      %v1744 = vrot.slane %v1742, 5
      %v1745 = vsel %vm468, %v1740, %v1744
      %v1747 = vshrl.u32 %v1646, 16
      %v1749 = vrot.slane %v1747, 4
      %v1750 = vshll.u32 %v1646, 16
      %v1752 = vrot.slane %v1750, 5
      %v1753 = vor.u32 %v1749, %v1752
      %v1754 = vrot.slane %v1753, 4
      %v1756 = vshll.u32 %v1647, 16
      %v1758 = vrot.slane %v1756, 5
      %v1759 = vsel %vm468, %v1754, %v1758
      %s1760 = scalar_lea.vmem %s1, 512
      %v1761 = vld [vmem:[%s1760] sm:$0xf]
      %v1762 = vld [vmem:[%s1760 + $0x4] sm:$0xf]
      %v1763 = vld [vmem:[%s1760 + $0x8] sm:$0xf]
      %v1764 = vld [vmem:[%s1760 + $0xc] sm:$0xf]
      %v1765 = vld [vmem:[%s1760 + $0x10] sm:$0xf]
      %v1766 = vld [vmem:[%s1760 + $0x14] sm:$0xf]
      %v1767 = vld [vmem:[%s1760 + $0x18] sm:$0xf]
      %v1768 = vld [vmem:[%s1760 + $0x1c] sm:$0xf]
      %v1769 = vld [vmem:[%s1760 + $0x20] sm:$0xf]
      %v1770 = vld [vmem:[%s1760 + $0x24] sm:$0xf]
      %v1771 = vld [vmem:[%s1760 + $0x28] sm:$0xf]
      %v1772 = vld [vmem:[%s1760 + $0x2c] sm:$0xf]
      %v1773 = vld [vmem:[%s1760 + $0x30] sm:$0xf]
      %v1774 = vld [vmem:[%s1760 + $0x34] sm:$0xf]
      %v1775 = vld [vmem:[%s1760 + $0x38] sm:$0xf]
      %v1776 = vld [vmem:[%s1760 + $0x3c] sm:$0xf]
      %v1777 = vunpack.c.l.b16 %v1661
      %v1778 = vunpack.c.l.b16 %v1675
      %v1779 = vunpack.c.l.b16 %v1689
      %v1780 = vunpack.c.l.b16 %v1703
      %v1781 = vunpack.c.l.b16 %v1717
      %v1782 = vunpack.c.l.b16 %v1731
      %v1783 = vunpack.c.l.b16 %v1745
      %v1784 = vunpack.c.l.b16 %v1759
      %v1785 = vpack.c.b16 %v1778, %v1777
      %v1786 = vpack.c.b16 %v1780, %v1779
      %v1787 = vpack.c.b16 %v1782, %v1781
      %v1788 = vpack.c.b16 %v1784, %v1783
      %v1809 = vunpack.c.l.b16 %v1761
      %v1810 = vunpack.c.l.b16 %v1762
      %v1811 = vunpack.c.l.b16 %v1763
      %v1812 = vunpack.c.l.b16 %v1764
      %v1813 = vunpack.c.l.b16 %v1765
      %v1814 = vunpack.c.l.b16 %v1766
      %v1815 = vunpack.c.l.b16 %v1767
      %v1816 = vunpack.c.l.b16 %v1768
      %v1817 = vunpack.c.l.b16 %v1769
      %v1818 = vunpack.c.l.b16 %v1770
      %v1819 = vunpack.c.l.b16 %v1771
      %v1820 = vunpack.c.l.b16 %v1772
      %v1821 = vunpack.c.l.b16 %v1773
      %v1822 = vunpack.c.l.b16 %v1774
      %v1823 = vunpack.c.l.b16 %v1775
      %v1824 = vunpack.c.l.b16 %v1776
      %v1825 = vpack.c.b16 %v1810, %v1809
      %v1826 = vpack.c.b16 %v1812, %v1811
      %v1827 = vpack.c.b16 %v1814, %v1813
      %v1828 = vpack.c.b16 %v1816, %v1815
      %v1829 = vpack.c.b16 %v1818, %v1817
      %v1830 = vpack.c.b16 %v1820, %v1819
      %v1831 = vpack.c.b16 %v1822, %v1821
      %v1832 = vpack.c.b16 %v1824, %v1823
      %1841 = vmatprep.subr.bf16.mxu0 0
      %1842 = vmatpush1.bf16.msra.mxu0 %v1825
      %1843 = vmatprep.subr.bf16.mxu0 0
      %1844 = vmatpush1.bf16.msra.mxu0 %v1826
      %1845 = vmatprep.subr.bf16.mxu0 0
      %1846 = vmatpush1.bf16.msra.mxu0 %v1827
      %1847 = vmatprep.subr.bf16.mxu0 0
      %1848 = vmatpush1.bf16.msra.mxu0 %v1828
      %1849 = vmatprep.subr.bf16.mxu0 0
      %1850 = vmatpush1.bf16.msra.mxu0 %v1829
      %1851 = vmatprep.subr.bf16.mxu0 0
      %1852 = vmatpush1.bf16.msra.mxu0 %v1830
      %1853 = vmatprep.subr.bf16.mxu0 0
      %1854 = vmatpush1.bf16.msra.mxu0 %v1831
      %1855 = vmatprep.subr.bf16.mxu0 0
      %1856 = vmatpush1.bf16.msra.mxu0 %v1832
      %1857 = vmatprep.subr.bf16.mxu0 0
      %1858 = vmatpush1.bf16.msra.mxu0 0
      %1859 = vmatprep.subr.bf16.mxu0 0
      %1860 = vmatpush1.bf16.msra.mxu0 0
      %1861 = vmatprep.subr.bf16.mxu0 0
      %1862 = vmatpush1.bf16.msra.mxu0 0
      %1863 = vmatprep.subr.bf16.mxu0 0
      %1864 = vmatpush1.bf16.msra.mxu0 0
      %1865 = vmatprep.subr.bf16.mxu0 0
      %1866 = vmatpush1.bf16.msra.mxu0 0
      %1867 = vmatprep.subr.bf16.mxu0 0
      %1868 = vmatpush1.bf16.msra.mxu0 0
      %1869 = vmatprep.subr.bf16.mxu0 0
      %1870 = vmatpush1.bf16.msra.mxu0 0
      %1871 = vmatprep.subr.bf16.mxu0 0
      %1872 = vmatpush1.bf16.msra.mxu0 0
      %1873 = vmatprep.mubr.bf16.mxu0 0
      %1874 = vmatmul.mubr.bf16.gmra.mrb[0].mxu0 %v1785
      %v1875 = vpop.f32.mrb[0].mxu0
      %v1876 = vadd.f32 0.0, %v1875
      %v1877 = vpop.f32.mrb[0].mxu0
      %v1878 = vpop.f32.mrb[0].mxu0
      %v1879 = vadd.f32 0.0, %v1878
      %v1880 = vpop.f32.mrb[0].mxu0
      %1881 = vmatprep.mubr.bf16.mxu0 0
      %1882 = vmatmul.mubr.bf16.gmra.mrb[0].mxu0 %v1786
      %v1883 = vpop.f32.mrb[0].mxu0
      %v1884 = vadd.f32 0.0, %v1883
      %v1885 = vpop.f32.mrb[0].mxu0
      %v1886 = vpop.f32.mrb[0].mxu0
      %v1887 = vadd.f32 0.0, %v1886
      %v1888 = vpop.f32.mrb[0].mxu0
      %1889 = vmatprep.mubr.bf16.mxu0 0
      %1890 = vmatmul.mubr.bf16.gmra.mrb[0].mxu0 %v1787
      %v1891 = vpop.f32.mrb[0].mxu0
      %v1892 = vadd.f32 0.0, %v1891
      %v1893 = vpop.f32.mrb[0].mxu0
      %v1894 = vpop.f32.mrb[0].mxu0
      %v1895 = vadd.f32 0.0, %v1894
      %v1896 = vpop.f32.mrb[0].mxu0
      %1897 = vmatprep.mubr.bf16.mxu0 0
      %1898 = vmatmul.mubr.bf16.gmra.mrb[0].mxu0 %v1788
      %v1899 = vpop.f32.mrb[0].mxu0
      %v1900 = vadd.f32 0.0, %v1899
      %v1901 = vpop.f32.mrb[0].mxu0
      %v1902 = vpop.f32.mrb[0].mxu0
      %v1903 = vadd.f32 0.0, %v1902
      %v1904 = vpop.f32.mrb[0].mxu0
      %1905 = vdwg.mxu0
      %v1906 = vadd.f32 %v1624, %v1876
      %v1907 = vadd.f32 %v1625, %v1879
      %v1908 = vadd.f32 %v1626, %v1884
      %v1909 = vadd.f32 %v1627, %v1887
      %v1910 = vadd.f32 %v1628, %v1892
      %v1911 = vadd.f32 %v1629, %v1895
      %v1912 = vadd.f32 %v1630, %v1900
      %v1913 = vadd.f32 %v1631, %v1903
      %v1914 = vld [vmem:[%s2] sm:$0x1]
      %v1916 = vlaneseq
      %v1917 = vshrl.u32 %v1916, 7
      %v1918 = vsub.s32 0, %v1917
      %v1919 = vrot.slane %v1914, %v1918
      %v1921 = vmul.f32 %v1906, %v1919
      %v1922 = vmul.f32 %v1907, %v1919
      %v1923 = vmul.f32 %v1908, %v1919
      %v1924 = vmul.f32 %v1909, %v1919
      %v1925 = vmul.f32 %v1910, %v1919
      %v1926 = vmul.f32 %v1911, %v1919
      %v1927 = vmul.f32 %v1912, %v1919
      %v1928 = vmul.f32 %v1913, %v1919
      %v1929 = vld [vmem:[%s3] sm:$0x1]
      %v1931 = vlaneseq
      %v1932 = vshrl.u32 %v1931, 7
      %v1933 = vsub.s32 0, %v1932
      %v1934 = vrot.slane %v1929, %v1933
      %v1936 = vadd.f32 %v1921, %v1934
      %v1937 = vadd.f32 %v1922, %v1934
      %v1938 = vadd.f32 %v1923, %v1934
      %v1939 = vadd.f32 %v1924, %v1934
      %v1940 = vadd.f32 %v1925, %v1934
      %v1941 = vadd.f32 %v1926, %v1934
      %v1942 = vadd.f32 %v1927, %v1934
      %v1943 = vadd.f32 %v1928, %v1934
      %v1944 = vmax.f32 %v1936, 0.0
      %v1945 = vmax.f32 %v1937, 0.0
      %v1946 = vmax.f32 %v1938, 0.0
      %v1947 = vmax.f32 %v1939, 0.0
      %v1948 = vmax.f32 %v1940, 0.0
      %v1949 = vmax.f32 %v1941, 0.0
      %v1950 = vmax.f32 %v1942, 0.0
      %v1951 = vmax.f32 %v1943, 0.0
      %1952 = vst [vmem:[#allocation2] sm:$0xf] 0
      %1953 = vst [vmem:[#allocation2 + $0x4] sm:$0x3] 0
      %s1954 = scalar_lea.vmem [#allocation2], 72
      %1955 = vst [vmem:[%s1954] sm:$0xf] 0
      %1956 = vst [vmem:[%s1954 + $0x4] sm:$0x3] 0
      %s1957 = scalar_lea.vmem [#allocation2], 8
      %1958 = vst [vmem:[%s1957] sm:$0x1] 0
      %1959 = vst [vmem:[%s1957 + $0x8] sm:$0x1] 0
      %1960 = vst [vmem:[%s1957 + $0x10] sm:$0x1] 0
      %1961 = vst [vmem:[%s1957 + $0x18] sm:$0x1] 0
      %1962 = vst [vmem:[%s1957 + $0x20] sm:$0x1] 0
      %1963 = vst [vmem:[%s1957 + $0x28] sm:$0x1] 0
      %1964 = vst [vmem:[%s1957 + $0x30] sm:$0x1] 0
      %1965 = vst [vmem:[%s1957 + $0x38] sm:$0x1] 0
      %1966 = vst [vmem:[%s1957 + $0x4] sm:$0x2] 0
      %1967 = vst [vmem:[%s1957 + $0xc] sm:$0x2] 0
      %1968 = vst [vmem:[%s1957 + $0x14] sm:$0x2] 0
      %1969 = vst [vmem:[%s1957 + $0x1c] sm:$0x2] 0
      %1970 = vst [vmem:[%s1957 + $0x24] sm:$0x2] 0
      %1971 = vst [vmem:[%s1957 + $0x2c] sm:$0x2] 0
      %1972 = vst [vmem:[%s1957 + $0x34] sm:$0x2] 0
      %1973 = vst [vmem:[%s1957 + $0x3c] sm:$0x2] 0
      %v1974 = vpack.c.bf16 %v1944, %v1944
      %v1975 = vpack.c.bf16 %v1945, %v1945
      %v1976 = vpack.c.bf16 %v1946, %v1946
      %v1977 = vpack.c.bf16 %v1947, %v1947
      %v1978 = vpack.c.bf16 %v1948, %v1948
      %v1979 = vpack.c.bf16 %v1949, %v1949
      %v1980 = vpack.c.bf16 %v1950, %v1950
      %v1981 = vpack.c.bf16 %v1951, %v1951
      %v1990 = vunpack.c.l.b16 %v1974
      %v1991 = vunpack.c.l.b16 %v1975
      %v1992 = vunpack.c.l.b16 %v1976
      %v1993 = vunpack.c.l.b16 %v1977
      %v1994 = vunpack.c.l.b16 %v1978
      %v1995 = vunpack.c.l.b16 %v1979
      %v1996 = vunpack.c.l.b16 %v1980
      %v1997 = vunpack.c.l.b16 %v1981
      %v1998 = vpack.c.b16 %v1990, %v1990
      %v1999 = vpack.c.b16 %v1991, %v1991
      %v2000 = vpack.c.b16 %v1992, %v1992
      %v2001 = vpack.c.b16 %v1993, %v1993
      %v2002 = vpack.c.b16 %v1994, %v1994
      %v2003 = vpack.c.b16 %v1995, %v1995
      %v2004 = vpack.c.b16 %v1996, %v1996
      %v2005 = vpack.c.b16 %v1997, %v1997
      %v2006 = vrot.slane %v1998, 7
      %v2007 = vrot.slane %v2006, 4
      %v2008 = vrot.slane %v1999, 7
      %v2009 = vrot.slane %v2008, 4
      %v2010 = vrot.slane %v2000, 7
      %v2011 = vrot.slane %v2010, 4
      %v2012 = vrot.slane %v2001, 7
      %v2013 = vrot.slane %v2012, 4
      %v2014 = vrot.slane %v2002, 7
      %v2015 = vrot.slane %v2014, 4
      %v2016 = vrot.slane %v2003, 7
      %v2017 = vrot.slane %v2016, 4
      %v2018 = vrot.slane %v2004, 7
      %v2019 = vrot.slane %v2018, 4
      %v2020 = vrot.slane %v2005, 7
      %v2021 = vrot.slane %v2020, 4
      %2038 = vst [vmem:[%s1957] sm:$0xe] %v2006
      %2039 = vst [vmem:[%s1957 + $0x4] sm:$0x1] %v2007
      %2040 = vst [vmem:[%s1957 + $0x8] sm:$0xe] %v2008
      %2041 = vst [vmem:[%s1957 + $0xc] sm:$0x1] %v2009
      %2042 = vst [vmem:[%s1957 + $0x10] sm:$0xe] %v2010
      %2043 = vst [vmem:[%s1957 + $0x14] sm:$0x1] %v2011
      %2044 = vst [vmem:[%s1957 + $0x18] sm:$0xe] %v2012
      %2045 = vst [vmem:[%s1957 + $0x1c] sm:$0x1] %v2013
      %2046 = vst [vmem:[%s1957 + $0x20] sm:$0xe] %v2014
      %2047 = vst [vmem:[%s1957 + $0x24] sm:$0x1] %v2015
      %2048 = vst [vmem:[%s1957 + $0x28] sm:$0xe] %v2016
      %2049 = vst [vmem:[%s1957 + $0x2c] sm:$0x1] %v2017
      %2050 = vst [vmem:[%s1957 + $0x30] sm:$0xe] %v2018
      %2051 = vst [vmem:[%s1957 + $0x34] sm:$0x1] %v2019
      %2052 = vst [vmem:[%s1957 + $0x38] sm:$0xe] %v2020
      %2053 = vst [vmem:[%s1957 + $0x3c] sm:$0x1] %v2021
      %v2054 = vld [vmem:[#allocation2] sm:$0xf]
      %v2055 = vld [vmem:[#allocation2 + $0x4] sm:$0x1]
      %v2056 = vld [vmem:[#allocation2 + $0x8] sm:$0xf]
      %v2057 = vld [vmem:[#allocation2 + $0xc] sm:$0x1]
      %v2058 = vld [vmem:[#allocation2 + $0x10] sm:$0xf]
      %v2059 = vld [vmem:[#allocation2 + $0x14] sm:$0x1]
      %v2060 = vld [vmem:[#allocation2 + $0x18] sm:$0xf]
      %v2061 = vld [vmem:[#allocation2 + $0x1c] sm:$0x1]
      %v2062 = vld [vmem:[#allocation2 + $0x20] sm:$0xf]
      %v2063 = vld [vmem:[#allocation2 + $0x24] sm:$0x1]
      %v2064 = vld [vmem:[#allocation2 + $0x28] sm:$0xf]
      %v2065 = vld [vmem:[#allocation2 + $0x2c] sm:$0x1]
      %v2066 = vld [vmem:[#allocation2 + $0x30] sm:$0xf]
      %v2067 = vld [vmem:[#allocation2 + $0x34] sm:$0x1]
      %v2068 = vld [vmem:[#allocation2 + $0x38] sm:$0xf]
      %v2069 = vld [vmem:[#allocation2 + $0x3c] sm:$0x1]
      %v2071 = vshrl.u32 %v2054, 16
      %v2073 = vrot.slane %v2071, 4
      %v2074 = vshll.u32 %v2054, 16
      %v2076 = vrot.slane %v2074, 5
      %v2077 = vor.u32 %v2073, %v2076
      %v2078 = vrot.slane %v2077, 4
      %v2080 = vshll.u32 %v2055, 16
      %v2082 = vrot.slane %v2080, 5
      %v2083 = vsel %vm468, %v2078, %v2082
      %v2085 = vshrl.u32 %v2056, 16
      %v2087 = vrot.slane %v2085, 4
      %v2088 = vshll.u32 %v2056, 16
      %v2090 = vrot.slane %v2088, 5
      %v2091 = vor.u32 %v2087, %v2090
      %v2092 = vrot.slane %v2091, 4
      %v2094 = vshll.u32 %v2057, 16
      %v2096 = vrot.slane %v2094, 5
      %v2097 = vsel %vm468, %v2092, %v2096
      %v2099 = vshrl.u32 %v2058, 16
      %v2101 = vrot.slane %v2099, 4
      %v2102 = vshll.u32 %v2058, 16
      %v2104 = vrot.slane %v2102, 5
      %v2105 = vor.u32 %v2101, %v2104
      %v2106 = vrot.slane %v2105, 4
      %v2108 = vshll.u32 %v2059, 16
      %v2110 = vrot.slane %v2108, 5
      %v2111 = vsel %vm468, %v2106, %v2110
      %v2113 = vshrl.u32 %v2060, 16
      %v2115 = vrot.slane %v2113, 4
      %v2116 = vshll.u32 %v2060, 16
      %v2118 = vrot.slane %v2116, 5
      %v2119 = vor.u32 %v2115, %v2118
      %v2120 = vrot.slane %v2119, 4
      %v2122 = vshll.u32 %v2061, 16
      %v2124 = vrot.slane %v2122, 5
      %v2125 = vsel %vm468, %v2120, %v2124
      %v2127 = vshrl.u32 %v2062, 16
      %v2129 = vrot.slane %v2127, 4
      %v2130 = vshll.u32 %v2062, 16
      %v2132 = vrot.slane %v2130, 5
      %v2133 = vor.u32 %v2129, %v2132
      %v2134 = vrot.slane %v2133, 4
      %v2136 = vshll.u32 %v2063, 16
      %v2138 = vrot.slane %v2136, 5
      %v2139 = vsel %vm468, %v2134, %v2138
      %v2141 = vshrl.u32 %v2064, 16
      %v2143 = vrot.slane %v2141, 4
      %v2144 = vshll.u32 %v2064, 16
      %v2146 = vrot.slane %v2144, 5
      %v2147 = vor.u32 %v2143, %v2146
      %v2148 = vrot.slane %v2147, 4
      %v2150 = vshll.u32 %v2065, 16
      %v2152 = vrot.slane %v2150, 5
      %v2153 = vsel %vm468, %v2148, %v2152
      %v2155 = vshrl.u32 %v2066, 16
      %v2157 = vrot.slane %v2155, 4
      %v2158 = vshll.u32 %v2066, 16
      %v2160 = vrot.slane %v2158, 5
      %v2161 = vor.u32 %v2157, %v2160
      %v2162 = vrot.slane %v2161, 4
      %v2164 = vshll.u32 %v2067, 16
      %v2166 = vrot.slane %v2164, 5
      %v2167 = vsel %vm468, %v2162, %v2166
      %v2169 = vshrl.u32 %v2068, 16
      %v2171 = vrot.slane %v2169, 4
      %v2172 = vshll.u32 %v2068, 16
      %v2174 = vrot.slane %v2172, 5
      %v2175 = vor.u32 %v2171, %v2174
      %v2176 = vrot.slane %v2175, 4
      %v2178 = vshll.u32 %v2069, 16
      %v2180 = vrot.slane %v2178, 5
      %v2181 = vsel %vm468, %v2176, %v2180
      %v2182 = vld [vmem:[#allocation2] sm:$0xe]
      %v2183 = vld [vmem:[#allocation2 + $0x8] sm:$0xe]
      %v2184 = vld [vmem:[#allocation2 + $0x10] sm:$0xe]
      %v2185 = vld [vmem:[#allocation2 + $0x18] sm:$0xe]
      %v2186 = vld [vmem:[#allocation2 + $0x20] sm:$0xe]
      %v2187 = vld [vmem:[#allocation2 + $0x28] sm:$0xe]
      %v2188 = vld [vmem:[#allocation2 + $0x30] sm:$0xe]
      %v2189 = vld [vmem:[#allocation2 + $0x38] sm:$0xe]
      %vm2206 = vcmask 1042432
      %vm2207 = vcmask 1046532
      %vm2208 = vmor %vm2206, %vm2207
      %v2209 = vrot.slane %v2182, 5
      %v2210 = vrot.slane %v2209, 4
      %v2211 = vrot.slane %v2055, 5
      %v2212 = vsel %vm2208, %v2210, %v2211
      %v2213 = vrot.slane %v2183, 5
      %v2214 = vrot.slane %v2213, 4
      %v2215 = vrot.slane %v2057, 5
      %v2216 = vsel %vm2208, %v2214, %v2215
      %v2217 = vrot.slane %v2184, 5
      %v2218 = vrot.slane %v2217, 4
      %v2219 = vrot.slane %v2059, 5
      %v2220 = vsel %vm2208, %v2218, %v2219
      %v2221 = vrot.slane %v2185, 5
      %v2222 = vrot.slane %v2221, 4
      %v2223 = vrot.slane %v2061, 5
      %v2224 = vsel %vm2208, %v2222, %v2223
      %v2225 = vrot.slane %v2186, 5
      %v2226 = vrot.slane %v2225, 4
      %v2227 = vrot.slane %v2063, 5
      %v2228 = vsel %vm2208, %v2226, %v2227
      %v2229 = vrot.slane %v2187, 5
      %v2230 = vrot.slane %v2229, 4
      %v2231 = vrot.slane %v2065, 5
      %v2232 = vsel %vm2208, %v2230, %v2231
      %v2233 = vrot.slane %v2188, 5
      %v2234 = vrot.slane %v2233, 4
      %v2235 = vrot.slane %v2067, 5
      %v2236 = vsel %vm2208, %v2234, %v2235
      %v2237 = vrot.slane %v2189, 5
      %v2238 = vrot.slane %v2237, 4
      %v2239 = vrot.slane %v2069, 5
      %v2240 = vsel %vm2208, %v2238, %v2239
      %v2241 = vunpack.c.l.b16 %v2083
      %v2242 = vunpack.c.l.b16 %v2097
      %v2243 = vunpack.c.l.b16 %v2111
      %v2244 = vunpack.c.l.b16 %v2125
      %v2245 = vunpack.c.l.b16 %v2139
      %v2246 = vunpack.c.l.b16 %v2153
      %v2247 = vunpack.c.l.b16 %v2167
      %v2248 = vunpack.c.l.b16 %v2181
      %v2249 = vpack.c.b16 %v2242, %v2241
      %v2250 = vpack.c.b16 %v2244, %v2243
      %v2251 = vpack.c.b16 %v2246, %v2245
      %v2252 = vpack.c.b16 %v2248, %v2247
      %v2257 = vunpack.c.l.b16 %v2212
      %v2258 = vunpack.c.l.b16 %v2216
      %v2259 = vunpack.c.l.b16 %v2220
      %v2260 = vunpack.c.l.b16 %v2224
      %v2261 = vunpack.c.l.b16 %v2228
      %v2262 = vunpack.c.l.b16 %v2232
      %v2263 = vunpack.c.l.b16 %v2236
      %v2264 = vunpack.c.l.b16 %v2240
      %v2265 = vpack.c.b16 %v2258, %v2257
      %v2266 = vpack.c.b16 %v2260, %v2259
      %v2267 = vpack.c.b16 %v2262, %v2261
      %v2268 = vpack.c.b16 %v2264, %v2263
      %v2273 = vld [vmem:[%s4] sm:$0xf]
      %v2274 = vld [vmem:[%s4 + $0x4] sm:$0xf]
      %v2275 = vld [vmem:[%s4 + $0x8] sm:$0xf]
      %v2276 = vld [vmem:[%s4 + $0xc] sm:$0xf]
      %v2277 = vld [vmem:[%s4 + $0x10] sm:$0xf]
      %v2278 = vld [vmem:[%s4 + $0x14] sm:$0xf]
      %v2279 = vld [vmem:[%s4 + $0x18] sm:$0xf]
      %v2280 = vld [vmem:[%s4 + $0x1c] sm:$0xf]
      %v2281 = vld [vmem:[%s4 + $0x20] sm:$0xf]
      %v2282 = vld [vmem:[%s4 + $0x24] sm:$0xf]
      %v2283 = vld [vmem:[%s4 + $0x28] sm:$0xf]
      %v2284 = vld [vmem:[%s4 + $0x2c] sm:$0xf]
      %v2285 = vld [vmem:[%s4 + $0x30] sm:$0xf]
      %v2286 = vld [vmem:[%s4 + $0x34] sm:$0xf]
      %v2287 = vld [vmem:[%s4 + $0x38] sm:$0xf]
      %v2288 = vld [vmem:[%s4 + $0x3c] sm:$0xf]
      %v2289 = vld [vmem:[%s4 + $0x40] sm:$0xf]
      %v2290 = vld [vmem:[%s4 + $0x44] sm:$0xf]
      %v2291 = vld [vmem:[%s4 + $0x48] sm:$0xf]
      %v2292 = vld [vmem:[%s4 + $0x4c] sm:$0xf]
      %v2293 = vld [vmem:[%s4 + $0x50] sm:$0xf]
      %v2294 = vld [vmem:[%s4 + $0x54] sm:$0xf]
      %v2295 = vld [vmem:[%s4 + $0x58] sm:$0xf]
      %v2296 = vld [vmem:[%s4 + $0x5c] sm:$0xf]
      %v2297 = vld [vmem:[%s4 + $0x60] sm:$0xf]
      %v2298 = vld [vmem:[%s4 + $0x64] sm:$0xf]
      %v2299 = vld [vmem:[%s4 + $0x68] sm:$0xf]
      %v2300 = vld [vmem:[%s4 + $0x6c] sm:$0xf]
      %v2301 = vld [vmem:[%s4 + $0x70] sm:$0xf]
      %v2302 = vld [vmem:[%s4 + $0x74] sm:$0xf]
      %v2303 = vld [vmem:[%s4 + $0x78] sm:$0xf]
      %v2304 = vld [vmem:[%s4 + $0x7c] sm:$0xf]
      %v2305 = vld [vmem:[#allocation2 + $0x4] sm:$0x3]
      %v2306 = vld [vmem:[#allocation2 + $0xc] sm:$0x3]
      %v2307 = vld [vmem:[#allocation2 + $0x14] sm:$0x3]
      %v2308 = vld [vmem:[#allocation2 + $0x1c] sm:$0x3]
      %v2309 = vld [vmem:[#allocation2 + $0x24] sm:$0x3]
      %v2310 = vld [vmem:[#allocation2 + $0x2c] sm:$0x3]
      %v2311 = vld [vmem:[#allocation2 + $0x34] sm:$0x3]
      %v2312 = vld [vmem:[#allocation2 + $0x3c] sm:$0x3]
      %vm2313 = vsmask.f32 2304
      %vm2314 = vsmask.f32 6416
      %vm2315 = vmor %vm2313, %vm2314
      %v2317 = vshrl.u32 %v2182, 16
      %v2319 = vrot.slane %v2317, 5
      %v2320 = vshll.u32 %v2182, 16
      %v2322 = vrot.slane %v2320, 6
      %v2323 = vor.u32 %v2319, %v2322
      %v2324 = vrot.slane %v2323, 4
      %v2326 = vshrl.u32 %v2305, 16
      %v2328 = vrot.slane %v2326, 5
      %v2329 = vshll.u32 %v2305, 16
      %v2331 = vrot.slane %v2329, 6
      %v2332 = vor.u32 %v2328, %v2331
      %v2333 = vsel %vm2315, %v2324, %v2332
      %v2335 = vshrl.u32 %v2183, 16
      %v2337 = vrot.slane %v2335, 5
      %v2338 = vshll.u32 %v2183, 16
      %v2340 = vrot.slane %v2338, 6
      %v2341 = vor.u32 %v2337, %v2340
      %v2342 = vrot.slane %v2341, 4
      %v2344 = vshrl.u32 %v2306, 16
      %v2346 = vrot.slane %v2344, 5
      %v2347 = vshll.u32 %v2306, 16
      %v2349 = vrot.slane %v2347, 6
      %v2350 = vor.u32 %v2346, %v2349
      %v2351 = vsel %vm2315, %v2342, %v2350
      %v2353 = vshrl.u32 %v2184, 16
      %v2355 = vrot.slane %v2353, 5
      %v2356 = vshll.u32 %v2184, 16
      %v2358 = vrot.slane %v2356, 6
      %v2359 = vor.u32 %v2355, %v2358
      %v2360 = vrot.slane %v2359, 4
      %v2362 = vshrl.u32 %v2307, 16
      %v2364 = vrot.slane %v2362, 5
      %v2365 = vshll.u32 %v2307, 16
      %v2367 = vrot.slane %v2365, 6
      %v2368 = vor.u32 %v2364, %v2367
      %v2369 = vsel %vm2315, %v2360, %v2368
      %v2371 = vshrl.u32 %v2185, 16
      %v2373 = vrot.slane %v2371, 5
      %v2374 = vshll.u32 %v2185, 16
      %v2376 = vrot.slane %v2374, 6
      %v2377 = vor.u32 %v2373, %v2376
      %v2378 = vrot.slane %v2377, 4
      %v2380 = vshrl.u32 %v2308, 16
      %v2382 = vrot.slane %v2380, 5
      %v2383 = vshll.u32 %v2308, 16
      %v2385 = vrot.slane %v2383, 6
      %v2386 = vor.u32 %v2382, %v2385
      %v2387 = vsel %vm2315, %v2378, %v2386
      %v2389 = vshrl.u32 %v2186, 16
      %v2391 = vrot.slane %v2389, 5
      %v2392 = vshll.u32 %v2186, 16
      %v2394 = vrot.slane %v2392, 6
      %v2395 = vor.u32 %v2391, %v2394
      %v2396 = vrot.slane %v2395, 4
      %v2398 = vshrl.u32 %v2309, 16
      %v2400 = vrot.slane %v2398, 5
      %v2401 = vshll.u32 %v2309, 16
      %v2403 = vrot.slane %v2401, 6
      %v2404 = vor.u32 %v2400, %v2403
      %v2405 = vsel %vm2315, %v2396, %v2404
      %v2407 = vshrl.u32 %v2187, 16
      %v2409 = vrot.slane %v2407, 5
      %v2410 = vshll.u32 %v2187, 16
      %v2412 = vrot.slane %v2410, 6
      %v2413 = vor.u32 %v2409, %v2412
      %v2414 = vrot.slane %v2413, 4
      %v2416 = vshrl.u32 %v2310, 16
      %v2418 = vrot.slane %v2416, 5
      %v2419 = vshll.u32 %v2310, 16
      %v2421 = vrot.slane %v2419, 6
      %v2422 = vor.u32 %v2418, %v2421
      %v2423 = vsel %vm2315, %v2414, %v2422
      %v2425 = vshrl.u32 %v2188, 16
      %v2427 = vrot.slane %v2425, 5
      %v2428 = vshll.u32 %v2188, 16
      %v2430 = vrot.slane %v2428, 6
      %v2431 = vor.u32 %v2427, %v2430
      %v2432 = vrot.slane %v2431, 4
      %v2434 = vshrl.u32 %v2311, 16
      %v2436 = vrot.slane %v2434, 5
      %v2437 = vshll.u32 %v2311, 16
      %v2439 = vrot.slane %v2437, 6
      %v2440 = vor.u32 %v2436, %v2439
      %v2441 = vsel %vm2315, %v2432, %v2440
      %v2443 = vshrl.u32 %v2189, 16
      %v2445 = vrot.slane %v2443, 5
      %v2446 = vshll.u32 %v2189, 16
      %v2448 = vrot.slane %v2446, 6
      %v2449 = vor.u32 %v2445, %v2448
      %v2450 = vrot.slane %v2449, 4
      %v2452 = vshrl.u32 %v2312, 16
      %v2454 = vrot.slane %v2452, 5
      %v2455 = vshll.u32 %v2312, 16
      %v2457 = vrot.slane %v2455, 6
      %v2458 = vor.u32 %v2454, %v2457
      %v2459 = vsel %vm2315, %v2450, %v2458
      %v2460 = vld [vmem:[%s1957] sm:$0xf]
      %v2461 = vld [vmem:[%s1957 + $0x4] sm:$0x1]
      %v2462 = vld [vmem:[%s1957 + $0x8] sm:$0xf]
      %v2463 = vld [vmem:[%s1957 + $0xc] sm:$0x1]
      %v2464 = vld [vmem:[%s1957 + $0x10] sm:$0xf]
      %v2465 = vld [vmem:[%s1957 + $0x14] sm:$0x1]
      %v2466 = vld [vmem:[%s1957 + $0x18] sm:$0xf]
      %v2467 = vld [vmem:[%s1957 + $0x1c] sm:$0x1]
      %v2468 = vld [vmem:[%s1957 + $0x20] sm:$0xf]
      %v2469 = vld [vmem:[%s1957 + $0x24] sm:$0x1]
      %v2470 = vld [vmem:[%s1957 + $0x28] sm:$0xf]
      %v2471 = vld [vmem:[%s1957 + $0x2c] sm:$0x1]
      %v2472 = vld [vmem:[%s1957 + $0x30] sm:$0xf]
      %v2473 = vld [vmem:[%s1957 + $0x34] sm:$0x1]
      %v2474 = vld [vmem:[%s1957 + $0x38] sm:$0xf]
      %v2475 = vld [vmem:[%s1957 + $0x3c] sm:$0x1]
      %v2477 = vshrl.u32 %v2460, 16
      %v2479 = vrot.slane %v2477, 4
      %v2480 = vshll.u32 %v2460, 16
      %v2482 = vrot.slane %v2480, 5
      %v2483 = vor.u32 %v2479, %v2482
      %v2484 = vrot.slane %v2483, 4
      %v2486 = vshll.u32 %v2461, 16
      %v2488 = vrot.slane %v2486, 5
      %v2489 = vsel %vm468, %v2484, %v2488
      %v2491 = vshrl.u32 %v2462, 16
      %v2493 = vrot.slane %v2491, 4
      %v2494 = vshll.u32 %v2462, 16
      %v2496 = vrot.slane %v2494, 5
      %v2497 = vor.u32 %v2493, %v2496
      %v2498 = vrot.slane %v2497, 4
      %v2500 = vshll.u32 %v2463, 16
      %v2502 = vrot.slane %v2500, 5
      %v2503 = vsel %vm468, %v2498, %v2502
      %v2505 = vshrl.u32 %v2464, 16
      %v2507 = vrot.slane %v2505, 4
      %v2508 = vshll.u32 %v2464, 16
      %v2510 = vrot.slane %v2508, 5
      %v2511 = vor.u32 %v2507, %v2510
      %v2512 = vrot.slane %v2511, 4
      %v2514 = vshll.u32 %v2465, 16
      %v2516 = vrot.slane %v2514, 5
      %v2517 = vsel %vm468, %v2512, %v2516
      %v2519 = vshrl.u32 %v2466, 16
      %v2521 = vrot.slane %v2519, 4
      %v2522 = vshll.u32 %v2466, 16
      %v2524 = vrot.slane %v2522, 5
      %v2525 = vor.u32 %v2521, %v2524
      %v2526 = vrot.slane %v2525, 4
      %v2528 = vshll.u32 %v2467, 16
      %v2530 = vrot.slane %v2528, 5
      %v2531 = vsel %vm468, %v2526, %v2530
      %v2533 = vshrl.u32 %v2468, 16
      %v2535 = vrot.slane %v2533, 4
      %v2536 = vshll.u32 %v2468, 16
      %v2538 = vrot.slane %v2536, 5
      %v2539 = vor.u32 %v2535, %v2538
      %v2540 = vrot.slane %v2539, 4
      %v2542 = vshll.u32 %v2469, 16
      %v2544 = vrot.slane %v2542, 5
      %v2545 = vsel %vm468, %v2540, %v2544
      %v2547 = vshrl.u32 %v2470, 16
      %v2549 = vrot.slane %v2547, 4
      %v2550 = vshll.u32 %v2470, 16
      %v2552 = vrot.slane %v2550, 5
      %v2553 = vor.u32 %v2549, %v2552
      %v2554 = vrot.slane %v2553, 4
      %v2556 = vshll.u32 %v2471, 16
      %v2558 = vrot.slane %v2556, 5
      %v2559 = vsel %vm468, %v2554, %v2558
      %v2561 = vshrl.u32 %v2472, 16
      %v2563 = vrot.slane %v2561, 4
      %v2564 = vshll.u32 %v2472, 16
      %v2566 = vrot.slane %v2564, 5
      %v2567 = vor.u32 %v2563, %v2566
      %v2568 = vrot.slane %v2567, 4
      %v2570 = vshll.u32 %v2473, 16
      %v2572 = vrot.slane %v2570, 5
      %v2573 = vsel %vm468, %v2568, %v2572
      %v2575 = vshrl.u32 %v2474, 16
      %v2577 = vrot.slane %v2575, 4
      %v2578 = vshll.u32 %v2474, 16
      %v2580 = vrot.slane %v2578, 5
      %v2581 = vor.u32 %v2577, %v2580
      %v2582 = vrot.slane %v2581, 4
      %v2584 = vshll.u32 %v2475, 16
      %v2586 = vrot.slane %v2584, 5
      %v2587 = vsel %vm468, %v2582, %v2586
      %v2588 = vunpack.c.l.b16 %v2333
      %v2589 = vunpack.c.l.b16 %v2351
      %v2590 = vunpack.c.l.b16 %v2369
      %v2591 = vunpack.c.l.b16 %v2387
      %v2592 = vunpack.c.l.b16 %v2405
      %v2593 = vunpack.c.l.b16 %v2423
      %v2594 = vunpack.c.l.b16 %v2441
      %v2595 = vunpack.c.l.b16 %v2459
      %v2596 = vpack.c.b16 %v2589, %v2588
      %v2597 = vpack.c.b16 %v2591, %v2590
      %v2598 = vpack.c.b16 %v2593, %v2592
      %v2599 = vpack.c.b16 %v2595, %v2594
      %v2604 = vunpack.c.l.b16 %v2489
      %v2605 = vunpack.c.l.b16 %v2503
      %v2606 = vunpack.c.l.b16 %v2517
      %v2607 = vunpack.c.l.b16 %v2531
      %v2608 = vunpack.c.l.b16 %v2545
      %v2609 = vunpack.c.l.b16 %v2559
      %v2610 = vunpack.c.l.b16 %v2573
      %v2611 = vunpack.c.l.b16 %v2587
      %v2612 = vpack.c.b16 %v2605, %v2604
      %v2613 = vpack.c.b16 %v2607, %v2606
      %v2614 = vpack.c.b16 %v2609, %v2608
      %v2615 = vpack.c.b16 %v2611, %v2610
      %s2620 = scalar_lea.vmem %s4, 128
      %v2621 = vld [vmem:[%s2620] sm:$0xf]
      %v2622 = vld [vmem:[%s2620 + $0x4] sm:$0xf]
      %v2623 = vld [vmem:[%s2620 + $0x8] sm:$0xf]
      %v2624 = vld [vmem:[%s2620 + $0xc] sm:$0xf]
      %v2625 = vld [vmem:[%s2620 + $0x10] sm:$0xf]
      %v2626 = vld [vmem:[%s2620 + $0x14] sm:$0xf]
      %v2627 = vld [vmem:[%s2620 + $0x18] sm:$0xf]
      %v2628 = vld [vmem:[%s2620 + $0x1c] sm:$0xf]
      %v2629 = vld [vmem:[%s2620 + $0x20] sm:$0xf]
      %v2630 = vld [vmem:[%s2620 + $0x24] sm:$0xf]
      %v2631 = vld [vmem:[%s2620 + $0x28] sm:$0xf]
      %v2632 = vld [vmem:[%s2620 + $0x2c] sm:$0xf]
      %v2633 = vld [vmem:[%s2620 + $0x30] sm:$0xf]
      %v2634 = vld [vmem:[%s2620 + $0x34] sm:$0xf]
      %v2635 = vld [vmem:[%s2620 + $0x38] sm:$0xf]
      %v2636 = vld [vmem:[%s2620 + $0x3c] sm:$0xf]
      %v2637 = vld [vmem:[%s2620 + $0x40] sm:$0xf]
      %v2638 = vld [vmem:[%s2620 + $0x44] sm:$0xf]
      %v2639 = vld [vmem:[%s2620 + $0x48] sm:$0xf]
      %v2640 = vld [vmem:[%s2620 + $0x4c] sm:$0xf]
      %v2641 = vld [vmem:[%s2620 + $0x50] sm:$0xf]
      %v2642 = vld [vmem:[%s2620 + $0x54] sm:$0xf]
      %v2643 = vld [vmem:[%s2620 + $0x58] sm:$0xf]
      %v2644 = vld [vmem:[%s2620 + $0x5c] sm:$0xf]
      %v2645 = vld [vmem:[%s2620 + $0x60] sm:$0xf]
      %v2646 = vld [vmem:[%s2620 + $0x64] sm:$0xf]
      %v2647 = vld [vmem:[%s2620 + $0x68] sm:$0xf]
      %v2648 = vld [vmem:[%s2620 + $0x6c] sm:$0xf]
      %v2649 = vld [vmem:[%s2620 + $0x70] sm:$0xf]
      %v2650 = vld [vmem:[%s2620 + $0x74] sm:$0xf]
      %v2651 = vld [vmem:[%s2620 + $0x78] sm:$0xf]
      %v2652 = vld [vmem:[%s2620 + $0x7c] sm:$0xf]
      %v2685 = vunpack.c.l.b16 %v2621
      %v2686 = vunpack.c.l.b16 %v2622
      %v2687 = vunpack.c.l.b16 %v2623
      %v2688 = vunpack.c.l.b16 %v2624
      %v2689 = vunpack.c.l.b16 %v2625
      %v2690 = vunpack.c.l.b16 %v2626
      %v2691 = vunpack.c.l.b16 %v2627
      %v2692 = vunpack.c.l.b16 %v2628
      %v2693 = vunpack.c.l.b16 %v2629
      %v2694 = vunpack.c.l.b16 %v2630
      %v2695 = vunpack.c.l.b16 %v2631
      %v2696 = vunpack.c.l.b16 %v2632
      %v2697 = vunpack.c.l.b16 %v2633
      %v2698 = vunpack.c.l.b16 %v2634
      %v2699 = vunpack.c.l.b16 %v2635
      %v2700 = vunpack.c.l.b16 %v2636
      %v2701 = vunpack.c.l.b16 %v2637
      %v2702 = vunpack.c.l.b16 %v2638
      %v2703 = vunpack.c.l.b16 %v2639
      %v2704 = vunpack.c.l.b16 %v2640
      %v2705 = vunpack.c.l.b16 %v2641
      %v2706 = vunpack.c.l.b16 %v2642
      %v2707 = vunpack.c.l.b16 %v2643
      %v2708 = vunpack.c.l.b16 %v2644
      %v2709 = vunpack.c.l.b16 %v2645
      %v2710 = vunpack.c.l.b16 %v2646
      %v2711 = vunpack.c.l.b16 %v2647
      %v2712 = vunpack.c.l.b16 %v2648
      %v2713 = vunpack.c.l.b16 %v2649
      %v2714 = vunpack.c.l.b16 %v2650
      %v2715 = vunpack.c.l.b16 %v2651
      %v2716 = vunpack.c.l.b16 %v2652
      %v2717 = vpack.c.b16 %v2686, %v2685
      %v2718 = vpack.c.b16 %v2688, %v2687
      %v2719 = vpack.c.b16 %v2690, %v2689
      %v2720 = vpack.c.b16 %v2692, %v2691
      %v2721 = vpack.c.b16 %v2694, %v2693
      %v2722 = vpack.c.b16 %v2696, %v2695
      %v2723 = vpack.c.b16 %v2698, %v2697
      %v2724 = vpack.c.b16 %v2700, %v2699
      %v2725 = vpack.c.b16 %v2702, %v2701
      %v2726 = vpack.c.b16 %v2704, %v2703
      %v2727 = vpack.c.b16 %v2706, %v2705
      %v2728 = vpack.c.b16 %v2708, %v2707
      %v2729 = vpack.c.b16 %v2710, %v2709
      %v2730 = vpack.c.b16 %v2712, %v2711
      %v2731 = vpack.c.b16 %v2714, %v2713
      %v2732 = vpack.c.b16 %v2716, %v2715
      %2749 = vmatprep.subr.bf16.mxu0 0
      %2750 = vmatpush1.bf16.msra.mxu0 %v2717
      %2751 = vmatprep.subr.bf16.mxu0 0
      %2752 = vmatpush1.bf16.msra.mxu0 %v2718
      %2753 = vmatprep.subr.bf16.mxu0 0
      %2754 = vmatpush1.bf16.msra.mxu0 %v2719
      %2755 = vmatprep.subr.bf16.mxu0 0
      %2756 = vmatpush1.bf16.msra.mxu0 %v2720
      %2757 = vmatprep.subr.bf16.mxu0 0
      %2758 = vmatpush1.bf16.msra.mxu0 %v2721
      %2759 = vmatprep.subr.bf16.mxu0 0
      %2760 = vmatpush1.bf16.msra.mxu0 %v2722
      %2761 = vmatprep.subr.bf16.mxu0 0
      %2762 = vmatpush1.bf16.msra.mxu0 %v2723
      %2763 = vmatprep.subr.bf16.mxu0 0
      %2764 = vmatpush1.bf16.msra.mxu0 %v2724
      %2765 = vmatprep.subr.bf16.mxu0 0
      %2766 = vmatpush1.bf16.msra.mxu0 %v2725
      %2767 = vmatprep.subr.bf16.mxu0 0
      %2768 = vmatpush1.bf16.msra.mxu0 %v2726
      %2769 = vmatprep.subr.bf16.mxu0 0
      %2770 = vmatpush1.bf16.msra.mxu0 %v2727
      %2771 = vmatprep.subr.bf16.mxu0 0
      %2772 = vmatpush1.bf16.msra.mxu0 %v2728
      %2773 = vmatprep.subr.bf16.mxu0 0
      %2774 = vmatpush1.bf16.msra.mxu0 %v2729
      %2775 = vmatprep.subr.bf16.mxu0 0
      %2776 = vmatpush1.bf16.msra.mxu0 %v2730
      %2777 = vmatprep.subr.bf16.mxu0 0
      %2778 = vmatpush1.bf16.msra.mxu0 %v2731
      %2779 = vmatprep.subr.bf16.mxu0 0
      %2780 = vmatpush1.bf16.msra.mxu0 %v2732
      %2781 = vmatprep.mubr.bf16.mxu0 %v2612
      %2782 = vmatmul.mubr.bf16.gmra.mrb[0].mxu0 %v2596
      %v2783 = vpop.f32.mrb[0].mxu0
      %v2784 = vadd.f32 0.0, %v2783
      %v2785 = vpop.f32.mrb[0].mxu0
      %v2786 = vpop.f32.mrb[0].mxu0
      %v2787 = vadd.f32 0.0, %v2786
      %v2788 = vpop.f32.mrb[0].mxu0
      %2789 = vmatprep.mubr.bf16.mxu0 %v2613
      %2790 = vmatmul.mubr.bf16.gmra.mrb[0].mxu0 %v2597
      %v2791 = vpop.f32.mrb[0].mxu0
      %v2792 = vadd.f32 0.0, %v2791
      %v2793 = vpop.f32.mrb[0].mxu0
      %v2794 = vpop.f32.mrb[0].mxu0
      %v2795 = vadd.f32 0.0, %v2794
      %v2796 = vpop.f32.mrb[0].mxu0
      %2797 = vmatprep.mubr.bf16.mxu0 %v2614
      %2798 = vmatmul.mubr.bf16.gmra.mrb[0].mxu0 %v2598
      %v2799 = vpop.f32.mrb[0].mxu0
      %v2800 = vadd.f32 0.0, %v2799
      %v2801 = vpop.f32.mrb[0].mxu0
      %v2802 = vpop.f32.mrb[0].mxu0
      %v2803 = vadd.f32 0.0, %v2802
      %v2804 = vpop.f32.mrb[0].mxu0
      %2805 = vmatprep.mubr.bf16.mxu0 %v2615
      %2806 = vmatmul.mubr.bf16.gmra.mrb[0].mxu0 %v2599
      %v2807 = vpop.f32.mrb[0].mxu0
      %v2808 = vadd.f32 0.0, %v2807
      %v2809 = vpop.f32.mrb[0].mxu0
      %v2810 = vpop.f32.mrb[0].mxu0
      %v2811 = vadd.f32 0.0, %v2810
      %v2812 = vpop.f32.mrb[0].mxu0
      %2813 = vdwg.mxu0
      %v2846 = vunpack.c.l.b16 %v2273
      %v2847 = vunpack.c.l.b16 %v2274
      %v2848 = vunpack.c.l.b16 %v2275
      %v2849 = vunpack.c.l.b16 %v2276
      %v2850 = vunpack.c.l.b16 %v2277
      %v2851 = vunpack.c.l.b16 %v2278
      %v2852 = vunpack.c.l.b16 %v2279
      %v2853 = vunpack.c.l.b16 %v2280
      %v2854 = vunpack.c.l.b16 %v2281
      %v2855 = vunpack.c.l.b16 %v2282
      %v2856 = vunpack.c.l.b16 %v2283
      %v2857 = vunpack.c.l.b16 %v2284
      %v2858 = vunpack.c.l.b16 %v2285
      %v2859 = vunpack.c.l.b16 %v2286
      %v2860 = vunpack.c.l.b16 %v2287
      %v2861 = vunpack.c.l.b16 %v2288
      %v2862 = vunpack.c.l.b16 %v2289
      %v2863 = vunpack.c.l.b16 %v2290
      %v2864 = vunpack.c.l.b16 %v2291
      %v2865 = vunpack.c.l.b16 %v2292
      %v2866 = vunpack.c.l.b16 %v2293
      %v2867 = vunpack.c.l.b16 %v2294
      %v2868 = vunpack.c.l.b16 %v2295
      %v2869 = vunpack.c.l.b16 %v2296
      %v2870 = vunpack.c.l.b16 %v2297
      %v2871 = vunpack.c.l.b16 %v2298
      %v2872 = vunpack.c.l.b16 %v2299
      %v2873 = vunpack.c.l.b16 %v2300
      %v2874 = vunpack.c.l.b16 %v2301
      %v2875 = vunpack.c.l.b16 %v2302
      %v2876 = vunpack.c.l.b16 %v2303
      %v2877 = vunpack.c.l.b16 %v2304
      %v2878 = vpack.c.b16 %v2847, %v2846
      %v2879 = vpack.c.b16 %v2849, %v2848
      %v2880 = vpack.c.b16 %v2851, %v2850
      %v2881 = vpack.c.b16 %v2853, %v2852
      %v2882 = vpack.c.b16 %v2855, %v2854
      %v2883 = vpack.c.b16 %v2857, %v2856
      %v2884 = vpack.c.b16 %v2859, %v2858
      %v2885 = vpack.c.b16 %v2861, %v2860
      %v2886 = vpack.c.b16 %v2863, %v2862
      %v2887 = vpack.c.b16 %v2865, %v2864
      %v2888 = vpack.c.b16 %v2867, %v2866
      %v2889 = vpack.c.b16 %v2869, %v2868
      %v2890 = vpack.c.b16 %v2871, %v2870
      %v2891 = vpack.c.b16 %v2873, %v2872
      %v2892 = vpack.c.b16 %v2875, %v2874
      %v2893 = vpack.c.b16 %v2877, %v2876
      %2910 = vmatprep.subr.bf16.mxu0 0
      %2911 = vmatpush1.bf16.msra.mxu0 %v2878
      %2912 = vmatprep.subr.bf16.mxu0 0
      %2913 = vmatpush1.bf16.msra.mxu0 %v2879
      %2914 = vmatprep.subr.bf16.mxu0 0
      %2915 = vmatpush1.bf16.msra.mxu0 %v2880
      %2916 = vmatprep.subr.bf16.mxu0 0
      %2917 = vmatpush1.bf16.msra.mxu0 %v2881
      %2918 = vmatprep.subr.bf16.mxu0 0
      %2919 = vmatpush1.bf16.msra.mxu0 %v2882
      %2920 = vmatprep.subr.bf16.mxu0 0
      %2921 = vmatpush1.bf16.msra.mxu0 %v2883
      %2922 = vmatprep.subr.bf16.mxu0 0
      %2923 = vmatpush1.bf16.msra.mxu0 %v2884
      %2924 = vmatprep.subr.bf16.mxu0 0
      %2925 = vmatpush1.bf16.msra.mxu0 %v2885
      %2926 = vmatprep.subr.bf16.mxu0 0
      %2927 = vmatpush1.bf16.msra.mxu0 %v2886
      %2928 = vmatprep.subr.bf16.mxu0 0
      %2929 = vmatpush1.bf16.msra.mxu0 %v2887
      %2930 = vmatprep.subr.bf16.mxu0 0
      %2931 = vmatpush1.bf16.msra.mxu0 %v2888
      %2932 = vmatprep.subr.bf16.mxu0 0
      %2933 = vmatpush1.bf16.msra.mxu0 %v2889
      %2934 = vmatprep.subr.bf16.mxu0 0
      %2935 = vmatpush1.bf16.msra.mxu0 %v2890
      %2936 = vmatprep.subr.bf16.mxu0 0
      %2937 = vmatpush1.bf16.msra.mxu0 %v2891
      %2938 = vmatprep.subr.bf16.mxu0 0
      %2939 = vmatpush1.bf16.msra.mxu0 %v2892
      %2940 = vmatprep.subr.bf16.mxu0 0
      %2941 = vmatpush1.bf16.msra.mxu0 %v2893
      %2942 = vmatprep.mubr.bf16.mxu0 %v2265
      %2943 = vmatmul.mubr.bf16.gmra.mrb[0].mxu0 %v2249
      %v2944 = vpop.f32.mrb[0].mxu0
      %v2945 = vadd.f32 %v2784, %v2944
      %v2946 = vpop.f32.mrb[0].mxu0
      %v2947 = vpop.f32.mrb[0].mxu0
      %v2948 = vadd.f32 %v2787, %v2947
      %v2949 = vpop.f32.mrb[0].mxu0
      %2950 = vmatprep.mubr.bf16.mxu0 %v2266
      %2951 = vmatmul.mubr.bf16.gmra.mrb[0].mxu0 %v2250
      %v2952 = vpop.f32.mrb[0].mxu0
      %v2953 = vadd.f32 %v2792, %v2952
      %v2954 = vpop.f32.mrb[0].mxu0
      %v2955 = vpop.f32.mrb[0].mxu0
      %v2956 = vadd.f32 %v2795, %v2955
      %v2957 = vpop.f32.mrb[0].mxu0
      %2958 = vmatprep.mubr.bf16.mxu0 %v2267
      %2959 = vmatmul.mubr.bf16.gmra.mrb[0].mxu0 %v2251
      %v2960 = vpop.f32.mrb[0].mxu0
      %v2961 = vadd.f32 %v2800, %v2960
      %v2962 = vpop.f32.mrb[0].mxu0
      %v2963 = vpop.f32.mrb[0].mxu0
      %v2964 = vadd.f32 %v2803, %v2963
      %v2965 = vpop.f32.mrb[0].mxu0
      %2966 = vmatprep.mubr.bf16.mxu0 %v2268
      %2967 = vmatmul.mubr.bf16.gmra.mrb[0].mxu0 %v2252
      %v2968 = vpop.f32.mrb[0].mxu0
      %v2969 = vadd.f32 %v2808, %v2968
      %v2970 = vpop.f32.mrb[0].mxu0
      %v2971 = vpop.f32.mrb[0].mxu0
      %v2972 = vadd.f32 %v2811, %v2971
      %v2973 = vpop.f32.mrb[0].mxu0
      %2974 = vdwg.mxu0
      %v2975 = vld [vmem:[%s1957] sm:$0xe]
      %v2976 = vld [vmem:[%s1957 + $0x8] sm:$0xe]
      %v2977 = vld [vmem:[%s1957 + $0x10] sm:$0xe]
      %v2978 = vld [vmem:[%s1957 + $0x18] sm:$0xe]
      %v2979 = vld [vmem:[%s1957 + $0x20] sm:$0xe]
      %v2980 = vld [vmem:[%s1957 + $0x28] sm:$0xe]
      %v2981 = vld [vmem:[%s1957 + $0x30] sm:$0xe]
      %v2982 = vld [vmem:[%s1957 + $0x38] sm:$0xe]
      %v2999 = vrot.slane %v2975, 5
      %v3000 = vrot.slane %v2999, 4
      %v3001 = vrot.slane %v2461, 5
      %v3002 = vsel %vm2208, %v3000, %v3001
      %v3003 = vrot.slane %v2976, 5
      %v3004 = vrot.slane %v3003, 4
      %v3005 = vrot.slane %v2463, 5
      %v3006 = vsel %vm2208, %v3004, %v3005
      %v3007 = vrot.slane %v2977, 5
      %v3008 = vrot.slane %v3007, 4
      %v3009 = vrot.slane %v2465, 5
      %v3010 = vsel %vm2208, %v3008, %v3009
      %v3011 = vrot.slane %v2978, 5
      %v3012 = vrot.slane %v3011, 4
      %v3013 = vrot.slane %v2467, 5
      %v3014 = vsel %vm2208, %v3012, %v3013
      %v3015 = vrot.slane %v2979, 5
      %v3016 = vrot.slane %v3015, 4
      %v3017 = vrot.slane %v2469, 5
      %v3018 = vsel %vm2208, %v3016, %v3017
      %v3019 = vrot.slane %v2980, 5
      %v3020 = vrot.slane %v3019, 4
      %v3021 = vrot.slane %v2471, 5
      %v3022 = vsel %vm2208, %v3020, %v3021
      %v3023 = vrot.slane %v2981, 5
      %v3024 = vrot.slane %v3023, 4
      %v3025 = vrot.slane %v2473, 5
      %v3026 = vsel %vm2208, %v3024, %v3025
      %v3027 = vrot.slane %v2982, 5
      %v3028 = vrot.slane %v3027, 4
      %v3029 = vrot.slane %v2475, 5
      %v3030 = vsel %vm2208, %v3028, %v3029
      %v3031 = vld [vmem:[%s1957 + $0x4] sm:$0x3]
      %v3032 = vld [vmem:[%s1957 + $0xc] sm:$0x3]
      %v3033 = vld [vmem:[%s1957 + $0x14] sm:$0x3]
      %v3034 = vld [vmem:[%s1957 + $0x1c] sm:$0x3]
      %v3035 = vld [vmem:[%s1957 + $0x24] sm:$0x3]
      %v3036 = vld [vmem:[%s1957 + $0x2c] sm:$0x3]
      %v3037 = vld [vmem:[%s1957 + $0x34] sm:$0x3]
      %v3038 = vld [vmem:[%s1957 + $0x3c] sm:$0x3]
      %v3040 = vshrl.u32 %v2975, 16
      %v3042 = vrot.slane %v3040, 5
      %v3043 = vshll.u32 %v2975, 16
      %v3045 = vrot.slane %v3043, 6
      %v3046 = vor.u32 %v3042, %v3045
      %v3047 = vrot.slane %v3046, 4
      %v3049 = vshrl.u32 %v3031, 16
      %v3051 = vrot.slane %v3049, 5
      %v3052 = vshll.u32 %v3031, 16
      %v3054 = vrot.slane %v3052, 6
      %v3055 = vor.u32 %v3051, %v3054
      %v3056 = vsel %vm2315, %v3047, %v3055
      %v3058 = vshrl.u32 %v2976, 16
      %v3060 = vrot.slane %v3058, 5
      %v3061 = vshll.u32 %v2976, 16
      %v3063 = vrot.slane %v3061, 6
      %v3064 = vor.u32 %v3060, %v3063
      %v3065 = vrot.slane %v3064, 4
      %v3067 = vshrl.u32 %v3032, 16
      %v3069 = vrot.slane %v3067, 5
      %v3070 = vshll.u32 %v3032, 16
      %v3072 = vrot.slane %v3070, 6
      %v3073 = vor.u32 %v3069, %v3072
      %v3074 = vsel %vm2315, %v3065, %v3073
      %v3076 = vshrl.u32 %v2977, 16
      %v3078 = vrot.slane %v3076, 5
      %v3079 = vshll.u32 %v2977, 16
      %v3081 = vrot.slane %v3079, 6
      %v3082 = vor.u32 %v3078, %v3081
      %v3083 = vrot.slane %v3082, 4
      %v3085 = vshrl.u32 %v3033, 16
      %v3087 = vrot.slane %v3085, 5
      %v3088 = vshll.u32 %v3033, 16
      %v3090 = vrot.slane %v3088, 6
      %v3091 = vor.u32 %v3087, %v3090
      %v3092 = vsel %vm2315, %v3083, %v3091
      %v3094 = vshrl.u32 %v2978, 16
      %v3096 = vrot.slane %v3094, 5
      %v3097 = vshll.u32 %v2978, 16
      %v3099 = vrot.slane %v3097, 6
      %v3100 = vor.u32 %v3096, %v3099
      %v3101 = vrot.slane %v3100, 4
      %v3103 = vshrl.u32 %v3034, 16
      %v3105 = vrot.slane %v3103, 5
      %v3106 = vshll.u32 %v3034, 16
      %v3108 = vrot.slane %v3106, 6
      %v3109 = vor.u32 %v3105, %v3108
      %v3110 = vsel %vm2315, %v3101, %v3109
      %v3112 = vshrl.u32 %v2979, 16
      %v3114 = vrot.slane %v3112, 5
      %v3115 = vshll.u32 %v2979, 16
      %v3117 = vrot.slane %v3115, 6
      %v3118 = vor.u32 %v3114, %v3117
      %v3119 = vrot.slane %v3118, 4
      %v3121 = vshrl.u32 %v3035, 16
      %v3123 = vrot.slane %v3121, 5
      %v3124 = vshll.u32 %v3035, 16
      %v3126 = vrot.slane %v3124, 6
      %v3127 = vor.u32 %v3123, %v3126
      %v3128 = vsel %vm2315, %v3119, %v3127
      %v3130 = vshrl.u32 %v2980, 16
      %v3132 = vrot.slane %v3130, 5
      %v3133 = vshll.u32 %v2980, 16
      %v3135 = vrot.slane %v3133, 6
      %v3136 = vor.u32 %v3132, %v3135
      %v3137 = vrot.slane %v3136, 4
      %v3139 = vshrl.u32 %v3036, 16
      %v3141 = vrot.slane %v3139, 5
      %v3142 = vshll.u32 %v3036, 16
      %v3144 = vrot.slane %v3142, 6
      %v3145 = vor.u32 %v3141, %v3144
      %v3146 = vsel %vm2315, %v3137, %v3145
      %v3148 = vshrl.u32 %v2981, 16
      %v3150 = vrot.slane %v3148, 5
      %v3151 = vshll.u32 %v2981, 16
      %v3153 = vrot.slane %v3151, 6
      %v3154 = vor.u32 %v3150, %v3153
      %v3155 = vrot.slane %v3154, 4
      %v3157 = vshrl.u32 %v3037, 16
      %v3159 = vrot.slane %v3157, 5
      %v3160 = vshll.u32 %v3037, 16
      %v3162 = vrot.slane %v3160, 6
      %v3163 = vor.u32 %v3159, %v3162
      %v3164 = vsel %vm2315, %v3155, %v3163
      %v3166 = vshrl.u32 %v2982, 16
      %v3168 = vrot.slane %v3166, 5
      %v3169 = vshll.u32 %v2982, 16
      %v3171 = vrot.slane %v3169, 6
      %v3172 = vor.u32 %v3168, %v3171
      %v3173 = vrot.slane %v3172, 4
      %v3175 = vshrl.u32 %v3038, 16
      %v3177 = vrot.slane %v3175, 5
      %v3178 = vshll.u32 %v3038, 16
      %v3180 = vrot.slane %v3178, 6
      %v3181 = vor.u32 %v3177, %v3180
      %v3182 = vsel %vm2315, %v3173, %v3181
      %v3183 = vunpack.c.l.b16 %v3002
      %v3184 = vunpack.c.l.b16 %v3006
      %v3185 = vunpack.c.l.b16 %v3010
      %v3186 = vunpack.c.l.b16 %v3014
      %v3187 = vunpack.c.l.b16 %v3018
      %v3188 = vunpack.c.l.b16 %v3022
      %v3189 = vunpack.c.l.b16 %v3026
      %v3190 = vunpack.c.l.b16 %v3030
      %v3191 = vpack.c.b16 %v3184, %v3183
      %v3192 = vpack.c.b16 %v3186, %v3185
      %v3193 = vpack.c.b16 %v3188, %v3187
      %v3194 = vpack.c.b16 %v3190, %v3189
      %v3199 = vunpack.c.l.b16 %v3056
      %v3200 = vunpack.c.l.b16 %v3074
      %v3201 = vunpack.c.l.b16 %v3092
      %v3202 = vunpack.c.l.b16 %v3110
      %v3203 = vunpack.c.l.b16 %v3128
      %v3204 = vunpack.c.l.b16 %v3146
      %v3205 = vunpack.c.l.b16 %v3164
      %v3206 = vunpack.c.l.b16 %v3182
      %v3207 = vpack.c.b16 %v3200, %v3199
      %v3208 = vpack.c.b16 %v3202, %v3201
      %v3209 = vpack.c.b16 %v3204, %v3203
      %v3210 = vpack.c.b16 %v3206, %v3205
      %s3215 = scalar_lea.vmem %s4, 256
      %v3216 = vld [vmem:[%s3215] sm:$0xf]
      %v3217 = vld [vmem:[%s3215 + $0x4] sm:$0xf]
      %v3218 = vld [vmem:[%s3215 + $0x8] sm:$0xf]
      %v3219 = vld [vmem:[%s3215 + $0xc] sm:$0xf]
      %v3220 = vld [vmem:[%s3215 + $0x10] sm:$0xf]
      %v3221 = vld [vmem:[%s3215 + $0x14] sm:$0xf]
      %v3222 = vld [vmem:[%s3215 + $0x18] sm:$0xf]
      %v3223 = vld [vmem:[%s3215 + $0x1c] sm:$0xf]
      %v3224 = vld [vmem:[%s3215 + $0x20] sm:$0xf]
      %v3225 = vld [vmem:[%s3215 + $0x24] sm:$0xf]
      %v3226 = vld [vmem:[%s3215 + $0x28] sm:$0xf]
      %v3227 = vld [vmem:[%s3215 + $0x2c] sm:$0xf]
      %v3228 = vld [vmem:[%s3215 + $0x30] sm:$0xf]
      %v3229 = vld [vmem:[%s3215 + $0x34] sm:$0xf]
      %v3230 = vld [vmem:[%s3215 + $0x38] sm:$0xf]
      %v3231 = vld [vmem:[%s3215 + $0x3c] sm:$0xf]
      %v3232 = vld [vmem:[%s3215 + $0x40] sm:$0xf]
      %v3233 = vld [vmem:[%s3215 + $0x44] sm:$0xf]
      %v3234 = vld [vmem:[%s3215 + $0x48] sm:$0xf]
      %v3235 = vld [vmem:[%s3215 + $0x4c] sm:$0xf]
      %v3236 = vld [vmem:[%s3215 + $0x50] sm:$0xf]
      %v3237 = vld [vmem:[%s3215 + $0x54] sm:$0xf]
      %v3238 = vld [vmem:[%s3215 + $0x58] sm:$0xf]
      %v3239 = vld [vmem:[%s3215 + $0x5c] sm:$0xf]
      %v3240 = vld [vmem:[%s3215 + $0x60] sm:$0xf]
      %v3241 = vld [vmem:[%s3215 + $0x64] sm:$0xf]
      %v3242 = vld [vmem:[%s3215 + $0x68] sm:$0xf]
      %v3243 = vld [vmem:[%s3215 + $0x6c] sm:$0xf]
      %v3244 = vld [vmem:[%s3215 + $0x70] sm:$0xf]
      %v3245 = vld [vmem:[%s3215 + $0x74] sm:$0xf]
      %v3246 = vld [vmem:[%s3215 + $0x78] sm:$0xf]
      %v3247 = vld [vmem:[%s3215 + $0x7c] sm:$0xf]
      %v3280 = vunpack.c.l.b16 %v3216
      %v3281 = vunpack.c.l.b16 %v3217
      %v3282 = vunpack.c.l.b16 %v3218
      %v3283 = vunpack.c.l.b16 %v3219
      %v3284 = vunpack.c.l.b16 %v3220
      %v3285 = vunpack.c.l.b16 %v3221
      %v3286 = vunpack.c.l.b16 %v3222
      %v3287 = vunpack.c.l.b16 %v3223
      %v3288 = vunpack.c.l.b16 %v3224
      %v3289 = vunpack.c.l.b16 %v3225
      %v3290 = vunpack.c.l.b16 %v3226
      %v3291 = vunpack.c.l.b16 %v3227
      %v3292 = vunpack.c.l.b16 %v3228
      %v3293 = vunpack.c.l.b16 %v3229
      %v3294 = vunpack.c.l.b16 %v3230
      %v3295 = vunpack.c.l.b16 %v3231
      %v3296 = vunpack.c.l.b16 %v3232
      %v3297 = vunpack.c.l.b16 %v3233
      %v3298 = vunpack.c.l.b16 %v3234
      %v3299 = vunpack.c.l.b16 %v3235
      %v3300 = vunpack.c.l.b16 %v3236
      %v3301 = vunpack.c.l.b16 %v3237
      %v3302 = vunpack.c.l.b16 %v3238
      %v3303 = vunpack.c.l.b16 %v3239
      %v3304 = vunpack.c.l.b16 %v3240
      %v3305 = vunpack.c.l.b16 %v3241
      %v3306 = vunpack.c.l.b16 %v3242
      %v3307 = vunpack.c.l.b16 %v3243
      %v3308 = vunpack.c.l.b16 %v3244
      %v3309 = vunpack.c.l.b16 %v3245
      %v3310 = vunpack.c.l.b16 %v3246
      %v3311 = vunpack.c.l.b16 %v3247
      %v3312 = vpack.c.b16 %v3281, %v3280
      %v3313 = vpack.c.b16 %v3283, %v3282
      %v3314 = vpack.c.b16 %v3285, %v3284
      %v3315 = vpack.c.b16 %v3287, %v3286
      %v3316 = vpack.c.b16 %v3289, %v3288
      %v3317 = vpack.c.b16 %v3291, %v3290
      %v3318 = vpack.c.b16 %v3293, %v3292
      %v3319 = vpack.c.b16 %v3295, %v3294
      %v3320 = vpack.c.b16 %v3297, %v3296
      %v3321 = vpack.c.b16 %v3299, %v3298
      %v3322 = vpack.c.b16 %v3301, %v3300
      %v3323 = vpack.c.b16 %v3303, %v3302
      %v3324 = vpack.c.b16 %v3305, %v3304
      %v3325 = vpack.c.b16 %v3307, %v3306
      %v3326 = vpack.c.b16 %v3309, %v3308
      %v3327 = vpack.c.b16 %v3311, %v3310
      %3344 = vmatprep.subr.bf16.mxu0 0
      %3345 = vmatpush1.bf16.msra.mxu0 %v3312
      %3346 = vmatprep.subr.bf16.mxu0 0
      %3347 = vmatpush1.bf16.msra.mxu0 %v3313
      %3348 = vmatprep.subr.bf16.mxu0 0
      %3349 = vmatpush1.bf16.msra.mxu0 %v3314
      %3350 = vmatprep.subr.bf16.mxu0 0
      %3351 = vmatpush1.bf16.msra.mxu0 %v3315
      %3352 = vmatprep.subr.bf16.mxu0 0
      %3353 = vmatpush1.bf16.msra.mxu0 %v3316
      %3354 = vmatprep.subr.bf16.mxu0 0
      %3355 = vmatpush1.bf16.msra.mxu0 %v3317
      %3356 = vmatprep.subr.bf16.mxu0 0
      %3357 = vmatpush1.bf16.msra.mxu0 %v3318
      %3358 = vmatprep.subr.bf16.mxu0 0
      %3359 = vmatpush1.bf16.msra.mxu0 %v3319
      %3360 = vmatprep.subr.bf16.mxu0 0
      %3361 = vmatpush1.bf16.msra.mxu0 %v3320
      %3362 = vmatprep.subr.bf16.mxu0 0
      %3363 = vmatpush1.bf16.msra.mxu0 %v3321
      %3364 = vmatprep.subr.bf16.mxu0 0
      %3365 = vmatpush1.bf16.msra.mxu0 %v3322
      %3366 = vmatprep.subr.bf16.mxu0 0
      %3367 = vmatpush1.bf16.msra.mxu0 %v3323
      %3368 = vmatprep.subr.bf16.mxu0 0
      %3369 = vmatpush1.bf16.msra.mxu0 %v3324
      %3370 = vmatprep.subr.bf16.mxu0 0
      %3371 = vmatpush1.bf16.msra.mxu0 %v3325
      %3372 = vmatprep.subr.bf16.mxu0 0
      %3373 = vmatpush1.bf16.msra.mxu0 %v3326
      %3374 = vmatprep.subr.bf16.mxu0 0
      %3375 = vmatpush1.bf16.msra.mxu0 %v3327
      %3376 = vmatprep.mubr.bf16.mxu0 %v3207
      %3377 = vmatmul.mubr.bf16.gmra.mrb[0].mxu0 %v3191
      %v3378 = vpop.f32.mrb[0].mxu0
      %v3379 = vadd.f32 0.0, %v3378
      %v3380 = vpop.f32.mrb[0].mxu0
      %v3381 = vpop.f32.mrb[0].mxu0
      %v3382 = vadd.f32 0.0, %v3381
      %v3383 = vpop.f32.mrb[0].mxu0
      %3384 = vmatprep.mubr.bf16.mxu0 %v3208
      %3385 = vmatmul.mubr.bf16.gmra.mrb[0].mxu0 %v3192
      %v3386 = vpop.f32.mrb[0].mxu0
      %v3387 = vadd.f32 0.0, %v3386
      %v3388 = vpop.f32.mrb[0].mxu0
      %v3389 = vpop.f32.mrb[0].mxu0
      %v3390 = vadd.f32 0.0, %v3389
      %v3391 = vpop.f32.mrb[0].mxu0
      %3392 = vmatprep.mubr.bf16.mxu0 %v3209
      %3393 = vmatmul.mubr.bf16.gmra.mrb[0].mxu0 %v3193
      %v3394 = vpop.f32.mrb[0].mxu0
      %v3395 = vadd.f32 0.0, %v3394
      %v3396 = vpop.f32.mrb[0].mxu0
      %v3397 = vpop.f32.mrb[0].mxu0
      %v3398 = vadd.f32 0.0, %v3397
      %v3399 = vpop.f32.mrb[0].mxu0
      %3400 = vmatprep.mubr.bf16.mxu0 %v3210
      %3401 = vmatmul.mubr.bf16.gmra.mrb[0].mxu0 %v3194
      %v3402 = vpop.f32.mrb[0].mxu0
      %v3403 = vadd.f32 0.0, %v3402
      %v3404 = vpop.f32.mrb[0].mxu0
      %v3405 = vpop.f32.mrb[0].mxu0
      %v3406 = vadd.f32 0.0, %v3405
      %v3407 = vpop.f32.mrb[0].mxu0
      %3408 = vdwg.mxu0
      %v3409 = vadd.f32 %v2945, %v3379
      %v3410 = vadd.f32 %v2948, %v3382
      %v3411 = vadd.f32 %v2953, %v3387
      %v3412 = vadd.f32 %v2956, %v3390
      %v3413 = vadd.f32 %v2961, %v3395
      %v3414 = vadd.f32 %v2964, %v3398
      %v3415 = vadd.f32 %v2969, %v3403
      %v3416 = vadd.f32 %v2972, %v3406
      %s3417 = scalar_lea.vmem [#allocation2], 16
      %v3418 = vld [vmem:[%s3417] sm:$0xf]
      %v3419 = vld [vmem:[%s3417 + $0x4] sm:$0x1]
      %v3420 = vld [vmem:[%s3417 + $0x8] sm:$0xf]
      %v3421 = vld [vmem:[%s3417 + $0xc] sm:$0x1]
      %v3422 = vld [vmem:[%s3417 + $0x10] sm:$0xf]
      %v3423 = vld [vmem:[%s3417 + $0x14] sm:$0x1]
      %v3424 = vld [vmem:[%s3417 + $0x18] sm:$0xf]
      %v3425 = vld [vmem:[%s3417 + $0x1c] sm:$0x1]
      %v3426 = vld [vmem:[%s3417 + $0x20] sm:$0xf]
      %v3427 = vld [vmem:[%s3417 + $0x24] sm:$0x1]
      %v3428 = vld [vmem:[%s3417 + $0x28] sm:$0xf]
      %v3429 = vld [vmem:[%s3417 + $0x2c] sm:$0x1]
      %v3430 = vld [vmem:[%s3417 + $0x30] sm:$0xf]
      %v3431 = vld [vmem:[%s3417 + $0x34] sm:$0x1]
      %v3432 = vld [vmem:[%s3417 + $0x38] sm:$0xf]
      %v3433 = vld [vmem:[%s3417 + $0x3c] sm:$0x1]
      %v3435 = vshrl.u32 %v3418, 16
      %v3437 = vrot.slane %v3435, 4
      %v3438 = vshll.u32 %v3418, 16
      %v3440 = vrot.slane %v3438, 5
      %v3441 = vor.u32 %v3437, %v3440
      %v3442 = vrot.slane %v3441, 4
      %v3444 = vshll.u32 %v3419, 16
      %v3446 = vrot.slane %v3444, 5
      %v3447 = vsel %vm468, %v3442, %v3446
      %v3449 = vshrl.u32 %v3420, 16
      %v3451 = vrot.slane %v3449, 4
      %v3452 = vshll.u32 %v3420, 16
      %v3454 = vrot.slane %v3452, 5
      %v3455 = vor.u32 %v3451, %v3454
      %v3456 = vrot.slane %v3455, 4
      %v3458 = vshll.u32 %v3421, 16
      %v3460 = vrot.slane %v3458, 5
      %v3461 = vsel %vm468, %v3456, %v3460
      %v3463 = vshrl.u32 %v3422, 16
      %v3465 = vrot.slane %v3463, 4
      %v3466 = vshll.u32 %v3422, 16
      %v3468 = vrot.slane %v3466, 5
      %v3469 = vor.u32 %v3465, %v3468
      %v3470 = vrot.slane %v3469, 4
      %v3472 = vshll.u32 %v3423, 16
      %v3474 = vrot.slane %v3472, 5
      %v3475 = vsel %vm468, %v3470, %v3474
      %v3477 = vshrl.u32 %v3424, 16
      %v3479 = vrot.slane %v3477, 4
      %v3480 = vshll.u32 %v3424, 16
      %v3482 = vrot.slane %v3480, 5
      %v3483 = vor.u32 %v3479, %v3482
      %v3484 = vrot.slane %v3483, 4
      %v3486 = vshll.u32 %v3425, 16
      %v3488 = vrot.slane %v3486, 5
      %v3489 = vsel %vm468, %v3484, %v3488
      %v3491 = vshrl.u32 %v3426, 16
      %v3493 = vrot.slane %v3491, 4
      %v3494 = vshll.u32 %v3426, 16
      %v3496 = vrot.slane %v3494, 5
      %v3497 = vor.u32 %v3493, %v3496
      %v3498 = vrot.slane %v3497, 4
      %v3500 = vshll.u32 %v3427, 16
      %v3502 = vrot.slane %v3500, 5
      %v3503 = vsel %vm468, %v3498, %v3502
      %v3505 = vshrl.u32 %v3428, 16
      %v3507 = vrot.slane %v3505, 4
      %v3508 = vshll.u32 %v3428, 16
      %v3510 = vrot.slane %v3508, 5
      %v3511 = vor.u32 %v3507, %v3510
      %v3512 = vrot.slane %v3511, 4
      %v3514 = vshll.u32 %v3429, 16
      %v3516 = vrot.slane %v3514, 5
      %v3517 = vsel %vm468, %v3512, %v3516
      %v3519 = vshrl.u32 %v3430, 16
      %v3521 = vrot.slane %v3519, 4
      %v3522 = vshll.u32 %v3430, 16
      %v3524 = vrot.slane %v3522, 5
      %v3525 = vor.u32 %v3521, %v3524
      %v3526 = vrot.slane %v3525, 4
      %v3528 = vshll.u32 %v3431, 16
      %v3530 = vrot.slane %v3528, 5
      %v3531 = vsel %vm468, %v3526, %v3530
      %v3533 = vshrl.u32 %v3432, 16
      %v3535 = vrot.slane %v3533, 4
      %v3536 = vshll.u32 %v3432, 16
      %v3538 = vrot.slane %v3536, 5
      %v3539 = vor.u32 %v3535, %v3538
      %v3540 = vrot.slane %v3539, 4
      %v3542 = vshll.u32 %v3433, 16
      %v3544 = vrot.slane %v3542, 5
      %v3545 = vsel %vm468, %v3540, %v3544
      %v3546 = vld [vmem:[%s3417] sm:$0xe]
      %v3547 = vld [vmem:[%s3417 + $0x8] sm:$0xe]
      %v3548 = vld [vmem:[%s3417 + $0x10] sm:$0xe]
      %v3549 = vld [vmem:[%s3417 + $0x18] sm:$0xe]
      %v3550 = vld [vmem:[%s3417 + $0x20] sm:$0xe]
      %v3551 = vld [vmem:[%s3417 + $0x28] sm:$0xe]
      %v3552 = vld [vmem:[%s3417 + $0x30] sm:$0xe]
      %v3553 = vld [vmem:[%s3417 + $0x38] sm:$0xe]
      %v3570 = vrot.slane %v3546, 5
      %v3571 = vrot.slane %v3570, 4
      %v3572 = vrot.slane %v3419, 5
      %v3573 = vsel %vm2208, %v3571, %v3572
      %v3574 = vrot.slane %v3547, 5
      %v3575 = vrot.slane %v3574, 4
      %v3576 = vrot.slane %v3421, 5
      %v3577 = vsel %vm2208, %v3575, %v3576
      %v3578 = vrot.slane %v3548, 5
      %v3579 = vrot.slane %v3578, 4
      %v3580 = vrot.slane %v3423, 5
      %v3581 = vsel %vm2208, %v3579, %v3580
      %v3582 = vrot.slane %v3549, 5
      %v3583 = vrot.slane %v3582, 4
      %v3584 = vrot.slane %v3425, 5
      %v3585 = vsel %vm2208, %v3583, %v3584
      %v3586 = vrot.slane %v3550, 5
      %v3587 = vrot.slane %v3586, 4
      %v3588 = vrot.slane %v3427, 5
      %v3589 = vsel %vm2208, %v3587, %v3588
      %v3590 = vrot.slane %v3551, 5
      %v3591 = vrot.slane %v3590, 4
      %v3592 = vrot.slane %v3429, 5
      %v3593 = vsel %vm2208, %v3591, %v3592
      %v3594 = vrot.slane %v3552, 5
      %v3595 = vrot.slane %v3594, 4
      %v3596 = vrot.slane %v3431, 5
      %v3597 = vsel %vm2208, %v3595, %v3596
      %v3598 = vrot.slane %v3553, 5
      %v3599 = vrot.slane %v3598, 4
      %v3600 = vrot.slane %v3433, 5
      %v3601 = vsel %vm2208, %v3599, %v3600
      %v3602 = vunpack.c.l.b16 %v3447
      %v3603 = vunpack.c.l.b16 %v3461
      %v3604 = vunpack.c.l.b16 %v3475
      %v3605 = vunpack.c.l.b16 %v3489
      %v3606 = vunpack.c.l.b16 %v3503
      %v3607 = vunpack.c.l.b16 %v3517
      %v3608 = vunpack.c.l.b16 %v3531
      %v3609 = vunpack.c.l.b16 %v3545
      %v3610 = vpack.c.b16 %v3603, %v3602
      %v3611 = vpack.c.b16 %v3605, %v3604
      %v3612 = vpack.c.b16 %v3607, %v3606
      %v3613 = vpack.c.b16 %v3609, %v3608
      %v3618 = vunpack.c.l.b16 %v3573
      %v3619 = vunpack.c.l.b16 %v3577
      %v3620 = vunpack.c.l.b16 %v3581
      %v3621 = vunpack.c.l.b16 %v3585
      %v3622 = vunpack.c.l.b16 %v3589
      %v3623 = vunpack.c.l.b16 %v3593
      %v3624 = vunpack.c.l.b16 %v3597
      %v3625 = vunpack.c.l.b16 %v3601
      %v3626 = vpack.c.b16 %v3619, %v3618
      %v3627 = vpack.c.b16 %v3621, %v3620
      %v3628 = vpack.c.b16 %v3623, %v3622
      %v3629 = vpack.c.b16 %v3625, %v3624
      %s3634 = scalar_lea.vmem %s4, 384
      %v3635 = vld [vmem:[%s3634] sm:$0xf]
      %v3636 = vld [vmem:[%s3634 + $0x4] sm:$0xf]
      %v3637 = vld [vmem:[%s3634 + $0x8] sm:$0xf]
      %v3638 = vld [vmem:[%s3634 + $0xc] sm:$0xf]
      %v3639 = vld [vmem:[%s3634 + $0x10] sm:$0xf]
      %v3640 = vld [vmem:[%s3634 + $0x14] sm:$0xf]
      %v3641 = vld [vmem:[%s3634 + $0x18] sm:$0xf]
      %v3642 = vld [vmem:[%s3634 + $0x1c] sm:$0xf]
      %v3643 = vld [vmem:[%s3634 + $0x20] sm:$0xf]
      %v3644 = vld [vmem:[%s3634 + $0x24] sm:$0xf]
      %v3645 = vld [vmem:[%s3634 + $0x28] sm:$0xf]
      %v3646 = vld [vmem:[%s3634 + $0x2c] sm:$0xf]
      %v3647 = vld [vmem:[%s3634 + $0x30] sm:$0xf]
      %v3648 = vld [vmem:[%s3634 + $0x34] sm:$0xf]
      %v3649 = vld [vmem:[%s3634 + $0x38] sm:$0xf]
      %v3650 = vld [vmem:[%s3634 + $0x3c] sm:$0xf]
      %v3651 = vld [vmem:[%s3634 + $0x40] sm:$0xf]
      %v3652 = vld [vmem:[%s3634 + $0x44] sm:$0xf]
      %v3653 = vld [vmem:[%s3634 + $0x48] sm:$0xf]
      %v3654 = vld [vmem:[%s3634 + $0x4c] sm:$0xf]
      %v3655 = vld [vmem:[%s3634 + $0x50] sm:$0xf]
      %v3656 = vld [vmem:[%s3634 + $0x54] sm:$0xf]
      %v3657 = vld [vmem:[%s3634 + $0x58] sm:$0xf]
      %v3658 = vld [vmem:[%s3634 + $0x5c] sm:$0xf]
      %v3659 = vld [vmem:[%s3634 + $0x60] sm:$0xf]
      %v3660 = vld [vmem:[%s3634 + $0x64] sm:$0xf]
      %v3661 = vld [vmem:[%s3634 + $0x68] sm:$0xf]
      %v3662 = vld [vmem:[%s3634 + $0x6c] sm:$0xf]
      %v3663 = vld [vmem:[%s3634 + $0x70] sm:$0xf]
      %v3664 = vld [vmem:[%s3634 + $0x74] sm:$0xf]
      %v3665 = vld [vmem:[%s3634 + $0x78] sm:$0xf]
      %v3666 = vld [vmem:[%s3634 + $0x7c] sm:$0xf]
      %v3699 = vunpack.c.l.b16 %v3635
      %v3700 = vunpack.c.l.b16 %v3636
      %v3701 = vunpack.c.l.b16 %v3637
      %v3702 = vunpack.c.l.b16 %v3638
      %v3703 = vunpack.c.l.b16 %v3639
      %v3704 = vunpack.c.l.b16 %v3640
      %v3705 = vunpack.c.l.b16 %v3641
      %v3706 = vunpack.c.l.b16 %v3642
      %v3707 = vunpack.c.l.b16 %v3643
      %v3708 = vunpack.c.l.b16 %v3644
      %v3709 = vunpack.c.l.b16 %v3645
      %v3710 = vunpack.c.l.b16 %v3646
      %v3711 = vunpack.c.l.b16 %v3647
      %v3712 = vunpack.c.l.b16 %v3648
      %v3713 = vunpack.c.l.b16 %v3649
      %v3714 = vunpack.c.l.b16 %v3650
      %v3715 = vunpack.c.l.b16 %v3651
      %v3716 = vunpack.c.l.b16 %v3652
      %v3717 = vunpack.c.l.b16 %v3653
      %v3718 = vunpack.c.l.b16 %v3654
      %v3719 = vunpack.c.l.b16 %v3655
      %v3720 = vunpack.c.l.b16 %v3656
      %v3721 = vunpack.c.l.b16 %v3657
      %v3722 = vunpack.c.l.b16 %v3658
      %v3723 = vunpack.c.l.b16 %v3659
      %v3724 = vunpack.c.l.b16 %v3660
      %v3725 = vunpack.c.l.b16 %v3661
      %v3726 = vunpack.c.l.b16 %v3662
      %v3727 = vunpack.c.l.b16 %v3663
      %v3728 = vunpack.c.l.b16 %v3664
      %v3729 = vunpack.c.l.b16 %v3665
      %v3730 = vunpack.c.l.b16 %v3666
      %v3731 = vpack.c.b16 %v3700, %v3699
      %v3732 = vpack.c.b16 %v3702, %v3701
      %v3733 = vpack.c.b16 %v3704, %v3703
      %v3734 = vpack.c.b16 %v3706, %v3705
      %v3735 = vpack.c.b16 %v3708, %v3707
      %v3736 = vpack.c.b16 %v3710, %v3709
      %v3737 = vpack.c.b16 %v3712, %v3711
      %v3738 = vpack.c.b16 %v3714, %v3713
      %v3739 = vpack.c.b16 %v3716, %v3715
      %v3740 = vpack.c.b16 %v3718, %v3717
      %v3741 = vpack.c.b16 %v3720, %v3719
      %v3742 = vpack.c.b16 %v3722, %v3721
      %v3743 = vpack.c.b16 %v3724, %v3723
      %v3744 = vpack.c.b16 %v3726, %v3725
      %v3745 = vpack.c.b16 %v3728, %v3727
      %v3746 = vpack.c.b16 %v3730, %v3729
      %3763 = vmatprep.subr.bf16.mxu0 0
      %3764 = vmatpush1.bf16.msra.mxu0 %v3731
      %3765 = vmatprep.subr.bf16.mxu0 0
      %3766 = vmatpush1.bf16.msra.mxu0 %v3732
      %3767 = vmatprep.subr.bf16.mxu0 0
      %3768 = vmatpush1.bf16.msra.mxu0 %v3733
      %3769 = vmatprep.subr.bf16.mxu0 0
      %3770 = vmatpush1.bf16.msra.mxu0 %v3734
      %3771 = vmatprep.subr.bf16.mxu0 0
      %3772 = vmatpush1.bf16.msra.mxu0 %v3735
      %3773 = vmatprep.subr.bf16.mxu0 0
      %3774 = vmatpush1.bf16.msra.mxu0 %v3736
      %3775 = vmatprep.subr.bf16.mxu0 0
      %3776 = vmatpush1.bf16.msra.mxu0 %v3737
      %3777 = vmatprep.subr.bf16.mxu0 0
      %3778 = vmatpush1.bf16.msra.mxu0 %v3738
      %3779 = vmatprep.subr.bf16.mxu0 0
      %3780 = vmatpush1.bf16.msra.mxu0 %v3739
      %3781 = vmatprep.subr.bf16.mxu0 0
      %3782 = vmatpush1.bf16.msra.mxu0 %v3740
      %3783 = vmatprep.subr.bf16.mxu0 0
      %3784 = vmatpush1.bf16.msra.mxu0 %v3741
      %3785 = vmatprep.subr.bf16.mxu0 0
      %3786 = vmatpush1.bf16.msra.mxu0 %v3742
      %3787 = vmatprep.subr.bf16.mxu0 0
      %3788 = vmatpush1.bf16.msra.mxu0 %v3743
      %3789 = vmatprep.subr.bf16.mxu0 0
      %3790 = vmatpush1.bf16.msra.mxu0 %v3744
      %3791 = vmatprep.subr.bf16.mxu0 0
      %3792 = vmatpush1.bf16.msra.mxu0 %v3745
      %3793 = vmatprep.subr.bf16.mxu0 0
      %3794 = vmatpush1.bf16.msra.mxu0 %v3746
      %3795 = vmatprep.mubr.bf16.mxu0 %v3626
      %3796 = vmatmul.mubr.bf16.gmra.mrb[0].mxu0 %v3610
      %v3797 = vpop.f32.mrb[0].mxu0
      %v3798 = vadd.f32 0.0, %v3797
      %v3799 = vpop.f32.mrb[0].mxu0
      %v3800 = vpop.f32.mrb[0].mxu0
      %v3801 = vadd.f32 0.0, %v3800
      %v3802 = vpop.f32.mrb[0].mxu0
      %3803 = vmatprep.mubr.bf16.mxu0 %v3627
      %3804 = vmatmul.mubr.bf16.gmra.mrb[0].mxu0 %v3611
      %v3805 = vpop.f32.mrb[0].mxu0
      %v3806 = vadd.f32 0.0, %v3805
      %v3807 = vpop.f32.mrb[0].mxu0
      %v3808 = vpop.f32.mrb[0].mxu0
      %v3809 = vadd.f32 0.0, %v3808
      %v3810 = vpop.f32.mrb[0].mxu0
      %3811 = vmatprep.mubr.bf16.mxu0 %v3628
      %3812 = vmatmul.mubr.bf16.gmra.mrb[0].mxu0 %v3612
      %v3813 = vpop.f32.mrb[0].mxu0
      %v3814 = vadd.f32 0.0, %v3813
      %v3815 = vpop.f32.mrb[0].mxu0
      %v3816 = vpop.f32.mrb[0].mxu0
      %v3817 = vadd.f32 0.0, %v3816
      %v3818 = vpop.f32.mrb[0].mxu0
      %3819 = vmatprep.mubr.bf16.mxu0 %v3629
      %3820 = vmatmul.mubr.bf16.gmra.mrb[0].mxu0 %v3613
      %v3821 = vpop.f32.mrb[0].mxu0
      %v3822 = vadd.f32 0.0, %v3821
      %v3823 = vpop.f32.mrb[0].mxu0
      %v3824 = vpop.f32.mrb[0].mxu0
      %v3825 = vadd.f32 0.0, %v3824
      %v3826 = vpop.f32.mrb[0].mxu0
      %3827 = vdwg.mxu0
      %v3828 = vadd.f32 %v3409, %v3798
      %v3829 = vadd.f32 %v3410, %v3801
      %v3830 = vadd.f32 %v3411, %v3806
      %v3831 = vadd.f32 %v3412, %v3809
      %v3832 = vadd.f32 %v3413, %v3814
      %v3833 = vadd.f32 %v3414, %v3817
      %v3834 = vadd.f32 %v3415, %v3822
      %v3835 = vadd.f32 %v3416, %v3825
      %v3836 = vld [vmem:[%s3417 + $0x4] sm:$0x3]
      %v3837 = vld [vmem:[%s3417 + $0xc] sm:$0x3]
      %v3838 = vld [vmem:[%s3417 + $0x14] sm:$0x3]
      %v3839 = vld [vmem:[%s3417 + $0x1c] sm:$0x3]
      %v3840 = vld [vmem:[%s3417 + $0x24] sm:$0x3]
      %v3841 = vld [vmem:[%s3417 + $0x2c] sm:$0x3]
      %v3842 = vld [vmem:[%s3417 + $0x34] sm:$0x3]
      %v3843 = vld [vmem:[%s3417 + $0x3c] sm:$0x3]
      %v3845 = vshrl.u32 %v3546, 16
      %v3847 = vrot.slane %v3845, 5
      %v3848 = vshll.u32 %v3546, 16
      %v3850 = vrot.slane %v3848, 6
      %v3851 = vor.u32 %v3847, %v3850
      %v3852 = vrot.slane %v3851, 4
      %v3854 = vshrl.u32 %v3836, 16
      %v3856 = vrot.slane %v3854, 5
      %v3857 = vshll.u32 %v3836, 16
      %v3859 = vrot.slane %v3857, 6
      %v3860 = vor.u32 %v3856, %v3859
      %v3861 = vsel %vm2315, %v3852, %v3860
      %v3863 = vshrl.u32 %v3547, 16
      %v3865 = vrot.slane %v3863, 5
      %v3866 = vshll.u32 %v3547, 16
      %v3868 = vrot.slane %v3866, 6
      %v3869 = vor.u32 %v3865, %v3868
      %v3870 = vrot.slane %v3869, 4
      %v3872 = vshrl.u32 %v3837, 16
      %v3874 = vrot.slane %v3872, 5
      %v3875 = vshll.u32 %v3837, 16
      %v3877 = vrot.slane %v3875, 6
      %v3878 = vor.u32 %v3874, %v3877
      %v3879 = vsel %vm2315, %v3870, %v3878
      %v3881 = vshrl.u32 %v3548, 16
      %v3883 = vrot.slane %v3881, 5
      %v3884 = vshll.u32 %v3548, 16
      %v3886 = vrot.slane %v3884, 6
      %v3887 = vor.u32 %v3883, %v3886
      %v3888 = vrot.slane %v3887, 4
      %v3890 = vshrl.u32 %v3838, 16
      %v3892 = vrot.slane %v3890, 5
      %v3893 = vshll.u32 %v3838, 16
      %v3895 = vrot.slane %v3893, 6
      %v3896 = vor.u32 %v3892, %v3895
      %v3897 = vsel %vm2315, %v3888, %v3896
      %v3899 = vshrl.u32 %v3549, 16
      %v3901 = vrot.slane %v3899, 5
      %v3902 = vshll.u32 %v3549, 16
      %v3904 = vrot.slane %v3902, 6
      %v3905 = vor.u32 %v3901, %v3904
      %v3906 = vrot.slane %v3905, 4
      %v3908 = vshrl.u32 %v3839, 16
      %v3910 = vrot.slane %v3908, 5
      %v3911 = vshll.u32 %v3839, 16
      %v3913 = vrot.slane %v3911, 6
      %v3914 = vor.u32 %v3910, %v3913
      %v3915 = vsel %vm2315, %v3906, %v3914
      %v3917 = vshrl.u32 %v3550, 16
      %v3919 = vrot.slane %v3917, 5
      %v3920 = vshll.u32 %v3550, 16
      %v3922 = vrot.slane %v3920, 6
      %v3923 = vor.u32 %v3919, %v3922
      %v3924 = vrot.slane %v3923, 4
      %v3926 = vshrl.u32 %v3840, 16
      %v3928 = vrot.slane %v3926, 5
      %v3929 = vshll.u32 %v3840, 16
      %v3931 = vrot.slane %v3929, 6
      %v3932 = vor.u32 %v3928, %v3931
      %v3933 = vsel %vm2315, %v3924, %v3932
      %v3935 = vshrl.u32 %v3551, 16
      %v3937 = vrot.slane %v3935, 5
      %v3938 = vshll.u32 %v3551, 16
      %v3940 = vrot.slane %v3938, 6
      %v3941 = vor.u32 %v3937, %v3940
      %v3942 = vrot.slane %v3941, 4
      %v3944 = vshrl.u32 %v3841, 16
      %v3946 = vrot.slane %v3944, 5
      %v3947 = vshll.u32 %v3841, 16
      %v3949 = vrot.slane %v3947, 6
      %v3950 = vor.u32 %v3946, %v3949
      %v3951 = vsel %vm2315, %v3942, %v3950
      %v3953 = vshrl.u32 %v3552, 16
      %v3955 = vrot.slane %v3953, 5
      %v3956 = vshll.u32 %v3552, 16
      %v3958 = vrot.slane %v3956, 6
      %v3959 = vor.u32 %v3955, %v3958
      %v3960 = vrot.slane %v3959, 4
      %v3962 = vshrl.u32 %v3842, 16
      %v3964 = vrot.slane %v3962, 5
      %v3965 = vshll.u32 %v3842, 16
      %v3967 = vrot.slane %v3965, 6
      %v3968 = vor.u32 %v3964, %v3967
      %v3969 = vsel %vm2315, %v3960, %v3968
      %v3971 = vshrl.u32 %v3553, 16
      %v3973 = vrot.slane %v3971, 5
      %v3974 = vshll.u32 %v3553, 16
      %v3976 = vrot.slane %v3974, 6
      %v3977 = vor.u32 %v3973, %v3976
      %v3978 = vrot.slane %v3977, 4
      %v3980 = vshrl.u32 %v3843, 16
      %v3982 = vrot.slane %v3980, 5
      %v3983 = vshll.u32 %v3843, 16
      %v3985 = vrot.slane %v3983, 6
      %v3986 = vor.u32 %v3982, %v3985
      %v3987 = vsel %vm2315, %v3978, %v3986
      %s3988 = scalar_lea.vmem %s4, 512
      %v3989 = vld [vmem:[%s3988] sm:$0xf]
      %v3990 = vld [vmem:[%s3988 + $0x4] sm:$0xf]
      %v3991 = vld [vmem:[%s3988 + $0x8] sm:$0xf]
      %v3992 = vld [vmem:[%s3988 + $0xc] sm:$0xf]
      %v3993 = vld [vmem:[%s3988 + $0x10] sm:$0xf]
      %v3994 = vld [vmem:[%s3988 + $0x14] sm:$0xf]
      %v3995 = vld [vmem:[%s3988 + $0x18] sm:$0xf]
      %v3996 = vld [vmem:[%s3988 + $0x1c] sm:$0xf]
      %v3997 = vld [vmem:[%s3988 + $0x20] sm:$0xf]
      %v3998 = vld [vmem:[%s3988 + $0x24] sm:$0xf]
      %v3999 = vld [vmem:[%s3988 + $0x28] sm:$0xf]
      %v4000 = vld [vmem:[%s3988 + $0x2c] sm:$0xf]
      %v4001 = vld [vmem:[%s3988 + $0x30] sm:$0xf]
      %v4002 = vld [vmem:[%s3988 + $0x34] sm:$0xf]
      %v4003 = vld [vmem:[%s3988 + $0x38] sm:$0xf]
      %v4004 = vld [vmem:[%s3988 + $0x3c] sm:$0xf]
      %v4005 = vunpack.c.l.b16 %v3861
      %v4006 = vunpack.c.l.b16 %v3879
      %v4007 = vunpack.c.l.b16 %v3897
      %v4008 = vunpack.c.l.b16 %v3915
      %v4009 = vunpack.c.l.b16 %v3933
      %v4010 = vunpack.c.l.b16 %v3951
      %v4011 = vunpack.c.l.b16 %v3969
      %v4012 = vunpack.c.l.b16 %v3987
      %v4013 = vpack.c.b16 %v4006, %v4005
      %v4014 = vpack.c.b16 %v4008, %v4007
      %v4015 = vpack.c.b16 %v4010, %v4009
      %v4016 = vpack.c.b16 %v4012, %v4011
      %v4037 = vunpack.c.l.b16 %v3989
      %v4038 = vunpack.c.l.b16 %v3990
      %v4039 = vunpack.c.l.b16 %v3991
      %v4040 = vunpack.c.l.b16 %v3992
      %v4041 = vunpack.c.l.b16 %v3993
      %v4042 = vunpack.c.l.b16 %v3994
      %v4043 = vunpack.c.l.b16 %v3995
      %v4044 = vunpack.c.l.b16 %v3996
      %v4045 = vunpack.c.l.b16 %v3997
      %v4046 = vunpack.c.l.b16 %v3998
      %v4047 = vunpack.c.l.b16 %v3999
      %v4048 = vunpack.c.l.b16 %v4000
      %v4049 = vunpack.c.l.b16 %v4001
      %v4050 = vunpack.c.l.b16 %v4002
      %v4051 = vunpack.c.l.b16 %v4003
      %v4052 = vunpack.c.l.b16 %v4004
      %v4053 = vpack.c.b16 %v4038, %v4037
      %v4054 = vpack.c.b16 %v4040, %v4039
      %v4055 = vpack.c.b16 %v4042, %v4041
      %v4056 = vpack.c.b16 %v4044, %v4043
      %v4057 = vpack.c.b16 %v4046, %v4045
      %v4058 = vpack.c.b16 %v4048, %v4047
      %v4059 = vpack.c.b16 %v4050, %v4049
      %v4060 = vpack.c.b16 %v4052, %v4051
      %4069 = vmatprep.subr.bf16.mxu0 0
      %4070 = vmatpush1.bf16.msra.mxu0 %v4053
      %4071 = vmatprep.subr.bf16.mxu0 0
      %4072 = vmatpush1.bf16.msra.mxu0 %v4054
      %4073 = vmatprep.subr.bf16.mxu0 0
      %4074 = vmatpush1.bf16.msra.mxu0 %v4055
      %4075 = vmatprep.subr.bf16.mxu0 0
      %4076 = vmatpush1.bf16.msra.mxu0 %v4056
      %4077 = vmatprep.subr.bf16.mxu0 0
      %4078 = vmatpush1.bf16.msra.mxu0 %v4057
      %4079 = vmatprep.subr.bf16.mxu0 0
      %4080 = vmatpush1.bf16.msra.mxu0 %v4058
      %4081 = vmatprep.subr.bf16.mxu0 0
      %4082 = vmatpush1.bf16.msra.mxu0 %v4059
      %4083 = vmatprep.subr.bf16.mxu0 0
      %4084 = vmatpush1.bf16.msra.mxu0 %v4060
      %4085 = vmatprep.subr.bf16.mxu0 0
      %4086 = vmatpush1.bf16.msra.mxu0 0
      %4087 = vmatprep.subr.bf16.mxu0 0
      %4088 = vmatpush1.bf16.msra.mxu0 0
      %4089 = vmatprep.subr.bf16.mxu0 0
      %4090 = vmatpush1.bf16.msra.mxu0 0
      %4091 = vmatprep.subr.bf16.mxu0 0
      %4092 = vmatpush1.bf16.msra.mxu0 0
      %4093 = vmatprep.subr.bf16.mxu0 0
      %4094 = vmatpush1.bf16.msra.mxu0 0
      %4095 = vmatprep.subr.bf16.mxu0 0
      %4096 = vmatpush1.bf16.msra.mxu0 0
      %4097 = vmatprep.subr.bf16.mxu0 0
      %4098 = vmatpush1.bf16.msra.mxu0 0
      %4099 = vmatprep.subr.bf16.mxu0 0
      %4100 = vmatpush1.bf16.msra.mxu0 0
      %4101 = vmatprep.mubr.bf16.mxu0 0
      %4102 = vmatmul.mubr.bf16.gmra.mrb[0].mxu0 %v4013
      %v4103 = vpop.f32.mrb[0].mxu0
      %v4104 = vadd.f32 0.0, %v4103
      %v4105 = vpop.f32.mrb[0].mxu0
      %v4106 = vpop.f32.mrb[0].mxu0
      %v4107 = vadd.f32 0.0, %v4106
      %v4108 = vpop.f32.mrb[0].mxu0
      %4109 = vmatprep.mubr.bf16.mxu0 0
      %4110 = vmatmul.mubr.bf16.gmra.mrb[0].mxu0 %v4014
      %v4111 = vpop.f32.mrb[0].mxu0
      %v4112 = vadd.f32 0.0, %v4111
      %v4113 = vpop.f32.mrb[0].mxu0
      %v4114 = vpop.f32.mrb[0].mxu0
      %v4115 = vadd.f32 0.0, %v4114
      %v4116 = vpop.f32.mrb[0].mxu0
      %4117 = vmatprep.mubr.bf16.mxu0 0
      %4118 = vmatmul.mubr.bf16.gmra.mrb[0].mxu0 %v4015
      %v4119 = vpop.f32.mrb[0].mxu0
      %v4120 = vadd.f32 0.0, %v4119
      %v4121 = vpop.f32.mrb[0].mxu0
      %v4122 = vpop.f32.mrb[0].mxu0
      %v4123 = vadd.f32 0.0, %v4122
      %v4124 = vpop.f32.mrb[0].mxu0
      %4125 = vmatprep.mubr.bf16.mxu0 0
      %4126 = vmatmul.mubr.bf16.gmra.mrb[0].mxu0 %v4016
      %v4127 = vpop.f32.mrb[0].mxu0
      %v4128 = vadd.f32 0.0, %v4127
      %v4129 = vpop.f32.mrb[0].mxu0
      %v4130 = vpop.f32.mrb[0].mxu0
      %v4131 = vadd.f32 0.0, %v4130
      %v4132 = vpop.f32.mrb[0].mxu0
      %4133 = vdwg.mxu0
      %v4134 = vadd.f32 %v3828, %v4104
      %v4135 = vadd.f32 %v3829, %v4107
      %v4136 = vadd.f32 %v3830, %v4112
      %v4137 = vadd.f32 %v3831, %v4115
      %v4138 = vadd.f32 %v3832, %v4120
      %v4139 = vadd.f32 %v3833, %v4123
      %v4140 = vadd.f32 %v3834, %v4128
      %v4141 = vadd.f32 %v3835, %v4131
      %v4142 = vld [vmem:[%s5] sm:$0x1]
      %v4144 = vlaneseq
      %v4145 = vshrl.u32 %v4144, 7
      %v4146 = vsub.s32 0, %v4145
      %v4147 = vrot.slane %v4142, %v4146
      %v4149 = vmul.f32 %v4134, %v4147
      %v4150 = vmul.f32 %v4135, %v4147
      %v4151 = vmul.f32 %v4136, %v4147
      %v4152 = vmul.f32 %v4137, %v4147
      %v4153 = vmul.f32 %v4138, %v4147
      %v4154 = vmul.f32 %v4139, %v4147
      %v4155 = vmul.f32 %v4140, %v4147
      %v4156 = vmul.f32 %v4141, %v4147
      %v4157 = vld [vmem:[%s6] sm:$0x1]
      %v4159 = vlaneseq
      %v4160 = vshrl.u32 %v4159, 7
      %v4161 = vsub.s32 0, %v4160
      %v4162 = vrot.slane %v4157, %v4161
      %v4164 = vadd.f32 %v4149, %v4162
      %v4165 = vadd.f32 %v4150, %v4162
      %v4166 = vadd.f32 %v4151, %v4162
      %v4167 = vadd.f32 %v4152, %v4162
      %v4168 = vadd.f32 %v4153, %v4162
      %v4169 = vadd.f32 %v4154, %v4162
      %v4170 = vadd.f32 %v4155, %v4162
      %v4171 = vadd.f32 %v4156, %v4162
      %v4172 = vld [vmem:[%s985] sm:$0xf]
      %v4173 = vld [vmem:[%s985 + $0x8] sm:$0xf]
      %v4174 = vld [vmem:[%s985 + $0x10] sm:$0xf]
      %v4175 = vld [vmem:[%s985 + $0x18] sm:$0xf]
      %v4176 = vld [vmem:[%s985 + $0x20] sm:$0xf]
      %v4177 = vld [vmem:[%s985 + $0x28] sm:$0xf]
      %v4178 = vld [vmem:[%s985 + $0x30] sm:$0xf]
      %v4179 = vld [vmem:[%s985 + $0x38] sm:$0xf]
      %v4180 = vld [vmem:[%s7] sm:$0xf]
      %v4181 = vld [vmem:[%s7 + $0x4] sm:$0xf]
      %v4182 = vld [vmem:[%s7 + $0x8] sm:$0xf]
      %v4183 = vld [vmem:[%s7 + $0xc] sm:$0xf]
      %v4184 = vld [vmem:[%s7 + $0x10] sm:$0xf]
      %v4185 = vld [vmem:[%s7 + $0x14] sm:$0xf]
      %v4186 = vld [vmem:[%s7 + $0x18] sm:$0xf]
      %v4187 = vld [vmem:[%s7 + $0x1c] sm:$0xf]
      %v4188 = vld [vmem:[%s7 + $0x20] sm:$0xf]
      %v4189 = vld [vmem:[%s7 + $0x24] sm:$0xf]
      %v4190 = vld [vmem:[%s7 + $0x28] sm:$0xf]
      %v4191 = vld [vmem:[%s7 + $0x2c] sm:$0xf]
      %v4192 = vld [vmem:[%s7 + $0x30] sm:$0xf]
      %v4193 = vld [vmem:[%s7 + $0x34] sm:$0xf]
      %v4194 = vld [vmem:[%s7 + $0x38] sm:$0xf]
      %v4195 = vld [vmem:[%s7 + $0x3c] sm:$0xf]
      %v4204 = vunpack.c.l.b16 %v4172
      %v4205 = vunpack.c.l.b16 %v4173
      %v4206 = vunpack.c.l.b16 %v4174
      %v4207 = vunpack.c.l.b16 %v4175
      %v4208 = vunpack.c.l.b16 %v4176
      %v4209 = vunpack.c.l.b16 %v4177
      %v4210 = vunpack.c.l.b16 %v4178
      %v4211 = vunpack.c.l.b16 %v4179
      %v4212 = vpack.c.b16 %v4205, %v4204
      %v4213 = vpack.c.b16 %v4207, %v4206
      %v4214 = vpack.c.b16 %v4209, %v4208
      %v4215 = vpack.c.b16 %v4211, %v4210
      %v4236 = vunpack.c.l.b16 %v4180
      %v4237 = vunpack.c.l.b16 %v4181
      %v4238 = vunpack.c.l.b16 %v4182
      %v4239 = vunpack.c.l.b16 %v4183
      %v4240 = vunpack.c.l.b16 %v4184
      %v4241 = vunpack.c.l.b16 %v4185
      %v4242 = vunpack.c.l.b16 %v4186
      %v4243 = vunpack.c.l.b16 %v4187
      %v4244 = vunpack.c.l.b16 %v4188
      %v4245 = vunpack.c.l.b16 %v4189
      %v4246 = vunpack.c.l.b16 %v4190
      %v4247 = vunpack.c.l.b16 %v4191
      %v4248 = vunpack.c.l.b16 %v4192
      %v4249 = vunpack.c.l.b16 %v4193
      %v4250 = vunpack.c.l.b16 %v4194
      %v4251 = vunpack.c.l.b16 %v4195
      %v4252 = vpack.c.b16 %v4237, %v4236
      %v4253 = vpack.c.b16 %v4239, %v4238
      %v4254 = vpack.c.b16 %v4241, %v4240
      %v4255 = vpack.c.b16 %v4243, %v4242
      %v4256 = vpack.c.b16 %v4245, %v4244
      %v4257 = vpack.c.b16 %v4247, %v4246
      %v4258 = vpack.c.b16 %v4249, %v4248
      %v4259 = vpack.c.b16 %v4251, %v4250
      %4268 = vmatprep.subr.bf16.mxu0 0
      %4269 = vmatpush1.bf16.msra.mxu0 %v4252
      %4270 = vmatprep.subr.bf16.mxu0 0
      %4271 = vmatpush1.bf16.msra.mxu0 %v4253
      %4272 = vmatprep.subr.bf16.mxu0 0
      %4273 = vmatpush1.bf16.msra.mxu0 %v4254
      %4274 = vmatprep.subr.bf16.mxu0 0
      %4275 = vmatpush1.bf16.msra.mxu0 %v4255
      %4276 = vmatprep.subr.bf16.mxu0 0
      %4277 = vmatpush1.bf16.msra.mxu0 %v4256
      %4278 = vmatprep.subr.bf16.mxu0 0
      %4279 = vmatpush1.bf16.msra.mxu0 %v4257
      %4280 = vmatprep.subr.bf16.mxu0 0
      %4281 = vmatpush1.bf16.msra.mxu0 %v4258
      %4282 = vmatprep.subr.bf16.mxu0 0
      %4283 = vmatpush1.bf16.msra.mxu0 %v4259
      %4284 = vmatprep.subr.bf16.mxu0 0
      %4285 = vmatpush1.bf16.msra.mxu0 0
      %4286 = vmatprep.subr.bf16.mxu0 0
      %4287 = vmatpush1.bf16.msra.mxu0 0
      %4288 = vmatprep.subr.bf16.mxu0 0
      %4289 = vmatpush1.bf16.msra.mxu0 0
      %4290 = vmatprep.subr.bf16.mxu0 0
      %4291 = vmatpush1.bf16.msra.mxu0 0
      %4292 = vmatprep.subr.bf16.mxu0 0
      %4293 = vmatpush1.bf16.msra.mxu0 0
      %4294 = vmatprep.subr.bf16.mxu0 0
      %4295 = vmatpush1.bf16.msra.mxu0 0
      %4296 = vmatprep.subr.bf16.mxu0 0
      %4297 = vmatpush1.bf16.msra.mxu0 0
      %4298 = vmatprep.subr.bf16.mxu0 0
      %4299 = vmatpush1.bf16.msra.mxu0 0
      %4300 = vmatprep.mubr.bf16.mxu0 0
      %4301 = vmatmul.mubr.bf16.gmra.mrb[0].mxu0 %v4212
      %v4302 = vpop.f32.mrb[0].mxu0
      %v4303 = vadd.f32 0.0, %v4302
      %v4304 = vpop.f32.mrb[0].mxu0
      %v4305 = vpop.f32.mrb[0].mxu0
      %v4306 = vadd.f32 0.0, %v4305
      %v4307 = vpop.f32.mrb[0].mxu0
      %4308 = vmatprep.mubr.bf16.mxu0 0
      %4309 = vmatmul.mubr.bf16.gmra.mrb[0].mxu0 %v4213
      %v4310 = vpop.f32.mrb[0].mxu0
      %v4311 = vadd.f32 0.0, %v4310
      %v4312 = vpop.f32.mrb[0].mxu0
      %v4313 = vpop.f32.mrb[0].mxu0
      %v4314 = vadd.f32 0.0, %v4313
      %v4315 = vpop.f32.mrb[0].mxu0
      %4316 = vmatprep.mubr.bf16.mxu0 0
      %4317 = vmatmul.mubr.bf16.gmra.mrb[0].mxu0 %v4214
      %v4318 = vpop.f32.mrb[0].mxu0
      %v4319 = vadd.f32 0.0, %v4318
      %v4320 = vpop.f32.mrb[0].mxu0
      %v4321 = vpop.f32.mrb[0].mxu0
      %v4322 = vadd.f32 0.0, %v4321
      %v4323 = vpop.f32.mrb[0].mxu0
      %4324 = vmatprep.mubr.bf16.mxu0 0
      %4325 = vmatmul.mubr.bf16.gmra.mrb[0].mxu0 %v4215
      %v4326 = vpop.f32.mrb[0].mxu0
      %v4327 = vadd.f32 0.0, %v4326
      %v4328 = vpop.f32.mrb[0].mxu0
      %v4329 = vpop.f32.mrb[0].mxu0
      %v4330 = vadd.f32 0.0, %v4329
      %v4331 = vpop.f32.mrb[0].mxu0
      %4332 = vdwg.mxu0
      %v4333 = vld [vmem:[%s8] sm:$0x1]
      %v4335 = vlaneseq
      %v4336 = vshrl.u32 %v4335, 7
      %v4337 = vsub.s32 0, %v4336
      %v4338 = vrot.slane %v4333, %v4337
      %v4340 = vmul.f32 %v4303, %v4338
      %v4341 = vmul.f32 %v4306, %v4338
      %v4342 = vmul.f32 %v4311, %v4338
      %v4343 = vmul.f32 %v4314, %v4338
      %v4344 = vmul.f32 %v4319, %v4338
      %v4345 = vmul.f32 %v4322, %v4338
      %v4346 = vmul.f32 %v4327, %v4338
      %v4347 = vmul.f32 %v4330, %v4338
      %v4348 = vld [vmem:[%s9] sm:$0x1]
      %v4350 = vlaneseq
      %v4351 = vshrl.u32 %v4350, 7
      %v4352 = vsub.s32 0, %v4351
      %v4353 = vrot.slane %v4348, %v4352
      %v4355 = vadd.f32 %v4340, %v4353
      %v4356 = vadd.f32 %v4341, %v4353
      %v4357 = vadd.f32 %v4342, %v4353
      %v4358 = vadd.f32 %v4343, %v4353
      %v4359 = vadd.f32 %v4344, %v4353
      %v4360 = vadd.f32 %v4345, %v4353
      %v4361 = vadd.f32 %v4346, %v4353
      %v4362 = vadd.f32 %v4347, %v4353
      %v4363 = vadd.f32 %v4164, %v4355
      %v4364 = vadd.f32 %v4165, %v4356
      %v4365 = vadd.f32 %v4166, %v4357
      %v4366 = vadd.f32 %v4167, %v4358
      %v4367 = vadd.f32 %v4168, %v4359
      %v4368 = vadd.f32 %v4169, %v4360
      %v4369 = vadd.f32 %v4170, %v4361
      %v4370 = vadd.f32 %v4171, %v4362
      %v4371 = vmax.f32 %v4363, 0.0
      %v4372 = vmax.f32 %v4364, 0.0
      %v4373 = vmax.f32 %v4365, 0.0
      %v4374 = vmax.f32 %v4366, 0.0
      %v4375 = vmax.f32 %v4367, 0.0
      %v4376 = vmax.f32 %v4368, 0.0
      %v4377 = vmax.f32 %v4369, 0.0
      %v4378 = vmax.f32 %v4370, 0.0
      %v4379 = vpack.c.bf16 %v4372, %v4371
      %v4380 = vpack.c.bf16 %v4374, %v4373
      %v4381 = vpack.c.bf16 %v4376, %v4375
      %v4382 = vpack.c.bf16 %v4378, %v4377
      %v4387 = vunpack.c.l.b16 %v4379
      %v4388 = vunpack.c.h.b16 %v4379
      %v4389 = vunpack.c.l.b16 %v4380
      %v4390 = vunpack.c.h.b16 %v4380
      %v4391 = vunpack.c.l.b16 %v4381
      %v4392 = vunpack.c.h.b16 %v4381
      %v4393 = vunpack.c.l.b16 %v4382
      %v4394 = vunpack.c.h.b16 %v4382
      %v4395 = vpack.c.b16 %v4387, %v4387
      %v4396 = vpack.c.b16 %v4388, %v4388
      %v4397 = vpack.c.b16 %v4389, %v4389
      %v4398 = vpack.c.b16 %v4390, %v4390
      %v4399 = vpack.c.b16 %v4391, %v4391
      %v4400 = vpack.c.b16 %v4392, %v4392
      %v4401 = vpack.c.b16 %v4393, %v4393
      %v4402 = vpack.c.b16 %v4394, %v4394
      %4411 = vst [vmem:[%s359] sm:$0xf] %v4395
      %4412 = vst [vmem:[%s359 + $0x4] sm:$0xf] %v4396
      %4413 = vst [vmem:[%s359 + $0x8] sm:$0xf] %v4397
      %4414 = vst [vmem:[%s359 + $0xc] sm:$0xf] %v4398
      %4415 = vst [vmem:[%s359 + $0x10] sm:$0xf] %v4399
      %4416 = vst [vmem:[%s359 + $0x14] sm:$0xf] %v4400
      %4417 = vst [vmem:[%s359 + $0x18] sm:$0xf] %v4401
      %4418 = vst [vmem:[%s359 + $0x1c] sm:$0xf] %v4402
      %p4419 = scmp.lt.s32.totalorder %s21, 1
      %s4420 = scalar_select %p4419, %s21, 1
      %s4421 = smul.addr %s4420, 8
      %s4422 = smul.addr %s4421, 4
      %s4423 = scalar_lea.vmem %s10, %s4422
      // Predicated region
      $region61: #{basic_block_forward.1} parent=59 // pred_check
        %p4424 = pneg %p254
      $region62: #{basic_block_forward.1} parent=59 // pred_check_branch
        %4426 = sbr.rel (%p4424) target = $region64
      $region63: #{basic_block_forward.1} parent=59 // pred_region
        _
      $region64: #{basic_block_forward.1} parent=59 // pred_fallthru
        _
    $region60: #{basic_block_forward.1} parent=5 // pred_fallthru
      _
    %p4427 = scmp.le.s32.totalorder 2, %s16
    // Predicated region
    $region65: #{basic_block_forward.1} parent=5 // pred_check
      %p4428 = pneg %p4427
    $region66: #{basic_block_forward.1} parent=5 // pred_check_branch
      %4430 = sbr.rel (%p4428) target = $region68
    $region67: #{basic_block_forward.1} parent=5 // pred_region
      %s4431 = ssub.s32 %s16, 2
      // Predicated region
      $region69: #{basic_block_forward.1} parent=67 // pred_check
        %p4432 = pneg %p260
      $region70: #{basic_block_forward.1} parent=67 // pred_check_branch
        %4434 = sbr.rel (%p4432) target = $region72
      $region71: #{basic_block_forward.1} parent=67 // pred_region
        %p4435 = scmp.lt.s32.totalorder %s22, 1
        %s4436 = scalar_select %p4435, %s22, 1
        %s4437 = smul.addr %s4436, 8
        %s4438 = smul.addr %s4437, 4
        %s4439 = scalar_lea.vmem %s10, %s4438
      $region72: #{basic_block_forward.1} parent=67 // pred_fallthru
        _
    $region68: #{basic_block_forward.1} parent=5 // pred_fallthru
      _
  $region6: #{basic_block_forward.1} parent=0 // loop_footer
    %s20 = sadd.s32 1, %s16
  $region7: #{basic_block_forward.1} parent=0 // loop_footer_branch
    %15 = sbr.rel target = $region3
  $region8: #{basic_block_forward.1} parent=0 // loop_exit
    _

</llo_original>
